<compile_context>
chip_gen: v7x
topology: tpu7x:2x2x1
jax: 0.10.0
libtpu: 0.0.40
codegen_flags: <defaults>
</compile_context>

<pallas_src>
import functools
import math

import jax
import jax.numpy as jnp
from jax.experimental import pallas as pl
from jax.experimental.pallas import tpu as pltpu


# ----------------------------- kernel helpers -----------------------------

def _layernorm(x, g, b, eps=1e-5):
    mu = jnp.mean(x, axis=-1, keepdims=True)
    var = jnp.mean((x - mu) ** 2, axis=-1, keepdims=True)
    return (x - mu) * jax.lax.rsqrt(var + eps) * g + b


# Per-layer weight names, in the order the kernel expects them.
_WNAMES = ('ln1_g', 'ln1_b', 'wq', 'bq', 'wk', 'bk', 'wv', 'bv',
           'ln2_g', 'ln2_b', 'w_in', 'b_in', 'w_out', 'b_out',
           'ln3_g', 'ln3_b', 'w1', 'b1', 'w2', 'b2')


# -------------------------- fused decoder-stack kernel ----------------------
# grid = (B, L): b = batch element ("parallel"), l = decoder layer ("arbitrary").
# The (S, D) activation is carried across the layer axis in VMEM scratch.
def _decoder_stack_kernel(
        # inputs
        tgt_ref, mem_ref, mask_ref, sel_ref, selT_ref,
        ln1_g, ln1_b, wq, bq, wk, bk, wv, bv,
        ln2_g, ln2_b, w_in, b_in, w_out, b_out,
        ln3_g, ln3_b, w1, b1, w2, b2,
        # outputs
        out_ref, self_w_ref, cross_w_ref,
        # scratch
        x_scr,
        *, S, M, D, H, activation):
    l = pl.program_id(1)
    hd = D // H
    scale = 1.0 / math.sqrt(hd)

    # First layer: load the target sequence into the resident VMEM carry.
    @pl.when(l == 0)
    def _():
        x_scr[...] = tgt_ref[0]

    x = x_scr[...]                              # (S, D) activation carry
    mem2 = mem_ref[0].reshape(S * M, D)         # (S*M, D) memory, flattened
    mask = mask_ref[0]                          # (S, H) additive key-padding mask
    sel = sel_ref[...]                          # (D, H) one-hot head selector
    selT = selT_ref[...]                        # (H, D)

    # ---- cross ("block") attention: softmax over the M memory modalities ----
    xn1 = _layernorm(x, ln1_g[0], ln1_b[0])
    q = jnp.dot(xn1, wq[0], preferred_element_type=jnp.float32) + bq[0]    # (S, D)
    k = jnp.dot(mem2, wk[0], preferred_element_type=jnp.float32) + bk[0]   # (S*M, D)
    v = jnp.dot(mem2, wv[0], preferred_element_type=jnp.float32) + bv[0]   # (S*M, D)

    prod_c = q[:, None, :] * k.reshape(S, M, D)                            # (S, M, D)
    sc_c = jnp.dot(prod_c.reshape(S * M, D), sel,                          # per-head sum
                   preferred_element_type=jnp.float32).reshape(S, M, H) * scale
    sc_c = sc_c - jnp.max(sc_c, axis=1, keepdims=True)
    e_c = jnp.exp(sc_c)
    attn_c = e_c / jnp.sum(e_c, axis=1, keepdims=True)                     # (S, M, H)
    a_exp = jnp.dot(attn_c.reshape(S * M, H), selT,                        # back to lanes
                    preferred_element_type=jnp.float32).reshape(S, M, D)
    cross = x + jnp.sum(a_exp * v.reshape(S, M, D), axis=1)                # residual
    # NOTE: reference MultiheadBlockAttention has NO output projection.

    # ---- self attention (nn.MultiheadAttention, additive key padding mask) ----
    xn2 = _layernorm(cross, ln2_g[0], ln2_b[0])
    qkv = jnp.dot(xn2, w_in[0], preferred_element_type=jnp.float32) + b_in[0]  # (S, 3D)
    qs = qkv[:, :D]
    ks = qkv[:, D:2 * D]
    vs = qkv[:, 2 * D:]

    prod_s = qs[:, None, :] * ks[None, :, :]                               # (S, S, D)
    sc_s = jnp.dot(prod_s.reshape(S * S, D), sel,
                   preferred_element_type=jnp.float32).reshape(S, S, H) * scale
    sc_s = sc_s + mask                                                     # mask keys (axis 1)
    sc_s = sc_s - jnp.max(sc_s, axis=1, keepdims=True)
    e_s = jnp.exp(sc_s)
    attn_s = e_s / jnp.sum(e_s, axis=1, keepdims=True)                     # (S, S, H)
    s_exp = jnp.dot(attn_s.reshape(S * S, H), selT,
                    preferred_element_type=jnp.float32).reshape(S, S, D)
    ctx = jnp.sum(s_exp * vs[None, :, :], axis=1)                          # (S, D)
    proj = jnp.dot(ctx, w_out[0], preferred_element_type=jnp.float32) + b_out[0]
    self_out = cross + proj                                                # residual

    # ---- feed forward ----
    xn3 = _layernorm(self_out, ln3_g[0], ln3_b[0])
    h1 = jnp.dot(xn3, w1[0], preferred_element_type=jnp.float32) + b1[0]
    if activation == 'relu':
        h1 = jnp.maximum(h1, 0.0)
    else:  # 'gelu' (exact, erf-based like torch.nn.GELU default)
        h1 = jax.nn.gelu(h1, approximate=False)
    y = self_out + jnp.dot(h1, w2[0], preferred_element_type=jnp.float32) + b2[0]
    # TODO(synk): dropout layers are identity (eval mode); no RNG in kernel.

    # carry for next layer + single lane-dense stores (last layer's values persist)
    x_scr[...] = y
    out_ref[0] = y
    self_w_ref[0] = jnp.mean(attn_s, axis=-1)        # head-averaged (S, S)
    cross_w_ref[0] = attn_c                          # (S, M, H)


# ------------------------------- wrappers -----------------------------------

def _rep_spec(shape):
    nz = len(shape)
    return pl.BlockSpec(shape, lambda b, l, _nz=nz: (0,) * _nz)


def _layer_spec(trailing_shape):
    nz = len(trailing_shape)
    return pl.BlockSpec((1,) + tuple(trailing_shape),
                        lambda b, l, _nz=nz: (l,) + (0,) * _nz)


def temporal_decoder_forward(key, revert_dict, padding_mask_dict, params, *,
                             nhead, activation):
    tgt = revert_dict[key]                                                  # (B, S, D)
    memory = jnp.stack([v for k, v in revert_dict.items() if k != key],
                       axis=-2)                                             # (B, S, M, D)
    B, S, D = tgt.shape
    M = memory.shape[2]
    H = nhead
    L = len(params)
    hd = D // H

    pm = padding_mask_dict[f'{key}_revert_padding_mask']                    # (B, S), 1 = keep
    # torch: torch.where(mask == 1, 0, -inf); large finite negative keeps f32 safe
    mask1 = jnp.where(pm == 1, 0.0, -1e30).astype(jnp.float32)              # (B, S)
    mask = jnp.broadcast_to(mask1[:, :, None], (B, S, H))                   # (B, S, H)

    # one-hot head-selector matrices (sel[d, h] = 1 iff lane d belongs to head h)
    sel = (jnp.arange(D)[:, None] // hd == jnp.arange(H)[None, :]).astype(jnp.float32)
    selT = sel.T

    # stack per-layer weights along a leading layer axis
    stacked = {n: jnp.stack([p[n] for p in params], axis=0) for n in _WNAMES}

    kern = functools.partial(_decoder_stack_kernel,
                             S=S, M=M, D=D, H=H, activation=activation)

    in_specs = [
        pl.BlockSpec((1, S, D), lambda b, l: (b, 0, 0)),
        pl.BlockSpec((1, S, M, D), lambda b, l: (b, 0, 0, 0)),
        pl.BlockSpec((1, S, H), lambda b, l: (b, 0, 0)),
        _rep_spec((D, H)),
        _rep_spec((H, D)),
    ] + [_layer_spec(stacked[n].shape[1:]) for n in _WNAMES]

    out_specs = [
        pl.BlockSpec((1, S, D), lambda b, l: (b, 0, 0)),
        pl.BlockSpec((1, S, S), lambda b, l: (b, 0, 0)),
        pl.BlockSpec((1, S, M, H), lambda b, l: (b, 0, 0, 0)),
    ]
    out_shape = [
        jax.ShapeDtypeStruct((B, S, D), jnp.float32),
        jax.ShapeDtypeStruct((B, S, S), jnp.float32),
        jax.ShapeDtypeStruct((B, S, M, H), jnp.float32),
    ]

    out, self_w, cross_w = pl.pallas_call(
        kern,
        grid=(B, L),
        in_specs=in_specs,
        out_specs=out_specs,
        out_shape=out_shape,
        scratch_shapes=[pltpu.VMEM((S, D), jnp.float32)],    # activation carry
        compiler_params=pltpu.CompilerParams(
            dimension_semantics=("parallel", "arbitrary")),
    )(tgt, memory, mask, sel, selT, *[stacked[n] for n in _WNAMES])

    # (B, S, M, H) -> torch's (B, H, S, 1, M)   (tiny host-side layout fixup)
    cross_w = jnp.transpose(cross_w, (0, 3, 1, 2)).reshape(B, H, S, 1, M)

    return {'tgt': out,
            'self_attn_weight': self_w,
            'cross_attn_weight': cross_w}


# ------------------------- deterministic parameter init ---------------------

def init_params(rng, d_model, nhead, d_ff, num_layers):
    D, Dff = d_model, d_ff
    params = []
    for l in range(num_layers):
        k = jax.random.fold_in(rng, l)
        ks = jax.random.split(k, 12)
        s = 1.0 / math.sqrt(D)
        params.append(dict(
            ln1_g=jnp.ones((1, D), jnp.float32), ln1_b=jnp.zeros((1, D), jnp.float32),
            ln2_g=jnp.ones((1, D), jnp.float32), ln2_b=jnp.zeros((1, D), jnp.float32),
            ln3_g=jnp.ones((1, D), jnp.float32), ln3_b=jnp.zeros((1, D), jnp.float32),
            # cross-attn q/k/v linears (stored as (in, out) so kernel does x @ W)
            wq=jax.random.normal(ks[0], (D, D), jnp.float32) * s,
            bq=jax.random.normal(ks[1], (1, D), jnp.float32) * 0.01,
            wk=jax.random.normal(ks[2], (D, D), jnp.float32) * s,
            bk=jax.random.normal(ks[3], (1, D), jnp.float32) * 0.01,
            wv=jax.random.normal(ks[4], (D, D), jnp.float32) * s,
            bv=jax.random.normal(ks[5], (1, D), jnp.float32) * 0.01,
            # nn.MultiheadAttention in_proj (stored transposed), out_proj
            w_in=jax.random.normal(ks[6], (D, 3 * D), jnp.float32) * s,
            b_in=jax.random.normal(ks[7], (1, 3 * D), jnp.float32) * 0.01,
            w_out=jax.random.normal(ks[8], (D, D), jnp.float32) * s,
            b_out=jax.random.normal(ks[9], (1, D), jnp.float32) * 0.01,
            # FeedForward
            w1=jax.random.normal(ks[10], (D, Dff), jnp.float32) * s,
            b1=jnp.zeros((1, Dff), jnp.float32),
            w2=jax.random.normal(ks[11], (Dff, D), jnp.float32) * (1.0 / math.sqrt(Dff)),
            b2=jnp.zeros((1, D), jnp.float32),
        ))
    return params


# ----------------------------------- main ------------------------------------

if __name__ == "__main__":
    B, S, D, H, Dff, num_layers = 2, 8, 32, 4, 64, 2

    rng = jax.random.PRNGKey(0)
    k_data, k_param = jax.random.split(rng)

    names = ['target', 'img', 'feat_a', 'feat_b']          # -> M = 3 memory modalities
    ks = jax.random.split(k_data, len(names))
    revert_dict = {n: jax.random.normal(ks[i], (B, S, D), jnp.float32)
                   for i, n in enumerate(names)}

    # 1 = valid token, 0 = padding (row 1 has its last two steps padded)
    pm = jnp.ones((B, S), jnp.int32).at[1, 6:].set(0)
    padding_mask_dict = {'target_revert_padding_mask': pm}

    params = init_params(k_param, D, H, Dff, num_layers)

    out = temporal_decoder_forward('target', revert_dict, padding_mask_dict,
                                   params, nhead=H, activation='relu')
    jax.block_until_ready(out)

    assert out['tgt'].shape == (B, S, D)
    assert out['self_attn_weight'].shape == (B, S, S)
    assert out['cross_attn_weight'].shape == (B, H, S, 1, len(names) - 1)
    print("KERNEL_OK")
</pallas_src>

<mosaic_0001>
module attributes {stable_mosaic.version = 11 : i64} {
  func.func @_decoder_stack_kernel(%arg0: i32, %arg1: i32, %arg2: memref<1x8x32xf32, #tpu.memory_space<vmem>>, %arg3: memref<1x8x3x32xf32, #tpu.memory_space<vmem>>, %arg4: memref<1x8x4xf32, #tpu.memory_space<vmem>>, %arg5: memref<32x4xf32, #tpu.memory_space<vmem>>, %arg6: memref<4x32xf32, #tpu.memory_space<vmem>>, %arg7: memref<1x1x32xf32, #tpu.memory_space<vmem>>, %arg8: memref<1x1x32xf32, #tpu.memory_space<vmem>>, %arg9: memref<1x32x32xf32, #tpu.memory_space<vmem>>, %arg10: memref<1x1x32xf32, #tpu.memory_space<vmem>>, %arg11: memref<1x32x32xf32, #tpu.memory_space<vmem>>, %arg12: memref<1x1x32xf32, #tpu.memory_space<vmem>>, %arg13: memref<1x32x32xf32, #tpu.memory_space<vmem>>, %arg14: memref<1x1x32xf32, #tpu.memory_space<vmem>>, %arg15: memref<1x1x32xf32, #tpu.memory_space<vmem>>, %arg16: memref<1x1x32xf32, #tpu.memory_space<vmem>>, %arg17: memref<1x32x96xf32, #tpu.memory_space<vmem>>, %arg18: memref<1x1x96xf32, #tpu.memory_space<vmem>>, %arg19: memref<1x32x32xf32, #tpu.memory_space<vmem>>, %arg20: memref<1x1x32xf32, #tpu.memory_space<vmem>>, %arg21: memref<1x1x32xf32, #tpu.memory_space<vmem>>, %arg22: memref<1x1x32xf32, #tpu.memory_space<vmem>>, %arg23: memref<1x32x64xf32, #tpu.memory_space<vmem>>, %arg24: memref<1x1x64xf32, #tpu.memory_space<vmem>>, %arg25: memref<1x64x32xf32, #tpu.memory_space<vmem>>, %arg26: memref<1x1x32xf32, #tpu.memory_space<vmem>>, %arg27: memref<1x8x32xf32, #tpu.memory_space<vmem>>, %arg28: memref<1x8x8xf32, #tpu.memory_space<vmem>>, %arg29: memref<1x8x3x4xf32, #tpu.memory_space<vmem>>, %arg30: memref<8x32xf32, #tpu.memory_space<vmem>>) attributes {dimension_semantics = [#tpu.dimension_semantics<parallel>, #tpu.dimension_semantics<arbitrary>], iteration_bounds = array<i64: 2, 2>, scalar_prefetch = 0 : i64, scratch_operands = 1 : i64, tpu.core_type = #tpu.core_type<tc>, window_params = [{transform_indices = @transform_0, window_bounds = array<i64: 1, 8, 32>}, {transform_indices = @transform_1, window_bounds = array<i64: 1, 8, 3, 32>}, {transform_indices = @transform_2, window_bounds = array<i64: 1, 8, 4>}, {pipeline_mode = #tpu.pipeline_mode<synchronous>, transform_indices = @transform_3, window_bounds = array<i64: 32, 4>}, {pipeline_mode = #tpu.pipeline_mode<synchronous>, transform_indices = @transform_4, window_bounds = array<i64: 4, 32>}, {transform_indices = @transform_5, window_bounds = array<i64: 1, 1, 32>}, {transform_indices = @transform_6, window_bounds = array<i64: 1, 1, 32>}, {transform_indices = @transform_7, window_bounds = array<i64: 1, 32, 32>}, {transform_indices = @transform_8, window_bounds = array<i64: 1, 1, 32>}, {transform_indices = @transform_9, window_bounds = array<i64: 1, 32, 32>}, {transform_indices = @transform_10, window_bounds = array<i64: 1, 1, 32>}, {transform_indices = @transform_11, window_bounds = array<i64: 1, 32, 32>}, {transform_indices = @transform_12, window_bounds = array<i64: 1, 1, 32>}, {transform_indices = @transform_13, window_bounds = array<i64: 1, 1, 32>}, {transform_indices = @transform_14, window_bounds = array<i64: 1, 1, 32>}, {transform_indices = @transform_15, window_bounds = array<i64: 1, 32, 96>}, {transform_indices = @transform_16, window_bounds = array<i64: 1, 1, 96>}, {transform_indices = @transform_17, window_bounds = array<i64: 1, 32, 32>}, {transform_indices = @transform_18, window_bounds = array<i64: 1, 1, 32>}, {transform_indices = @transform_19, window_bounds = array<i64: 1, 1, 32>}, {transform_indices = @transform_20, window_bounds = array<i64: 1, 1, 32>}, {transform_indices = @transform_21, window_bounds = array<i64: 1, 32, 64>}, {transform_indices = @transform_22, window_bounds = array<i64: 1, 1, 64>}, {transform_indices = @transform_23, window_bounds = array<i64: 1, 64, 32>}, {transform_indices = @transform_24, window_bounds = array<i64: 1, 1, 32>}, {transform_indices = @transform_25, window_bounds = array<i64: 1, 8, 32>}, {transform_indices = @transform_26, window_bounds = array<i64: 1, 8, 8>}, {transform_indices = @transform_27, window_bounds = array<i64: 1, 8, 3, 4>}]} {
    %c0_i32 = arith.constant 0 : i32
    %0 = arith.cmpi eq, %arg1, %c0_i32 : i32
    %1 = arith.extui %0 : i1 to i32
    %c0_i32_0 = arith.constant 0 : i32
    %2 = arith.cmpi ne, %1, %c0_i32_0 : i32
    scf.if %2 {
      %c0_121 = arith.constant 0 : index
      %c0_122 = arith.constant 0 : index
      %c0_123 = arith.constant 0 : index
      %212 = vector.load %arg2[%c0_121, %c0_122, %c0_123] : memref<1x8x32xf32, #tpu.memory_space<vmem>>, vector<1x8x32xf32>
      %213 = vector.shape_cast %212 : vector<1x8x32xf32> to vector<8x32xf32>
      %c0_124 = arith.constant 0 : index
      %c0_125 = arith.constant 0 : index
      %214 = vector.load %arg30[%c0_124, %c0_125] : memref<8x32xf32, #tpu.memory_space<vmem>>, vector<8x32xf32>
      tpu.vector_store %arg30[%c0_124, %c0_125], %213 {strides = array<i32>} : memref<8x32xf32, #tpu.memory_space<vmem>>, vector<8x32xf32>,
    } else {
    }
    %c0 = arith.constant 0 : index
    %c0_1 = arith.constant 0 : index
    %3 = vector.load %arg30[%c0, %c0_1] : memref<8x32xf32, #tpu.memory_space<vmem>>, vector<8x32xf32>
    %c0_2 = arith.constant 0 : index
    %c0_3 = arith.constant 0 : index
    %c0_4 = arith.constant 0 : index
    %c0_5 = arith.constant 0 : index
    %4 = vector.load %arg3[%c0_2, %c0_3, %c0_4, %c0_5] : memref<1x8x3x32xf32, #tpu.memory_space<vmem>>, vector<1x8x3x32xf32>
    %5 = vector.shape_cast %4 : vector<1x8x3x32xf32> to vector<8x3x32xf32>
    %6 = vector.shape_cast %5 : vector<8x3x32xf32> to vector<24x32xf32>
    %c0_6 = arith.constant 0 : index
    %c0_7 = arith.constant 0 : index
    %c0_8 = arith.constant 0 : index
    %7 = vector.load %arg4[%c0_6, %c0_7, %c0_8] : memref<1x8x4xf32, #tpu.memory_space<vmem>>, vector<1x8x4xf32>
    %8 = vector.shape_cast %7 : vector<1x8x4xf32> to vector<8x4xf32>
    %c0_9 = arith.constant 0 : index
    %c0_10 = arith.constant 0 : index
    %9 = vector.load %arg5[%c0_9, %c0_10] : memref<32x4xf32, #tpu.memory_space<vmem>>, vector<32x4xf32>
    %c0_11 = arith.constant 0 : index
    %c0_12 = arith.constant 0 : index
    %10 = vector.load %arg6[%c0_11, %c0_12] : memref<4x32xf32, #tpu.memory_space<vmem>>, vector<4x32xf32>
    %c0_13 = arith.constant 0 : index
    %c0_14 = arith.constant 0 : index
    %c0_15 = arith.constant 0 : index
    %11 = vector.load %arg7[%c0_13, %c0_14, %c0_15] : memref<1x1x32xf32, #tpu.memory_space<vmem>>, vector<1x1x32xf32>
    %12 = vector.shape_cast %11 : vector<1x1x32xf32> to vector<1x32xf32>
    %c0_16 = arith.constant 0 : index
    %c0_17 = arith.constant 0 : index
    %c0_18 = arith.constant 0 : index
    %13 = vector.load %arg8[%c0_16, %c0_17, %c0_18] : memref<1x1x32xf32, #tpu.memory_space<vmem>>, vector<1x1x32xf32>
    %14 = vector.shape_cast %13 : vector<1x1x32xf32> to vector<1x32xf32>
    %cst = arith.constant dense<0.000000e+00> : vector<8xf32>
    %15 = vector.multi_reduction <add>, %3, %cst [1] : vector<8x32xf32> to vector<8xf32>
    %16 = vector.shape_cast %15 : vector<8xf32> to vector<8x1xf32>
    %cst_19 = arith.constant 3.200000e+01 : f32
    %17 = vector.broadcast %cst_19 : f32 to vector<8x1xf32>
    %18 = arith.divf %16, %17 : vector<8x1xf32>
    %19 = vector.broadcast %18 : vector<8x1xf32> to vector<8x32xf32>
    %20 = arith.subf %3, %19 : vector<8x32xf32>
    %21 = arith.mulf %20, %20 : vector<8x32xf32>
    %cst_20 = arith.constant dense<0.000000e+00> : vector<8xf32>
    %22 = vector.multi_reduction <add>, %21, %cst_20 [1] : vector<8x32xf32> to vector<8xf32>
    %23 = vector.shape_cast %22 : vector<8xf32> to vector<8x1xf32>
    %cst_21 = arith.constant 3.200000e+01 : f32
    %24 = vector.broadcast %cst_21 : f32 to vector<8x1xf32>
    %25 = arith.divf %23, %24 : vector<8x1xf32>
    %26 = vector.broadcast %18 : vector<8x1xf32> to vector<8x32xf32>
    %27 = arith.subf %3, %26 : vector<8x32xf32>
    %cst_22 = arith.constant 9.99999974E-6 : f32
    %28 = vector.broadcast %cst_22 : f32 to vector<8x1xf32>
    %29 = arith.addf %25, %28 : vector<8x1xf32>
    %30 = math.rsqrt %29 : vector<8x1xf32>
    %31 = vector.broadcast %30 : vector<8x1xf32> to vector<8x32xf32>
    %32 = arith.mulf %27, %31 : vector<8x32xf32>
    %33 = vector.broadcast %12 : vector<1x32xf32> to vector<8x32xf32>
    %34 = arith.mulf %32, %33 : vector<8x32xf32>
    %35 = vector.broadcast %14 : vector<1x32xf32> to vector<8x32xf32>
    %36 = arith.addf %34, %35 : vector<8x32xf32>
    %c0_23 = arith.constant 0 : index
    %c0_24 = arith.constant 0 : index
    %c0_25 = arith.constant 0 : index
    %37 = vector.load %arg9[%c0_23, %c0_24, %c0_25] : memref<1x32x32xf32, #tpu.memory_space<vmem>>, vector<1x32x32xf32>
    %38 = vector.shape_cast %37 : vector<1x32x32xf32> to vector<32x32xf32>
    %cst_26 = arith.constant dense<0.000000e+00> : vector<8x32xf32>
    %39 = tpu.matmul %36, %38, %cst_26 {dimension_numbers = #tpu.dot_dimension_numbers<[1], [0], [0], [1], [0, 0, 1, 1], [], []>} : vector<8x32xf32>, vector<32x32xf32>, vector<8x32xf32> -> vector<8x32xf32>
    %c0_27 = arith.constant 0 : index
    %c0_28 = arith.constant 0 : index
    %c0_29 = arith.constant 0 : index
    %40 = vector.load %arg10[%c0_27, %c0_28, %c0_29] : memref<1x1x32xf32, #tpu.memory_space<vmem>>, vector<1x1x32xf32>
    %41 = vector.shape_cast %40 : vector<1x1x32xf32> to vector<1x32xf32>
    %42 = vector.broadcast %41 : vector<1x32xf32> to vector<8x32xf32>
    %43 = arith.addf %39, %42 : vector<8x32xf32>
    %c0_30 = arith.constant 0 : index
    %c0_31 = arith.constant 0 : index
    %c0_32 = arith.constant 0 : index
    %44 = vector.load %arg11[%c0_30, %c0_31, %c0_32] : memref<1x32x32xf32, #tpu.memory_space<vmem>>, vector<1x32x32xf32>
    %45 = vector.shape_cast %44 : vector<1x32x32xf32> to vector<32x32xf32>
    %cst_33 = arith.constant dense<0.000000e+00> : vector<24x32xf32>
    %46 = tpu.matmul %6, %45, %cst_33 {dimension_numbers = #tpu.dot_dimension_numbers<[1], [0], [0], [1], [0, 0, 1, 1], [], []>} : vector<24x32xf32>, vector<32x32xf32>, vector<24x32xf32> -> vector<24x32xf32>
    %c0_34 = arith.constant 0 : index
    %c0_35 = arith.constant 0 : index
    %c0_36 = arith.constant 0 : index
    %47 = vector.load %arg12[%c0_34, %c0_35, %c0_36] : memref<1x1x32xf32, #tpu.memory_space<vmem>>, vector<1x1x32xf32>
    %48 = vector.shape_cast %47 : vector<1x1x32xf32> to vector<1x32xf32>
    %49 = vector.broadcast %48 : vector<1x32xf32> to vector<24x32xf32>
    %50 = arith.addf %46, %49 : vector<24x32xf32>
    %c0_37 = arith.constant 0 : index
    %c0_38 = arith.constant 0 : index
    %c0_39 = arith.constant 0 : index
    %51 = vector.load %arg13[%c0_37, %c0_38, %c0_39] : memref<1x32x32xf32, #tpu.memory_space<vmem>>, vector<1x32x32xf32>
    %52 = vector.shape_cast %51 : vector<1x32x32xf32> to vector<32x32xf32>
    %cst_40 = arith.constant dense<0.000000e+00> : vector<24x32xf32>
    %53 = tpu.matmul %6, %52, %cst_40 {dimension_numbers = #tpu.dot_dimension_numbers<[1], [0], [0], [1], [0, 0, 1, 1], [], []>} : vector<24x32xf32>, vector<32x32xf32>, vector<24x32xf32> -> vector<24x32xf32>
    %c0_41 = arith.constant 0 : index
    %c0_42 = arith.constant 0 : index
    %c0_43 = arith.constant 0 : index
    %54 = vector.load %arg14[%c0_41, %c0_42, %c0_43] : memref<1x1x32xf32, #tpu.memory_space<vmem>>, vector<1x1x32xf32>
    %55 = vector.shape_cast %54 : vector<1x1x32xf32> to vector<1x32xf32>
    %56 = vector.broadcast %55 : vector<1x32xf32> to vector<24x32xf32>
    %57 = arith.addf %53, %56 : vector<24x32xf32>
    %58 = vector.shape_cast %43 : vector<8x32xf32> to vector<8x1x32xf32>
    %59 = vector.shape_cast %50 : vector<24x32xf32> to vector<8x3x32xf32>
    %60 = vector.broadcast %58 : vector<8x1x32xf32> to vector<8x3x32xf32>
    %61 = arith.mulf %60, %59 : vector<8x3x32xf32>
    %62 = vector.shape_cast %61 : vector<8x3x32xf32> to vector<24x32xf32>
    %cst_44 = arith.constant dense<0.000000e+00> : vector<24x4xf32>
    %63 = tpu.matmul %62, %9, %cst_44 {dimension_numbers = #tpu.dot_dimension_numbers<[1], [0], [0], [1], [0, 0, 1, 1], [], []>} : vector<24x32xf32>, vector<32x4xf32>, vector<24x4xf32> -> vector<24x4xf32>
    %64 = vector.shape_cast %63 : vector<24x4xf32> to vector<8x3x4xf32>
    %cst_45 = arith.constant 0.353553385 : f32
    %65 = vector.broadcast %cst_45 : f32 to vector<8x3x4xf32>
    %66 = arith.mulf %64, %65 : vector<8x3x4xf32>
    %cst_46 = arith.constant dense<0xFF800000> : vector<8x4xf32>
    %67 = vector.multi_reduction <maximumf>, %66, %cst_46 [1] : vector<8x3x4xf32> to vector<8x4xf32>
    %68 = vector.shape_cast %67 : vector<8x4xf32> to vector<8x1x4xf32>
    %69 = vector.broadcast %68 : vector<8x1x4xf32> to vector<8x3x4xf32>
    %70 = arith.subf %66, %69 : vector<8x3x4xf32>
    %71 = math.exp %70 : vector<8x3x4xf32>
    %cst_47 = arith.constant dense<0.000000e+00> : vector<8x4xf32>
    %72 = vector.multi_reduction <add>, %71, %cst_47 [1] : vector<8x3x4xf32> to vector<8x4xf32>
    %73 = vector.shape_cast %72 : vector<8x4xf32> to vector<8x1x4xf32>
    %74 = vector.broadcast %73 : vector<8x1x4xf32> to vector<8x3x4xf32>
    %75 = arith.divf %71, %74 : vector<8x3x4xf32>
    %76 = vector.shape_cast %75 : vector<8x3x4xf32> to vector<24x4xf32>
    %cst_48 = arith.constant dense<0.000000e+00> : vector<24x32xf32>
    %77 = tpu.matmul %76, %10, %cst_48 {dimension_numbers = #tpu.dot_dimension_numbers<[1], [0], [0], [1], [0, 0, 1, 1], [], []>} : vector<24x4xf32>, vector<4x32xf32>, vector<24x32xf32> -> vector<24x32xf32>
    %78 = vector.shape_cast %77 : vector<24x32xf32> to vector<8x3x32xf32>
    %79 = vector.shape_cast %57 : vector<24x32xf32> to vector<8x3x32xf32>
    %80 = arith.mulf %78, %79 : vector<8x3x32xf32>
    %cst_49 = arith.constant dense<0.000000e+00> : vector<8x32xf32>
    %81 = vector.multi_reduction <add>, %80, %cst_49 [1] : vector<8x3x32xf32> to vector<8x32xf32>
    %82 = arith.addf %3, %81 : vector<8x32xf32>
    %c0_50 = arith.constant 0 : index
    %c0_51 = arith.constant 0 : index
    %c0_52 = arith.constant 0 : index
    %83 = vector.load %arg15[%c0_50, %c0_51, %c0_52] : memref<1x1x32xf32, #tpu.memory_space<vmem>>, vector<1x1x32xf32>
    %84 = vector.shape_cast %83 : vector<1x1x32xf32> to vector<1x32xf32>
    %c0_53 = arith.constant 0 : index
    %c0_54 = arith.constant 0 : index
    %c0_55 = arith.constant 0 : index
    %85 = vector.load %arg16[%c0_53, %c0_54, %c0_55] : memref<1x1x32xf32, #tpu.memory_space<vmem>>, vector<1x1x32xf32>
    %86 = vector.shape_cast %85 : vector<1x1x32xf32> to vector<1x32xf32>
    %cst_56 = arith.constant dense<0.000000e+00> : vector<8xf32>
    %87 = vector.multi_reduction <add>, %82, %cst_56 [1] : vector<8x32xf32> to vector<8xf32>
    %88 = vector.shape_cast %87 : vector<8xf32> to vector<8x1xf32>
    %cst_57 = arith.constant 3.200000e+01 : f32
    %89 = vector.broadcast %cst_57 : f32 to vector<8x1xf32>
    %90 = arith.divf %88, %89 : vector<8x1xf32>
    %91 = vector.broadcast %90 : vector<8x1xf32> to vector<8x32xf32>
    %92 = arith.subf %82, %91 : vector<8x32xf32>
    %93 = arith.mulf %92, %92 : vector<8x32xf32>
    %cst_58 = arith.constant dense<0.000000e+00> : vector<8xf32>
    %94 = vector.multi_reduction <add>, %93, %cst_58 [1] : vector<8x32xf32> to vector<8xf32>
    %95 = vector.shape_cast %94 : vector<8xf32> to vector<8x1xf32>
    %cst_59 = arith.constant 3.200000e+01 : f32
    %96 = vector.broadcast %cst_59 : f32 to vector<8x1xf32>
    %97 = arith.divf %95, %96 : vector<8x1xf32>
    %98 = vector.broadcast %90 : vector<8x1xf32> to vector<8x32xf32>
    %99 = arith.subf %82, %98 : vector<8x32xf32>
    %cst_60 = arith.constant 9.99999974E-6 : f32
    %100 = vector.broadcast %cst_60 : f32 to vector<8x1xf32>
    %101 = arith.addf %97, %100 : vector<8x1xf32>
    %102 = math.rsqrt %101 : vector<8x1xf32>
    %103 = vector.broadcast %102 : vector<8x1xf32> to vector<8x32xf32>
    %104 = arith.mulf %99, %103 : vector<8x32xf32>
    %105 = vector.broadcast %84 : vector<1x32xf32> to vector<8x32xf32>
    %106 = arith.mulf %104, %105 : vector<8x32xf32>
    %107 = vector.broadcast %86 : vector<1x32xf32> to vector<8x32xf32>
    %108 = arith.addf %106, %107 : vector<8x32xf32>
    %c0_61 = arith.constant 0 : index
    %c0_62 = arith.constant 0 : index
    %c0_63 = arith.constant 0 : index
    %109 = vector.load %arg17[%c0_61, %c0_62, %c0_63] : memref<1x32x96xf32, #tpu.memory_space<vmem>>, vector<1x32x96xf32>
    %110 = vector.shape_cast %109 : vector<1x32x96xf32> to vector<32x96xf32>
    %cst_64 = arith.constant dense<0.000000e+00> : vector<8x96xf32>
    %111 = tpu.matmul %108, %110, %cst_64 {dimension_numbers = #tpu.dot_dimension_numbers<[1], [0], [0], [1], [0, 0, 1, 1], [], []>} : vector<8x32xf32>, vector<32x96xf32>, vector<8x96xf32> -> vector<8x96xf32>
    %c0_65 = arith.constant 0 : index
    %c0_66 = arith.constant 0 : index
    %c0_67 = arith.constant 0 : index
    %112 = vector.load %arg18[%c0_65, %c0_66, %c0_67] : memref<1x1x96xf32, #tpu.memory_space<vmem>>, vector<1x1x96xf32>
    %113 = vector.shape_cast %112 : vector<1x1x96xf32> to vector<1x96xf32>
    %114 = vector.broadcast %113 : vector<1x96xf32> to vector<8x96xf32>
    %115 = arith.addf %111, %114 : vector<8x96xf32>
    %116 = vector.extract_strided_slice %115 {offsets = [0, 0], sizes = [8, 32], strides = [1, 1]} : vector<8x96xf32> to vector<8x32xf32>
    %117 = vector.extract_strided_slice %115 {offsets = [0, 32], sizes = [8, 32], strides = [1, 1]} : vector<8x96xf32> to vector<8x32xf32>
    %118 = vector.extract_strided_slice %115 {offsets = [0, 64], sizes = [8, 32], strides = [1, 1]} : vector<8x96xf32> to vector<8x32xf32>
    %119 = vector.shape_cast %116 : vector<8x32xf32> to vector<8x1x32xf32>
    %120 = vector.shape_cast %117 : vector<8x32xf32> to vector<1x8x32xf32>
    %121 = vector.broadcast %119 : vector<8x1x32xf32> to vector<8x8x32xf32>
    %122 = vector.broadcast %120 : vector<1x8x32xf32> to vector<8x8x32xf32>
    %123 = arith.mulf %121, %122 : vector<8x8x32xf32>
    %124 = vector.shape_cast %123 : vector<8x8x32xf32> to vector<64x32xf32>
    %cst_68 = arith.constant dense<0.000000e+00> : vector<64x4xf32>
    %125 = tpu.matmul %124, %9, %cst_68 {dimension_numbers = #tpu.dot_dimension_numbers<[1], [0], [0], [1], [0, 0, 1, 1], [], []>} : vector<64x32xf32>, vector<32x4xf32>, vector<64x4xf32> -> vector<64x4xf32>
    %126 = vector.shape_cast %125 : vector<64x4xf32> to vector<8x8x4xf32>
    %cst_69 = arith.constant 0.353553385 : f32
    %127 = vector.broadcast %cst_69 : f32 to vector<8x8x4xf32>
    %128 = arith.mulf %126, %127 : vector<8x8x4xf32>
    %129 = vector.shape_cast %8 : vector<8x4xf32> to vector<1x8x4xf32>
    %130 = vector.broadcast %129 : vector<1x8x4xf32> to vector<8x8x4xf32>
    %131 = arith.addf %128, %130 : vector<8x8x4xf32>
    %cst_70 = arith.constant dense<0xFF800000> : vector<8x4xf32>
    %132 = vector.multi_reduction <maximumf>, %131, %cst_70 [1] : vector<8x8x4xf32> to vector<8x4xf32>
    %133 = vector.shape_cast %132 : vector<8x4xf32> to vector<8x1x4xf32>
    %134 = vector.broadcast %133 : vector<8x1x4xf32> to vector<8x8x4xf32>
    %135 = arith.subf %131, %134 : vector<8x8x4xf32>
    %136 = math.exp %135 : vector<8x8x4xf32>
    %cst_71 = arith.constant dense<0.000000e+00> : vector<8x4xf32>
    %137 = vector.multi_reduction <add>, %136, %cst_71 [1] : vector<8x8x4xf32> to vector<8x4xf32>
    %138 = vector.shape_cast %137 : vector<8x4xf32> to vector<8x1x4xf32>
    %139 = vector.broadcast %138 : vector<8x1x4xf32> to vector<8x8x4xf32>
    %140 = arith.divf %136, %139 : vector<8x8x4xf32>
    %141 = vector.shape_cast %140 : vector<8x8x4xf32> to vector<64x4xf32>
    %cst_72 = arith.constant dense<0.000000e+00> : vector<64x32xf32>
    %142 = tpu.matmul %141, %10, %cst_72 {dimension_numbers = #tpu.dot_dimension_numbers<[1], [0], [0], [1], [0, 0, 1, 1], [], []>} : vector<64x4xf32>, vector<4x32xf32>, vector<64x32xf32> -> vector<64x32xf32>
    %143 = vector.shape_cast %142 : vector<64x32xf32> to vector<8x8x32xf32>
    %144 = vector.shape_cast %118 : vector<8x32xf32> to vector<1x8x32xf32>
    %145 = vector.broadcast %144 : vector<1x8x32xf32> to vector<8x8x32xf32>
    %146 = arith.mulf %143, %145 : vector<8x8x32xf32>
    %cst_73 = arith.constant dense<0.000000e+00> : vector<8x32xf32>
    %147 = vector.multi_reduction <add>, %146, %cst_73 [1] : vector<8x8x32xf32> to vector<8x32xf32>
    %c0_74 = arith.constant 0 : index
    %c0_75 = arith.constant 0 : index
    %c0_76 = arith.constant 0 : index
    %148 = vector.load %arg19[%c0_74, %c0_75, %c0_76] : memref<1x32x32xf32, #tpu.memory_space<vmem>>, vector<1x32x32xf32>
    %149 = vector.shape_cast %148 : vector<1x32x32xf32> to vector<32x32xf32>
    %cst_77 = arith.constant dense<0.000000e+00> : vector<8x32xf32>
    %150 = tpu.matmul %147, %149, %cst_77 {dimension_numbers = #tpu.dot_dimension_numbers<[1], [0], [0], [1], [0, 0, 1, 1], [], []>} : vector<8x32xf32>, vector<32x32xf32>, vector<8x32xf32> -> vector<8x32xf32>
    %c0_78 = arith.constant 0 : index
    %c0_79 = arith.constant 0 : index
    %c0_80 = arith.constant 0 : index
    %151 = vector.load %arg20[%c0_78, %c0_79, %c0_80] : memref<1x1x32xf32, #tpu.memory_space<vmem>>, vector<1x1x32xf32>
    %152 = vector.shape_cast %151 : vector<1x1x32xf32> to vector<1x32xf32>
    %153 = vector.broadcast %152 : vector<1x32xf32> to vector<8x32xf32>
    %154 = arith.addf %150, %153 : vector<8x32xf32>
    %155 = arith.addf %82, %154 : vector<8x32xf32>
    %c0_81 = arith.constant 0 : index
    %c0_82 = arith.constant 0 : index
    %c0_83 = arith.constant 0 : index
    %156 = vector.load %arg21[%c0_81, %c0_82, %c0_83] : memref<1x1x32xf32, #tpu.memory_space<vmem>>, vector<1x1x32xf32>
    %157 = vector.shape_cast %156 : vector<1x1x32xf32> to vector<1x32xf32>
    %c0_84 = arith.constant 0 : index
    %c0_85 = arith.constant 0 : index
    %c0_86 = arith.constant 0 : index
    %158 = vector.load %arg22[%c0_84, %c0_85, %c0_86] : memref<1x1x32xf32, #tpu.memory_space<vmem>>, vector<1x1x32xf32>
    %159 = vector.shape_cast %158 : vector<1x1x32xf32> to vector<1x32xf32>
    %cst_87 = arith.constant dense<0.000000e+00> : vector<8xf32>
    %160 = vector.multi_reduction <add>, %155, %cst_87 [1] : vector<8x32xf32> to vector<8xf32>
    %161 = vector.shape_cast %160 : vector<8xf32> to vector<8x1xf32>
    %cst_88 = arith.constant 3.200000e+01 : f32
    %162 = vector.broadcast %cst_88 : f32 to vector<8x1xf32>
    %163 = arith.divf %161, %162 : vector<8x1xf32>
    %164 = vector.broadcast %163 : vector<8x1xf32> to vector<8x32xf32>
    %165 = arith.subf %155, %164 : vector<8x32xf32>
    %166 = arith.mulf %165, %165 : vector<8x32xf32>
    %cst_89 = arith.constant dense<0.000000e+00> : vector<8xf32>
    %167 = vector.multi_reduction <add>, %166, %cst_89 [1] : vector<8x32xf32> to vector<8xf32>
    %168 = vector.shape_cast %167 : vector<8xf32> to vector<8x1xf32>
    %cst_90 = arith.constant 3.200000e+01 : f32
    %169 = vector.broadcast %cst_90 : f32 to vector<8x1xf32>
    %170 = arith.divf %168, %169 : vector<8x1xf32>
    %171 = vector.broadcast %163 : vector<8x1xf32> to vector<8x32xf32>
    %172 = arith.subf %155, %171 : vector<8x32xf32>
    %cst_91 = arith.constant 9.99999974E-6 : f32
    %173 = vector.broadcast %cst_91 : f32 to vector<8x1xf32>
    %174 = arith.addf %170, %173 : vector<8x1xf32>
    %175 = math.rsqrt %174 : vector<8x1xf32>
    %176 = vector.broadcast %175 : vector<8x1xf32> to vector<8x32xf32>
    %177 = arith.mulf %172, %176 : vector<8x32xf32>
    %178 = vector.broadcast %157 : vector<1x32xf32> to vector<8x32xf32>
    %179 = arith.mulf %177, %178 : vector<8x32xf32>
    %180 = vector.broadcast %159 : vector<1x32xf32> to vector<8x32xf32>
    %181 = arith.addf %179, %180 : vector<8x32xf32>
    %c0_92 = arith.constant 0 : index
    %c0_93 = arith.constant 0 : index
    %c0_94 = arith.constant 0 : index
    %182 = vector.load %arg23[%c0_92, %c0_93, %c0_94] : memref<1x32x64xf32, #tpu.memory_space<vmem>>, vector<1x32x64xf32>
    %183 = vector.shape_cast %182 : vector<1x32x64xf32> to vector<32x64xf32>
    %cst_95 = arith.constant dense<0.000000e+00> : vector<8x64xf32>
    %184 = tpu.matmul %181, %183, %cst_95 {dimension_numbers = #tpu.dot_dimension_numbers<[1], [0], [0], [1], [0, 0, 1, 1], [], []>} : vector<8x32xf32>, vector<32x64xf32>, vector<8x64xf32> -> vector<8x64xf32>
    %c0_96 = arith.constant 0 : index
    %c0_97 = arith.constant 0 : index
    %c0_98 = arith.constant 0 : index
    %185 = vector.load %arg24[%c0_96, %c0_97, %c0_98] : memref<1x1x64xf32, #tpu.memory_space<vmem>>, vector<1x1x64xf32>
    %186 = vector.shape_cast %185 : vector<1x1x64xf32> to vector<1x64xf32>
    %187 = vector.broadcast %186 : vector<1x64xf32> to vector<8x64xf32>
    %188 = arith.addf %184, %187 : vector<8x64xf32>
    %cst_99 = arith.constant 0.000000e+00 : f32
    %189 = vector.broadcast %cst_99 : f32 to vector<8x64xf32>
    %190 = arith.maximumf %188, %189 : vector<8x64xf32>
    %c0_100 = arith.constant 0 : index
    %c0_101 = arith.constant 0 : index
    %c0_102 = arith.constant 0 : index
    %191 = vector.load %arg25[%c0_100, %c0_101, %c0_102] : memref<1x64x32xf32, #tpu.memory_space<vmem>>, vector<1x64x32xf32>
    %192 = vector.shape_cast %191 : vector<1x64x32xf32> to vector<64x32xf32>
    %cst_103 = arith.constant dense<0.000000e+00> : vector<8x32xf32>
    %193 = tpu.matmul %190, %192, %cst_103 {dimension_numbers = #tpu.dot_dimension_numbers<[1], [0], [0], [1], [0, 0, 1, 1], [], []>} : vector<8x64xf32>, vector<64x32xf32>, vector<8x32xf32> -> vector<8x32xf32>
    %194 = arith.addf %155, %193 : vector<8x32xf32>
    %c0_104 = arith.constant 0 : index
    %c0_105 = arith.constant 0 : index
    %c0_106 = arith.constant 0 : index
    %195 = vector.load %arg26[%c0_104, %c0_105, %c0_106] : memref<1x1x32xf32, #tpu.memory_space<vmem>>, vector<1x1x32xf32>
    %196 = vector.shape_cast %195 : vector<1x1x32xf32> to vector<1x32xf32>
    %197 = vector.broadcast %196 : vector<1x32xf32> to vector<8x32xf32>
    %198 = arith.addf %194, %197 : vector<8x32xf32>
    %c0_107 = arith.constant 0 : index
    %c0_108 = arith.constant 0 : index
    %199 = vector.load %arg30[%c0_107, %c0_108] : memref<8x32xf32, #tpu.memory_space<vmem>>, vector<8x32xf32>
    tpu.vector_store %arg30[%c0_107, %c0_108], %198 {strides = array<i32>} : memref<8x32xf32, #tpu.memory_space<vmem>>, vector<8x32xf32>,
    %c0_109 = arith.constant 0 : index
    %c0_110 = arith.constant 0 : index
    %c0_111 = arith.constant 0 : index
    %200 = vector.load %arg27[%c0_109, %c0_110, %c0_111] : memref<1x8x32xf32, #tpu.memory_space<vmem>>, vector<1x8x32xf32>
    %201 = vector.shape_cast %200 : vector<1x8x32xf32> to vector<8x32xf32>
    %202 = vector.shape_cast %198 : vector<8x32xf32> to vector<1x8x32xf32>
    tpu.vector_store %arg27[%c0_109, %c0_110, %c0_111], %202 {strides = array<i32>} : memref<1x8x32xf32, #tpu.memory_space<vmem>>, vector<1x8x32xf32>,
    %cst_112 = arith.constant dense<0.000000e+00> : vector<8x8xf32>
    %203 = vector.multi_reduction <add>, %140, %cst_112 [2] : vector<8x8x4xf32> to vector<8x8xf32>
    %cst_113 = arith.constant 4.000000e+00 : f32
    %204 = vector.broadcast %cst_113 : f32 to vector<8x8xf32>
    %205 = arith.divf %203, %204 : vector<8x8xf32>
    %c0_114 = arith.constant 0 : index
    %c0_115 = arith.constant 0 : index
    %c0_116 = arith.constant 0 : index
    %206 = vector.load %arg28[%c0_114, %c0_115, %c0_116] : memref<1x8x8xf32, #tpu.memory_space<vmem>>, vector<1x8x8xf32>
    %207 = vector.shape_cast %206 : vector<1x8x8xf32> to vector<8x8xf32>
    %208 = vector.shape_cast %205 : vector<8x8xf32> to vector<1x8x8xf32>
    tpu.vector_store %arg28[%c0_114, %c0_115, %c0_116], %208 {strides = array<i32>} : memref<1x8x8xf32, #tpu.memory_space<vmem>>, vector<1x8x8xf32>,
    %c0_117 = arith.constant 0 : index
    %c0_118 = arith.constant 0 : index
    %c0_119 = arith.constant 0 : index
    %c0_120 = arith.constant 0 : index
    %209 = vector.load %arg29[%c0_117, %c0_118, %c0_119, %c0_120] : memref<1x8x3x4xf32, #tpu.memory_space<vmem>>, vector<1x8x3x4xf32>
    %210 = vector.shape_cast %209 : vector<1x8x3x4xf32> to vector<8x3x4xf32>
    %211 = vector.shape_cast %75 : vector<8x3x4xf32> to vector<1x8x3x4xf32>
    tpu.vector_store %arg29[%c0_117, %c0_118, %c0_119, %c0_120], %211 {strides = array<i32>} : memref<1x8x3x4xf32, #tpu.memory_space<vmem>>, vector<1x8x3x4xf32>,
    return
  }
  func.func @transform_0(%arg0: i32, %arg1: i32) -> (i32, i32, i32) {
    %c0_i32 = arith.constant 0 : i32
    %c0_i32_0 = arith.constant 0 : i32
    %c0_i32_1 = arith.constant 0 : i32
    return %arg0, %c0_i32, %c0_i32_0 : i32, i32, i32
  }
  func.func @transform_1(%arg0: i32, %arg1: i32) -> (i32, i32, i32, i32) {
    %c0_i32 = arith.constant 0 : i32
    %c0_i32_0 = arith.constant 0 : i32
    %c0_i32_1 = arith.constant 0 : i32
    %c0_i32_2 = arith.constant 0 : i32
    return %arg0, %c0_i32, %c0_i32_0, %c0_i32_1 : i32, i32, i32, i32
  }
  func.func @transform_2(%arg0: i32, %arg1: i32) -> (i32, i32, i32) {
    %c0_i32 = arith.constant 0 : i32
    %c0_i32_0 = arith.constant 0 : i32
    %c0_i32_1 = arith.constant 0 : i32
    return %arg0, %c0_i32, %c0_i32_0 : i32, i32, i32
  }
  func.func @transform_3(%arg0: i32, %arg1: i32) -> (i32, i32) {
    %c0_i32 = arith.constant 0 : i32
    %c0_i32_0 = arith.constant 0 : i32
    %c0_i32_1 = arith.constant 0 : i32
    return %c0_i32, %c0_i32_0 : i32, i32
  }
  func.func @transform_4(%arg0: i32, %arg1: i32) -> (i32, i32) {
    %c0_i32 = arith.constant 0 : i32
    %c0_i32_0 = arith.constant 0 : i32
    %c0_i32_1 = arith.constant 0 : i32
    return %c0_i32, %c0_i32_0 : i32, i32
  }
  func.func @transform_5(%arg0: i32, %arg1: i32) -> (i32, i32, i32) {
    %c0_i32 = arith.constant 0 : i32
    %c0_i32_0 = arith.constant 0 : i32
    %c0_i32_1 = arith.constant 0 : i32
    return %arg1, %c0_i32, %c0_i32_0 : i32, i32, i32
  }
  func.func @transform_6(%arg0: i32, %arg1: i32) -> (i32, i32, i32) {
    %c0_i32 = arith.constant 0 : i32
    %c0_i32_0 = arith.constant 0 : i32
    %c0_i32_1 = arith.constant 0 : i32
    return %arg1, %c0_i32, %c0_i32_0 : i32, i32, i32
  }
  func.func @transform_7(%arg0: i32, %arg1: i32) -> (i32, i32, i32) {
    %c0_i32 = arith.constant 0 : i32
    %c0_i32_0 = arith.constant 0 : i32
    %c0_i32_1 = arith.constant 0 : i32
    return %arg1, %c0_i32, %c0_i32_0 : i32, i32, i32
  }
  func.func @transform_8(%arg0: i32, %arg1: i32) -> (i32, i32, i32) {
    %c0_i32 = arith.constant 0 : i32
    %c0_i32_0 = arith.constant 0 : i32
    %c0_i32_1 = arith.constant 0 : i32
    return %arg1, %c0_i32, %c0_i32_0 : i32, i32, i32
  }
  func.func @transform_9(%arg0: i32, %arg1: i32) -> (i32, i32, i32) {
    %c0_i32 = arith.constant 0 : i32
    %c0_i32_0 = arith.constant 0 : i32
    %c0_i32_1 = arith.constant 0 : i32
    return %arg1, %c0_i32, %c0_i32_0 : i32, i32, i32
  }
  func.func @transform_10(%arg0: i32, %arg1: i32) -> (i32, i32, i32) {
    %c0_i32 = arith.constant 0 : i32
    %c0_i32_0 = arith.constant 0 : i32
    %c0_i32_1 = arith.constant 0 : i32
    return %arg1, %c0_i32, %c0_i32_0 : i32, i32, i32
  }
  func.func @transform_11(%arg0: i32, %arg1: i32) -> (i32, i32, i32) {
    %c0_i32 = arith.constant 0 : i32
    %c0_i32_0 = arith.constant 0 : i32
    %c0_i32_1 = arith.constant 0 : i32
    return %arg1, %c0_i32, %c0_i32_0 : i32, i32, i32
  }
  func.func @transform_12(%arg0: i32, %arg1: i32) -> (i32, i32, i32) {
    %c0_i32 = arith.constant 0 : i32
    %c0_i32_0 = arith.constant 0 : i32
    %c0_i32_1 = arith.constant 0 : i32
    return %arg1, %c0_i32, %c0_i32_0 : i32, i32, i32
  }
  func.func @transform_13(%arg0: i32, %arg1: i32) -> (i32, i32, i32) {
    %c0_i32 = arith.constant 0 : i32
    %c0_i32_0 = arith.constant 0 : i32
    %c0_i32_1 = arith.constant 0 : i32
    return %arg1, %c0_i32, %c0_i32_0 : i32, i32, i32
  }
  func.func @transform_14(%arg0: i32, %arg1: i32) -> (i32, i32, i32) {
    %c0_i32 = arith.constant 0 : i32
    %c0_i32_0 = arith.constant 0 : i32
    %c0_i32_1 = arith.constant 0 : i32
    return %arg1, %c0_i32, %c0_i32_0 : i32, i32, i32
  }
  func.func @transform_15(%arg0: i32, %arg1: i32) -> (i32, i32, i32) {
    %c0_i32 = arith.constant 0 : i32
    %c0_i32_0 = arith.constant 0 : i32
    %c0_i32_1 = arith.constant 0 : i32
    return %arg1, %c0_i32, %c0_i32_0 : i32, i32, i32
  }
  func.func @transform_16(%arg0: i32, %arg1: i32) -> (i32, i32, i32) {
    %c0_i32 = arith.constant 0 : i32
    %c0_i32_0 = arith.constant 0 : i32
    %c0_i32_1 = arith.constant 0 : i32
    return %arg1, %c0_i32, %c0_i32_0 : i32, i32, i32
  }
  func.func @transform_17(%arg0: i32, %arg1: i32) -> (i32, i32, i32) {
    %c0_i32 = arith.constant 0 : i32
    %c0_i32_0 = arith.constant 0 : i32
    %c0_i32_1 = arith.constant 0 : i32
    return %arg1, %c0_i32, %c0_i32_0 : i32, i32, i32
  }
  func.func @transform_18(%arg0: i32, %arg1: i32) -> (i32, i32, i32) {
    %c0_i32 = arith.constant 0 : i32
    %c0_i32_0 = arith.constant 0 : i32
    %c0_i32_1 = arith.constant 0 : i32
    return %arg1, %c0_i32, %c0_i32_0 : i32, i32, i32
  }
  func.func @transform_19(%arg0: i32, %arg1: i32) -> (i32, i32, i32) {
    %c0_i32 = arith.constant 0 : i32
    %c0_i32_0 = arith.constant 0 : i32
    %c0_i32_1 = arith.constant 0 : i32
    return %arg1, %c0_i32, %c0_i32_0 : i32, i32, i32
  }
  func.func @transform_20(%arg0: i32, %arg1: i32) -> (i32, i32, i32) {
    %c0_i32 = arith.constant 0 : i32
    %c0_i32_0 = arith.constant 0 : i32
    %c0_i32_1 = arith.constant 0 : i32
    return %arg1, %c0_i32, %c0_i32_0 : i32, i32, i32
  }
  func.func @transform_21(%arg0: i32, %arg1: i32) -> (i32, i32, i32) {
    %c0_i32 = arith.constant 0 : i32
    %c0_i32_0 = arith.constant 0 : i32
    %c0_i32_1 = arith.constant 0 : i32
    return %arg1, %c0_i32, %c0_i32_0 : i32, i32, i32
  }
  func.func @transform_22(%arg0: i32, %arg1: i32) -> (i32, i32, i32) {
    %c0_i32 = arith.constant 0 : i32
    %c0_i32_0 = arith.constant 0 : i32
    %c0_i32_1 = arith.constant 0 : i32
    return %arg1, %c0_i32, %c0_i32_0 : i32, i32, i32
  }
  func.func @transform_23(%arg0: i32, %arg1: i32) -> (i32, i32, i32) {
    %c0_i32 = arith.constant 0 : i32
    %c0_i32_0 = arith.constant 0 : i32
    %c0_i32_1 = arith.constant 0 : i32
    return %arg1, %c0_i32, %c0_i32_0 : i32, i32, i32
  }
  func.func @transform_24(%arg0: i32, %arg1: i32) -> (i32, i32, i32) {
    %c0_i32 = arith.constant 0 : i32
    %c0_i32_0 = arith.constant 0 : i32
    %c0_i32_1 = arith.constant 0 : i32
    return %arg1, %c0_i32, %c0_i32_0 : i32, i32, i32
  }
  func.func @transform_25(%arg0: i32, %arg1: i32) -> (i32, i32, i32) {
    %c0_i32 = arith.constant 0 : i32
    %c0_i32_0 = arith.constant 0 : i32
    %c0_i32_1 = arith.constant 0 : i32
    return %arg0, %c0_i32, %c0_i32_0 : i32, i32, i32
  }
  func.func @transform_26(%arg0: i32, %arg1: i32) -> (i32, i32, i32) {
    %c0_i32 = arith.constant 0 : i32
    %c0_i32_0 = arith.constant 0 : i32
    %c0_i32_1 = arith.constant 0 : i32
    return %arg0, %c0_i32, %c0_i32_0 : i32, i32, i32
  }
  func.func @transform_27(%arg0: i32, %arg1: i32) -> (i32, i32, i32, i32) {
    %c0_i32 = arith.constant 0 : i32
    %c0_i32_0 = arith.constant 0 : i32
    %c0_i32_1 = arith.constant 0 : i32
    %c0_i32_2 = arith.constant 0 : i32
    return %arg0, %c0_i32, %c0_i32_0, %c0_i32_1 : i32, i32, i32, i32
  }
}

</mosaic_0001>

<llo_original>
// kernel: tpu_custom_call.1
$region0: #{tpu_custom_call.1}
  #allocation0 [shape = 'u32[]', space=smem, size = 0x4, offset = 0x4, fixed_abs, tag = 'smem constant byte address 0x4 - core index']
  #allocation1 [shape = 'u32[144,128]{1,0:T(1,128)}', space=vmem, size = 0x12000, scoped, tag = 'internal scratch']
  #allocation2 [shape = 'f32[8,32]{1,0:T(8,128)}', space=vmem, size = 0x1000, scoped, tag = 'scratch operand']
  %s0 = inlined_call_operand.hbm [shape: f32[2,8,32], index: 0, kind: input, shape index: {}]
  %s1 = inlined_call_operand.vmem [shape: f32[2,8,3,32], index: 1, kind: input, shape index: {}]
  %s2 = inlined_call_operand.vmem [shape: f32[2,8,4], index: 2, kind: input, shape index: {}]
  %s3 = inlined_call_operand.vmem [shape: f32[32,4], index: 3, kind: input, shape index: {}]
  %s4 = inlined_call_operand.hbm [shape: f32[4,32], index: 4, kind: input, shape index: {}]
  %s5 = inlined_call_operand.vmem [shape: f32[2,1,32], index: 5, kind: input, shape index: {}]
  %s6 = inlined_call_operand.hbm [shape: f32[2,1,32], index: 6, kind: input, shape index: {}]
  %s7 = inlined_call_operand.vmem [shape: f32[2,32,32], index: 7, kind: input, shape index: {}]
  %s8 = inlined_call_operand.vmem [shape: f32[2,1,32], index: 8, kind: input, shape index: {}]
  %s9 = inlined_call_operand.vmem [shape: f32[2,32,32], index: 9, kind: input, shape index: {}]
  %s10 = inlined_call_operand.vmem [shape: f32[2,1,32], index: 10, kind: input, shape index: {}]
  %s11 = inlined_call_operand.vmem [shape: f32[2,32,32], index: 11, kind: input, shape index: {}]
  %s12 = inlined_call_operand.vmem [shape: f32[2,1,32], index: 12, kind: input, shape index: {}]
  %s13 = inlined_call_operand.vmem [shape: f32[2,1,32], index: 13, kind: input, shape index: {}]
  %s14 = inlined_call_operand.vmem [shape: f32[2,1,32], index: 14, kind: input, shape index: {}]
  %s15 = inlined_call_operand.vmem [shape: f32[2,32,96], index: 15, kind: input, shape index: {}]
  %s16 = inlined_call_operand.vmem [shape: f32[2,1,96], index: 16, kind: input, shape index: {}]
  %s17 = inlined_call_operand.vmem [shape: f32[2,32,32], index: 17, kind: input, shape index: {}]
  %s18 = inlined_call_operand.vmem [shape: f32[2,1,32], index: 18, kind: input, shape index: {}]
  %s19 = inlined_call_operand.vmem [shape: f32[2,1,32], index: 19, kind: input, shape index: {}]
  %s20 = inlined_call_operand.vmem [shape: f32[2,1,32], index: 20, kind: input, shape index: {}]
  %s21 = inlined_call_operand.hbm [shape: f32[2,32,64], index: 21, kind: input, shape index: {}]
  %s22 = inlined_call_operand.vmem [shape: f32[2,1,64], index: 22, kind: input, shape index: {}]
  %s23 = inlined_call_operand.vmem [shape: f32[2,64,32], index: 23, kind: input, shape index: {}]
  %s24 = inlined_call_operand.vmem [shape: f32[2,1,32], index: 24, kind: input, shape index: {}]
  %s25 = inlined_call_operand.hbm [shape: f32[2,8,32], index: 25, kind: output, shape index: {0}]
  %s26 = inlined_call_operand.hbm [shape: f32[2,8,8], index: 26, kind: output, shape index: {1}]
  %s27 = inlined_call_operand.vmem [shape: f32[2,8,3,4], index: 27, kind: output, shape index: {2}]
  %28 = xla_tuple %s25, %s26, %s27
  %s29 = sld [smem:[#allocation0]]
  $region169: #{tpu_custom_call.1} parent=0
    _
  %s31 = ssub.s32 1, %s29
  %s32 = scalar_select 0, %s31, %s29
  $region1: #{tpu_custom_call.1} parent=0
    #allocation3 [shape = 'u8[8192]{0}', space=vmem, size = 0x2000, scoped, tag = 'input window, operand 0']
    #allocation4 [shape = 's32[2]{0}', space=sflag, size = 0x8, scoped, tag = 'scoped memory for tpu_custom_call.1']
    #allocation5 [shape = 's32[2]{0}', space=sflag, size = 0x8, scoped, tag = 'scoped memory for tpu_custom_call.1']
    #allocation6 [shape = 'u8[2048]{0}', space=vmem, size = 0x800, scoped, tag = 'input window, operand 4, single buffered']
    #allocation7 [shape = 's32[1]{0}', space=sflag, size = 0x4, scoped, tag = 'scoped memory for tpu_custom_call.1']
    #allocation8 [shape = 'u8[1024]{0}', space=vmem, size = 0x400, scoped, tag = 'input window, operand 6']
    #allocation9 [shape = 'u8[32768]{0}', space=vmem, size = 0x8000, scoped, tag = 'input window, operand 21']
    #allocation10 [shape = 'u8[8192]{0}', space=vmem, size = 0x2000, scoped, tag = 'output window, operand 0']
    #allocation11 [shape = 'u8[8192]{0}', space=vmem, size = 0x2000, scoped, tag = 'output window, operand 1']
    #allocation12 [shape = 's32[2]{0}', space=sflag, size = 0x8, scoped, tag = 'scoped memory for tpu_custom_call.1']
    %33 = vsyncpa [#allocation4], 0
    %s34 = scalar_lea.sflag [#allocation4], 1
    %35 = vsyncpa %s34, 0
    %36 = vsyncpa [#allocation7], 0
    %37 = vsyncpa [#allocation5], 0
    %s38 = scalar_lea.sflag [#allocation5], 1
    %39 = vsyncpa %s38, 0
    %40 = vsyncpa [#allocation12], 0
    %s41 = scalar_lea.sflag [#allocation12], 1
    %42 = vsyncpa %s41, 0
    loop: start=0, step=1, limit=6
    $region2: #{tpu_custom_call.1} parent=1 // loop_pre_header
      _
    $region3: #{tpu_custom_call.1} parent=1 // loop_header
      %s44 = sphi 0, %s48
      %p45 = scmp.ge.s32.totalorder %s44, 6
      %s51 = sphi 0, %s63
      %s52 = sphi 0, %s59
      %s53 = sphi 0, %s51
      %s54 = sphi 0, %s52
      %s55 = sphi 0, %s53
      %s56 = sphi 0, %s54
      %s66 = sphi 0, %s68
      %s69 = sphi 0, %s66
      %s70 = sphi 0, %s69
      %s86 = sphi 0, %s70
      %s92 = sphi 0, %s94
      %s95 = sphi 0, %s92
      %s96 = sphi 0, %s95
      %s112 = sphi 0, %s96
      %s118 = sphi 0, %s120
      %s121 = sphi 0, %s118
      %s122 = sphi 0, %s121
      %s138 = sphi 0, %s122
      %s142 = sphi 0, %s142
      %s144 = sphi 0, %s142
      %s145 = sphi 0, %s144
      %s159 = sphi 0, %s145
      %s163 = sphi 0, %s163
      %s165 = sphi 0, %s163
      %s166 = sphi 0, %s165
      %s180 = sphi 0, %s166
      %s186 = sphi 0, %s188
      %s189 = sphi 0, %s186
      %s190 = sphi 0, %s189
      %s206 = sphi 0, %s190
      %s212 = sphi 0, %s214
      %s215 = sphi 0, %s212
      %s216 = sphi 0, %s215
      %s232 = sphi 0, %s216
      %s238 = sphi 0, %s240
      %s241 = sphi 0, %s238
      %s242 = sphi 0, %s241
      %s258 = sphi 0, %s242
      %s264 = sphi 0, %s266
      %s267 = sphi 0, %s264
      %s268 = sphi 0, %s267
      %s284 = sphi 0, %s268
      %s290 = sphi 0, %s292
      %s293 = sphi 0, %s290
      %s294 = sphi 0, %s293
      %s310 = sphi 0, %s294
      %s316 = sphi 0, %s318
      %s319 = sphi 0, %s316
      %s320 = sphi 0, %s319
      %s336 = sphi 0, %s320
      %s342 = sphi 0, %s344
      %s345 = sphi 0, %s342
      %s346 = sphi 0, %s345
      %s362 = sphi 0, %s346
      %s368 = sphi 0, %s370
      %s371 = sphi 0, %s368
      %s372 = sphi 0, %s371
      %s388 = sphi 0, %s372
      %s394 = sphi 0, %s396
      %s397 = sphi 0, %s394
      %s398 = sphi 0, %s397
      %s414 = sphi 0, %s398
      %s420 = sphi 0, %s422
      %s423 = sphi 0, %s420
      %s424 = sphi 0, %s423
      %s440 = sphi 0, %s424
      %s446 = sphi 0, %s448
      %s449 = sphi 0, %s446
      %s450 = sphi 0, %s449
      %s466 = sphi 0, %s450
      %s472 = sphi 0, %s474
      %s475 = sphi 0, %s472
      %s476 = sphi 0, %s475
      %s492 = sphi 0, %s476
      %s498 = sphi 0, %s500
      %s501 = sphi 0, %s498
      %s502 = sphi 0, %s501
      %s518 = sphi 0, %s502
      %s524 = sphi 0, %s526
      %s527 = sphi 0, %s524
      %s528 = sphi 0, %s527
      %s544 = sphi 0, %s528
      %s550 = sphi 0, %s552
      %s553 = sphi 0, %s550
      %s554 = sphi 0, %s553
      %s570 = sphi 0, %s554
      %s576 = sphi 0, %s578
      %s579 = sphi 0, %s576
      %s580 = sphi 0, %s579
      %s596 = sphi 0, %s580
      %s602 = sphi 0, %s604
      %s605 = sphi 0, %s602
      %s606 = sphi 0, %s605
      %s622 = sphi 0, %s606
      %s628 = sphi 0, %s630
      %s631 = sphi 0, %s628
      %s632 = sphi 0, %s631
      %s648 = sphi 0, %s632
      %s654 = sphi 0, %s656
      %s657 = sphi 0, %s654
      %s658 = sphi 0, %s657
      %s674 = sphi 0, %s658
      %s680 = sphi 0, %s682
      %s683 = sphi 0, %s680
      %s684 = sphi 0, %s683
      %s700 = sphi 0, %s684
      %s706 = sphi 0, %s708
      %s709 = sphi 0, %s706
      %s710 = sphi 0, %s709
      %s726 = sphi 0, %s710
      %s732 = sphi 0, %s734
      %s735 = sphi 0, %s732
      %s736 = sphi 0, %s735
      %s752 = sphi 0, %s736
      %s758 = sphi 0, %s760
      %s761 = sphi 0, %s758
      %s762 = sphi 0, %s761
      %s778 = sphi 0, %s762
    $region4: #{tpu_custom_call.1} parent=1 // loop_header_branch
      %47 = sbr.rel (%p45) target = $region8
    $region5: #{tpu_custom_call.1} parent=1 // loop_body
      %s49 = ssub.s32 %s44, 1
      %s50 = ssub.s32 %s44, 2
      %s57 = sadd.s32 1, %s52
      %p58 = scmp.ge.s32.totalorder %s57, 2
      %s59 = scalar_select %p58, 0, %s57
      %s60 = sadd.s32 1, %s51
      %s61 = scalar_select %p58, %s60, %s51
      %p62 = scmp.ge.s32.totalorder %s61, 2
      %s63 = scalar_select %p62, 0, %s61
      %s64 = ssub.s32 %s51, %s63
      %p65 = scmp.eq.s32.totalorder %s64, 0
      %s67 = sadd.s32 %s66, 1
      %s68 = scalar_select %p65, %s66, %s67
      %p71 = pneg %p65
      %p72 = scmp.eq.s32.totalorder %s44, 3
      %p73 = por %p71, %p72
      %p74 = scmp.ne.s32.totalorder %s66, %s69
      %p75 = scmp.eq.s32.totalorder %s44, 0
      %p76 = por %p74, %p75
      %p77 = scmp.ne.s32.totalorder %s66, %s69
      %p78 = scmp.eq.s32.totalorder %s49, 3
      %p79 = por %p77, %p78
      %p80 = scmp.ne.s32.totalorder %s69, %s70
      %p81 = scmp.eq.s32.totalorder %s49, 0
      %p82 = por %p80, %p81
      %p83 = scmp.ne.s32.totalorder %s69, %s70
      %p84 = scmp.eq.s32.totalorder %s50, 3
      %p85 = por %p83, %p84
      %p87 = scmp.ne.s32.totalorder %s70, %s86
      %p88 = scmp.eq.s32.totalorder %s50, 0
      %p89 = por %p87, %p88
      %s90 = ssub.s32 %s51, %s63
      %p91 = scmp.eq.s32.totalorder %s90, 0
      %s93 = sadd.s32 %s92, 1
      %s94 = scalar_select %p91, %s92, %s93
      %p97 = pneg %p91
      %p98 = scmp.eq.s32.totalorder %s44, 3
      %p99 = por %p97, %p98
      %p100 = scmp.ne.s32.totalorder %s92, %s95
      %p101 = scmp.eq.s32.totalorder %s44, 0
      %p102 = por %p100, %p101
      %p103 = scmp.ne.s32.totalorder %s92, %s95
      %p104 = scmp.eq.s32.totalorder %s49, 3
      %p105 = por %p103, %p104
      %p106 = scmp.ne.s32.totalorder %s95, %s96
      %p107 = scmp.eq.s32.totalorder %s49, 0
      %p108 = por %p106, %p107
      %p109 = scmp.ne.s32.totalorder %s95, %s96
      %p110 = scmp.eq.s32.totalorder %s50, 3
      %p111 = por %p109, %p110
      %p113 = scmp.ne.s32.totalorder %s96, %s112
      %p114 = scmp.eq.s32.totalorder %s50, 0
      %p115 = por %p113, %p114
      %s116 = ssub.s32 %s51, %s63
      %p117 = scmp.eq.s32.totalorder %s116, 0
      %s119 = sadd.s32 %s118, 1
      %s120 = scalar_select %p117, %s118, %s119
      %p123 = pneg %p117
      %p124 = scmp.eq.s32.totalorder %s44, 3
      %p125 = por %p123, %p124
      %p126 = scmp.ne.s32.totalorder %s118, %s121
      %p127 = scmp.eq.s32.totalorder %s44, 0
      %p128 = por %p126, %p127
      %p129 = scmp.ne.s32.totalorder %s118, %s121
      %p130 = scmp.eq.s32.totalorder %s49, 3
      %p131 = por %p129, %p130
      %p132 = scmp.ne.s32.totalorder %s121, %s122
      %p133 = scmp.eq.s32.totalorder %s49, 0
      %p134 = por %p132, %p133
      %p135 = scmp.ne.s32.totalorder %s121, %s122
      %p136 = scmp.eq.s32.totalorder %s50, 3
      %p137 = por %p135, %p136
      %p139 = scmp.ne.s32.totalorder %s122, %s138
      %p140 = scmp.eq.s32.totalorder %s50, 0
      %p141 = por %p139, %p140
      %s143 = sadd.s32 %s142, 1
      %p146 = scmp.eq.s32.totalorder %s44, 3
      %p147 = scmp.ne.s32.totalorder %s142, %s144
      %p148 = scmp.eq.s32.totalorder %s44, 0
      %p149 = por %p147, %p148
      %p150 = scmp.ne.s32.totalorder %s142, %s144
      %p151 = scmp.eq.s32.totalorder %s49, 3
      %p152 = por %p150, %p151
      %p153 = scmp.ne.s32.totalorder %s144, %s145
      %p154 = scmp.eq.s32.totalorder %s49, 0
      %p155 = por %p153, %p154
      %p156 = scmp.ne.s32.totalorder %s144, %s145
      %p157 = scmp.eq.s32.totalorder %s50, 3
      %p158 = por %p156, %p157
      %p160 = scmp.ne.s32.totalorder %s145, %s159
      %p161 = scmp.eq.s32.totalorder %s50, 0
      %p162 = por %p160, %p161
      %s164 = sadd.s32 %s163, 1
      %p167 = scmp.eq.s32.totalorder %s44, 3
      %p168 = scmp.ne.s32.totalorder %s163, %s165
      %p169 = scmp.eq.s32.totalorder %s44, 0
      %p170 = por %p168, %p169
      %p171 = scmp.ne.s32.totalorder %s163, %s165
      %p172 = scmp.eq.s32.totalorder %s49, 3
      %p173 = por %p171, %p172
      %p174 = scmp.ne.s32.totalorder %s165, %s166
      %p175 = scmp.eq.s32.totalorder %s49, 0
      %p176 = por %p174, %p175
      %p177 = scmp.ne.s32.totalorder %s165, %s166
      %p178 = scmp.eq.s32.totalorder %s50, 3
      %p179 = por %p177, %p178
      %p181 = scmp.ne.s32.totalorder %s166, %s180
      %p182 = scmp.eq.s32.totalorder %s50, 0
      %p183 = por %p181, %p182
      %s184 = ssub.s32 %s52, %s59
      %p185 = scmp.eq.s32.totalorder %s184, 0
      %s187 = sadd.s32 %s186, 1
      %s188 = scalar_select %p185, %s186, %s187
      %p191 = pneg %p185
      %p192 = scmp.eq.s32.totalorder %s44, 3
      %p193 = por %p191, %p192
      %p194 = scmp.ne.s32.totalorder %s186, %s189
      %p195 = scmp.eq.s32.totalorder %s44, 0
      %p196 = por %p194, %p195
      %p197 = scmp.ne.s32.totalorder %s186, %s189
      %p198 = scmp.eq.s32.totalorder %s49, 3
      %p199 = por %p197, %p198
      %p200 = scmp.ne.s32.totalorder %s189, %s190
      %p201 = scmp.eq.s32.totalorder %s49, 0
      %p202 = por %p200, %p201
      %p203 = scmp.ne.s32.totalorder %s189, %s190
      %p204 = scmp.eq.s32.totalorder %s50, 3
      %p205 = por %p203, %p204
      %p207 = scmp.ne.s32.totalorder %s190, %s206
      %p208 = scmp.eq.s32.totalorder %s50, 0
      %p209 = por %p207, %p208
      %s210 = ssub.s32 %s52, %s59
      %p211 = scmp.eq.s32.totalorder %s210, 0
      %s213 = sadd.s32 %s212, 1
      %s214 = scalar_select %p211, %s212, %s213
      %p217 = pneg %p211
      %p218 = scmp.eq.s32.totalorder %s44, 3
      %p219 = por %p217, %p218
      %p220 = scmp.ne.s32.totalorder %s212, %s215
      %p221 = scmp.eq.s32.totalorder %s44, 0
      %p222 = por %p220, %p221
      %p223 = scmp.ne.s32.totalorder %s212, %s215
      %p224 = scmp.eq.s32.totalorder %s49, 3
      %p225 = por %p223, %p224
      %p226 = scmp.ne.s32.totalorder %s215, %s216
      %p227 = scmp.eq.s32.totalorder %s49, 0
      %p228 = por %p226, %p227
      %p229 = scmp.ne.s32.totalorder %s215, %s216
      %p230 = scmp.eq.s32.totalorder %s50, 3
      %p231 = por %p229, %p230
      %p233 = scmp.ne.s32.totalorder %s216, %s232
      %p234 = scmp.eq.s32.totalorder %s50, 0
      %p235 = por %p233, %p234
      %s236 = ssub.s32 %s52, %s59
      %p237 = scmp.eq.s32.totalorder %s236, 0
      %s239 = sadd.s32 %s238, 1
      %s240 = scalar_select %p237, %s238, %s239
      %p243 = pneg %p237
      %p244 = scmp.eq.s32.totalorder %s44, 3
      %p245 = por %p243, %p244
      %p246 = scmp.ne.s32.totalorder %s238, %s241
      %p247 = scmp.eq.s32.totalorder %s44, 0
      %p248 = por %p246, %p247
      %p249 = scmp.ne.s32.totalorder %s238, %s241
      %p250 = scmp.eq.s32.totalorder %s49, 3
      %p251 = por %p249, %p250
      %p252 = scmp.ne.s32.totalorder %s241, %s242
      %p253 = scmp.eq.s32.totalorder %s49, 0
      %p254 = por %p252, %p253
      %p255 = scmp.ne.s32.totalorder %s241, %s242
      %p256 = scmp.eq.s32.totalorder %s50, 3
      %p257 = por %p255, %p256
      %p259 = scmp.ne.s32.totalorder %s242, %s258
      %p260 = scmp.eq.s32.totalorder %s50, 0
      %p261 = por %p259, %p260
      %s262 = ssub.s32 %s52, %s59
      %p263 = scmp.eq.s32.totalorder %s262, 0
      %s265 = sadd.s32 %s264, 1
      %s266 = scalar_select %p263, %s264, %s265
      %p269 = pneg %p263
      %p270 = scmp.eq.s32.totalorder %s44, 3
      %p271 = por %p269, %p270
      %p272 = scmp.ne.s32.totalorder %s264, %s267
      %p273 = scmp.eq.s32.totalorder %s44, 0
      %p274 = por %p272, %p273
      %p275 = scmp.ne.s32.totalorder %s264, %s267
      %p276 = scmp.eq.s32.totalorder %s49, 3
      %p277 = por %p275, %p276
      %p278 = scmp.ne.s32.totalorder %s267, %s268
      %p279 = scmp.eq.s32.totalorder %s49, 0
      %p280 = por %p278, %p279
      %p281 = scmp.ne.s32.totalorder %s267, %s268
      %p282 = scmp.eq.s32.totalorder %s50, 3
      %p283 = por %p281, %p282
      %p285 = scmp.ne.s32.totalorder %s268, %s284
      %p286 = scmp.eq.s32.totalorder %s50, 0
      %p287 = por %p285, %p286
      %s288 = ssub.s32 %s52, %s59
      %p289 = scmp.eq.s32.totalorder %s288, 0
      %s291 = sadd.s32 %s290, 1
      %s292 = scalar_select %p289, %s290, %s291
      %p295 = pneg %p289
      %p296 = scmp.eq.s32.totalorder %s44, 3
      %p297 = por %p295, %p296
      %p298 = scmp.ne.s32.totalorder %s290, %s293
      %p299 = scmp.eq.s32.totalorder %s44, 0
      %p300 = por %p298, %p299
      %p301 = scmp.ne.s32.totalorder %s290, %s293
      %p302 = scmp.eq.s32.totalorder %s49, 3
      %p303 = por %p301, %p302
      %p304 = scmp.ne.s32.totalorder %s293, %s294
      %p305 = scmp.eq.s32.totalorder %s49, 0
      %p306 = por %p304, %p305
      %p307 = scmp.ne.s32.totalorder %s293, %s294
      %p308 = scmp.eq.s32.totalorder %s50, 3
      %p309 = por %p307, %p308
      %p311 = scmp.ne.s32.totalorder %s294, %s310
      %p312 = scmp.eq.s32.totalorder %s50, 0
      %p313 = por %p311, %p312
      %s314 = ssub.s32 %s52, %s59
      %p315 = scmp.eq.s32.totalorder %s314, 0
      %s317 = sadd.s32 %s316, 1
      %s318 = scalar_select %p315, %s316, %s317
      %p321 = pneg %p315
      %p322 = scmp.eq.s32.totalorder %s44, 3
      %p323 = por %p321, %p322
      %p324 = scmp.ne.s32.totalorder %s316, %s319
      %p325 = scmp.eq.s32.totalorder %s44, 0
      %p326 = por %p324, %p325
      %p327 = scmp.ne.s32.totalorder %s316, %s319
      %p328 = scmp.eq.s32.totalorder %s49, 3
      %p329 = por %p327, %p328
      %p330 = scmp.ne.s32.totalorder %s319, %s320
      %p331 = scmp.eq.s32.totalorder %s49, 0
      %p332 = por %p330, %p331
      %p333 = scmp.ne.s32.totalorder %s319, %s320
      %p334 = scmp.eq.s32.totalorder %s50, 3
      %p335 = por %p333, %p334
      %p337 = scmp.ne.s32.totalorder %s320, %s336
      %p338 = scmp.eq.s32.totalorder %s50, 0
      %p339 = por %p337, %p338
      %s340 = ssub.s32 %s52, %s59
      %p341 = scmp.eq.s32.totalorder %s340, 0
      %s343 = sadd.s32 %s342, 1
      %s344 = scalar_select %p341, %s342, %s343
      %p347 = pneg %p341
      %p348 = scmp.eq.s32.totalorder %s44, 3
      %p349 = por %p347, %p348
      %p350 = scmp.ne.s32.totalorder %s342, %s345
      %p351 = scmp.eq.s32.totalorder %s44, 0
      %p352 = por %p350, %p351
      %p353 = scmp.ne.s32.totalorder %s342, %s345
      %p354 = scmp.eq.s32.totalorder %s49, 3
      %p355 = por %p353, %p354
      %p356 = scmp.ne.s32.totalorder %s345, %s346
      %p357 = scmp.eq.s32.totalorder %s49, 0
      %p358 = por %p356, %p357
      %p359 = scmp.ne.s32.totalorder %s345, %s346
      %p360 = scmp.eq.s32.totalorder %s50, 3
      %p361 = por %p359, %p360
      %p363 = scmp.ne.s32.totalorder %s346, %s362
      %p364 = scmp.eq.s32.totalorder %s50, 0
      %p365 = por %p363, %p364
      %s366 = ssub.s32 %s52, %s59
      %p367 = scmp.eq.s32.totalorder %s366, 0
      %s369 = sadd.s32 %s368, 1
      %s370 = scalar_select %p367, %s368, %s369
      %p373 = pneg %p367
      %p374 = scmp.eq.s32.totalorder %s44, 3
      %p375 = por %p373, %p374
      %p376 = scmp.ne.s32.totalorder %s368, %s371
      %p377 = scmp.eq.s32.totalorder %s44, 0
      %p378 = por %p376, %p377
      %p379 = scmp.ne.s32.totalorder %s368, %s371
      %p380 = scmp.eq.s32.totalorder %s49, 3
      %p381 = por %p379, %p380
      %p382 = scmp.ne.s32.totalorder %s371, %s372
      %p383 = scmp.eq.s32.totalorder %s49, 0
      %p384 = por %p382, %p383
      %p385 = scmp.ne.s32.totalorder %s371, %s372
      %p386 = scmp.eq.s32.totalorder %s50, 3
      %p387 = por %p385, %p386
      %p389 = scmp.ne.s32.totalorder %s372, %s388
      %p390 = scmp.eq.s32.totalorder %s50, 0
      %p391 = por %p389, %p390
      %s392 = ssub.s32 %s52, %s59
      %p393 = scmp.eq.s32.totalorder %s392, 0
      %s395 = sadd.s32 %s394, 1
      %s396 = scalar_select %p393, %s394, %s395
      %p399 = pneg %p393
      %p400 = scmp.eq.s32.totalorder %s44, 3
      %p401 = por %p399, %p400
      %p402 = scmp.ne.s32.totalorder %s394, %s397
      %p403 = scmp.eq.s32.totalorder %s44, 0
      %p404 = por %p402, %p403
      %p405 = scmp.ne.s32.totalorder %s394, %s397
      %p406 = scmp.eq.s32.totalorder %s49, 3
      %p407 = por %p405, %p406
      %p408 = scmp.ne.s32.totalorder %s397, %s398
      %p409 = scmp.eq.s32.totalorder %s49, 0
      %p410 = por %p408, %p409
      %p411 = scmp.ne.s32.totalorder %s397, %s398
      %p412 = scmp.eq.s32.totalorder %s50, 3
      %p413 = por %p411, %p412
      %p415 = scmp.ne.s32.totalorder %s398, %s414
      %p416 = scmp.eq.s32.totalorder %s50, 0
      %p417 = por %p415, %p416
      %s418 = ssub.s32 %s52, %s59
      %p419 = scmp.eq.s32.totalorder %s418, 0
      %s421 = sadd.s32 %s420, 1
      %s422 = scalar_select %p419, %s420, %s421
      %p425 = pneg %p419
      %p426 = scmp.eq.s32.totalorder %s44, 3
      %p427 = por %p425, %p426
      %p428 = scmp.ne.s32.totalorder %s420, %s423
      %p429 = scmp.eq.s32.totalorder %s44, 0
      %p430 = por %p428, %p429
      %p431 = scmp.ne.s32.totalorder %s420, %s423
      %p432 = scmp.eq.s32.totalorder %s49, 3
      %p433 = por %p431, %p432
      %p434 = scmp.ne.s32.totalorder %s423, %s424
      %p435 = scmp.eq.s32.totalorder %s49, 0
      %p436 = por %p434, %p435
      %p437 = scmp.ne.s32.totalorder %s423, %s424
      %p438 = scmp.eq.s32.totalorder %s50, 3
      %p439 = por %p437, %p438
      %p441 = scmp.ne.s32.totalorder %s424, %s440
      %p442 = scmp.eq.s32.totalorder %s50, 0
      %p443 = por %p441, %p442
      %s444 = ssub.s32 %s52, %s59
      %p445 = scmp.eq.s32.totalorder %s444, 0
      %s447 = sadd.s32 %s446, 1
      %s448 = scalar_select %p445, %s446, %s447
      %p451 = pneg %p445
      %p452 = scmp.eq.s32.totalorder %s44, 3
      %p453 = por %p451, %p452
      %p454 = scmp.ne.s32.totalorder %s446, %s449
      %p455 = scmp.eq.s32.totalorder %s44, 0
      %p456 = por %p454, %p455
      %p457 = scmp.ne.s32.totalorder %s446, %s449
      %p458 = scmp.eq.s32.totalorder %s49, 3
      %p459 = por %p457, %p458
      %p460 = scmp.ne.s32.totalorder %s449, %s450
      %p461 = scmp.eq.s32.totalorder %s49, 0
      %p462 = por %p460, %p461
      %p463 = scmp.ne.s32.totalorder %s449, %s450
      %p464 = scmp.eq.s32.totalorder %s50, 3
      %p465 = por %p463, %p464
      %p467 = scmp.ne.s32.totalorder %s450, %s466
      %p468 = scmp.eq.s32.totalorder %s50, 0
      %p469 = por %p467, %p468
      %s470 = ssub.s32 %s52, %s59
      %p471 = scmp.eq.s32.totalorder %s470, 0
      %s473 = sadd.s32 %s472, 1
      %s474 = scalar_select %p471, %s472, %s473
      %p477 = pneg %p471
      %p478 = scmp.eq.s32.totalorder %s44, 3
      %p479 = por %p477, %p478
      %p480 = scmp.ne.s32.totalorder %s472, %s475
      %p481 = scmp.eq.s32.totalorder %s44, 0
      %p482 = por %p480, %p481
      %p483 = scmp.ne.s32.totalorder %s472, %s475
      %p484 = scmp.eq.s32.totalorder %s49, 3
      %p485 = por %p483, %p484
      %p486 = scmp.ne.s32.totalorder %s475, %s476
      %p487 = scmp.eq.s32.totalorder %s49, 0
      %p488 = por %p486, %p487
      %p489 = scmp.ne.s32.totalorder %s475, %s476
      %p490 = scmp.eq.s32.totalorder %s50, 3
      %p491 = por %p489, %p490
      %p493 = scmp.ne.s32.totalorder %s476, %s492
      %p494 = scmp.eq.s32.totalorder %s50, 0
      %p495 = por %p493, %p494
      %s496 = ssub.s32 %s52, %s59
      %p497 = scmp.eq.s32.totalorder %s496, 0
      %s499 = sadd.s32 %s498, 1
      %s500 = scalar_select %p497, %s498, %s499
      %p503 = pneg %p497
      %p504 = scmp.eq.s32.totalorder %s44, 3
      %p505 = por %p503, %p504
      %p506 = scmp.ne.s32.totalorder %s498, %s501
      %p507 = scmp.eq.s32.totalorder %s44, 0
      %p508 = por %p506, %p507
      %p509 = scmp.ne.s32.totalorder %s498, %s501
      %p510 = scmp.eq.s32.totalorder %s49, 3
      %p511 = por %p509, %p510
      %p512 = scmp.ne.s32.totalorder %s501, %s502
      %p513 = scmp.eq.s32.totalorder %s49, 0
      %p514 = por %p512, %p513
      %p515 = scmp.ne.s32.totalorder %s501, %s502
      %p516 = scmp.eq.s32.totalorder %s50, 3
      %p517 = por %p515, %p516
      %p519 = scmp.ne.s32.totalorder %s502, %s518
      %p520 = scmp.eq.s32.totalorder %s50, 0
      %p521 = por %p519, %p520
      %s522 = ssub.s32 %s52, %s59
      %p523 = scmp.eq.s32.totalorder %s522, 0
      %s525 = sadd.s32 %s524, 1
      %s526 = scalar_select %p523, %s524, %s525
      %p529 = pneg %p523
      %p530 = scmp.eq.s32.totalorder %s44, 3
      %p531 = por %p529, %p530
      %p532 = scmp.ne.s32.totalorder %s524, %s527
      %p533 = scmp.eq.s32.totalorder %s44, 0
      %p534 = por %p532, %p533
      %p535 = scmp.ne.s32.totalorder %s524, %s527
      %p536 = scmp.eq.s32.totalorder %s49, 3
      %p537 = por %p535, %p536
      %p538 = scmp.ne.s32.totalorder %s527, %s528
      %p539 = scmp.eq.s32.totalorder %s49, 0
      %p540 = por %p538, %p539
      %p541 = scmp.ne.s32.totalorder %s527, %s528
      %p542 = scmp.eq.s32.totalorder %s50, 3
      %p543 = por %p541, %p542
      %p545 = scmp.ne.s32.totalorder %s528, %s544
      %p546 = scmp.eq.s32.totalorder %s50, 0
      %p547 = por %p545, %p546
      %s548 = ssub.s32 %s52, %s59
      %p549 = scmp.eq.s32.totalorder %s548, 0
      %s551 = sadd.s32 %s550, 1
      %s552 = scalar_select %p549, %s550, %s551
      %p555 = pneg %p549
      %p556 = scmp.eq.s32.totalorder %s44, 3
      %p557 = por %p555, %p556
      %p558 = scmp.ne.s32.totalorder %s550, %s553
      %p559 = scmp.eq.s32.totalorder %s44, 0
      %p560 = por %p558, %p559
      %p561 = scmp.ne.s32.totalorder %s550, %s553
      %p562 = scmp.eq.s32.totalorder %s49, 3
      %p563 = por %p561, %p562
      %p564 = scmp.ne.s32.totalorder %s553, %s554
      %p565 = scmp.eq.s32.totalorder %s49, 0
      %p566 = por %p564, %p565
      %p567 = scmp.ne.s32.totalorder %s553, %s554
      %p568 = scmp.eq.s32.totalorder %s50, 3
      %p569 = por %p567, %p568
      %p571 = scmp.ne.s32.totalorder %s554, %s570
      %p572 = scmp.eq.s32.totalorder %s50, 0
      %p573 = por %p571, %p572
      %s574 = ssub.s32 %s52, %s59
      %p575 = scmp.eq.s32.totalorder %s574, 0
      %s577 = sadd.s32 %s576, 1
      %s578 = scalar_select %p575, %s576, %s577
      %p581 = pneg %p575
      %p582 = scmp.eq.s32.totalorder %s44, 3
      %p583 = por %p581, %p582
      %p584 = scmp.ne.s32.totalorder %s576, %s579
      %p585 = scmp.eq.s32.totalorder %s44, 0
      %p586 = por %p584, %p585
      %p587 = scmp.ne.s32.totalorder %s576, %s579
      %p588 = scmp.eq.s32.totalorder %s49, 3
      %p589 = por %p587, %p588
      %p590 = scmp.ne.s32.totalorder %s579, %s580
      %p591 = scmp.eq.s32.totalorder %s49, 0
      %p592 = por %p590, %p591
      %p593 = scmp.ne.s32.totalorder %s579, %s580
      %p594 = scmp.eq.s32.totalorder %s50, 3
      %p595 = por %p593, %p594
      %p597 = scmp.ne.s32.totalorder %s580, %s596
      %p598 = scmp.eq.s32.totalorder %s50, 0
      %p599 = por %p597, %p598
      %s600 = ssub.s32 %s52, %s59
      %p601 = scmp.eq.s32.totalorder %s600, 0
      %s603 = sadd.s32 %s602, 1
      %s604 = scalar_select %p601, %s602, %s603
      %p607 = pneg %p601
      %p608 = scmp.eq.s32.totalorder %s44, 3
      %p609 = por %p607, %p608
      %p610 = scmp.ne.s32.totalorder %s602, %s605
      %p611 = scmp.eq.s32.totalorder %s44, 0
      %p612 = por %p610, %p611
      %p613 = scmp.ne.s32.totalorder %s602, %s605
      %p614 = scmp.eq.s32.totalorder %s49, 3
      %p615 = por %p613, %p614
      %p616 = scmp.ne.s32.totalorder %s605, %s606
      %p617 = scmp.eq.s32.totalorder %s49, 0
      %p618 = por %p616, %p617
      %p619 = scmp.ne.s32.totalorder %s605, %s606
      %p620 = scmp.eq.s32.totalorder %s50, 3
      %p621 = por %p619, %p620
      %p623 = scmp.ne.s32.totalorder %s606, %s622
      %p624 = scmp.eq.s32.totalorder %s50, 0
      %p625 = por %p623, %p624
      %s626 = ssub.s32 %s52, %s59
      %p627 = scmp.eq.s32.totalorder %s626, 0
      %s629 = sadd.s32 %s628, 1
      %s630 = scalar_select %p627, %s628, %s629
      %p633 = pneg %p627
      %p634 = scmp.eq.s32.totalorder %s44, 3
      %p635 = por %p633, %p634
      %p636 = scmp.ne.s32.totalorder %s628, %s631
      %p637 = scmp.eq.s32.totalorder %s44, 0
      %p638 = por %p636, %p637
      %p639 = scmp.ne.s32.totalorder %s628, %s631
      %p640 = scmp.eq.s32.totalorder %s49, 3
      %p641 = por %p639, %p640
      %p642 = scmp.ne.s32.totalorder %s631, %s632
      %p643 = scmp.eq.s32.totalorder %s49, 0
      %p644 = por %p642, %p643
      %p645 = scmp.ne.s32.totalorder %s631, %s632
      %p646 = scmp.eq.s32.totalorder %s50, 3
      %p647 = por %p645, %p646
      %p649 = scmp.ne.s32.totalorder %s632, %s648
      %p650 = scmp.eq.s32.totalorder %s50, 0
      %p651 = por %p649, %p650
      %s652 = ssub.s32 %s52, %s59
      %p653 = scmp.eq.s32.totalorder %s652, 0
      %s655 = sadd.s32 %s654, 1
      %s656 = scalar_select %p653, %s654, %s655
      %p659 = pneg %p653
      %p660 = scmp.eq.s32.totalorder %s44, 3
      %p661 = por %p659, %p660
      %p662 = scmp.ne.s32.totalorder %s654, %s657
      %p663 = scmp.eq.s32.totalorder %s44, 0
      %p664 = por %p662, %p663
      %p665 = scmp.ne.s32.totalorder %s654, %s657
      %p666 = scmp.eq.s32.totalorder %s49, 3
      %p667 = por %p665, %p666
      %p668 = scmp.ne.s32.totalorder %s657, %s658
      %p669 = scmp.eq.s32.totalorder %s49, 0
      %p670 = por %p668, %p669
      %p671 = scmp.ne.s32.totalorder %s657, %s658
      %p672 = scmp.eq.s32.totalorder %s50, 3
      %p673 = por %p671, %p672
      %p675 = scmp.ne.s32.totalorder %s658, %s674
      %p676 = scmp.eq.s32.totalorder %s50, 0
      %p677 = por %p675, %p676
      %s678 = ssub.s32 %s52, %s59
      %p679 = scmp.eq.s32.totalorder %s678, 0
      %s681 = sadd.s32 %s680, 1
      %s682 = scalar_select %p679, %s680, %s681
      %p685 = pneg %p679
      %p686 = scmp.eq.s32.totalorder %s44, 3
      %p687 = por %p685, %p686
      %p688 = scmp.ne.s32.totalorder %s680, %s683
      %p689 = scmp.eq.s32.totalorder %s44, 0
      %p690 = por %p688, %p689
      %p691 = scmp.ne.s32.totalorder %s680, %s683
      %p692 = scmp.eq.s32.totalorder %s49, 3
      %p693 = por %p691, %p692
      %p694 = scmp.ne.s32.totalorder %s683, %s684
      %p695 = scmp.eq.s32.totalorder %s49, 0
      %p696 = por %p694, %p695
      %p697 = scmp.ne.s32.totalorder %s683, %s684
      %p698 = scmp.eq.s32.totalorder %s50, 3
      %p699 = por %p697, %p698
      %p701 = scmp.ne.s32.totalorder %s684, %s700
      %p702 = scmp.eq.s32.totalorder %s50, 0
      %p703 = por %p701, %p702
      %s704 = ssub.s32 %s51, %s63
      %p705 = scmp.eq.s32.totalorder %s704, 0
      %s707 = sadd.s32 %s706, 1
      %s708 = scalar_select %p705, %s706, %s707
      %p711 = pneg %p705
      %p712 = scmp.eq.s32.totalorder %s44, 3
      %p713 = por %p711, %p712
      %p714 = scmp.ne.s32.totalorder %s706, %s709
      %p715 = scmp.eq.s32.totalorder %s44, 0
      %p716 = por %p714, %p715
      %p717 = scmp.ne.s32.totalorder %s706, %s709
      %p718 = scmp.eq.s32.totalorder %s49, 3
      %p719 = por %p717, %p718
      %p720 = scmp.ne.s32.totalorder %s709, %s710
      %p721 = scmp.eq.s32.totalorder %s49, 0
      %p722 = por %p720, %p721
      %p723 = scmp.ne.s32.totalorder %s709, %s710
      %p724 = scmp.eq.s32.totalorder %s50, 3
      %p725 = por %p723, %p724
      %p727 = scmp.ne.s32.totalorder %s710, %s726
      %p728 = scmp.eq.s32.totalorder %s50, 0
      %p729 = por %p727, %p728
      %s730 = ssub.s32 %s51, %s63
      %p731 = scmp.eq.s32.totalorder %s730, 0
      %s733 = sadd.s32 %s732, 1
      %s734 = scalar_select %p731, %s732, %s733
      %p737 = pneg %p731
      %p738 = scmp.eq.s32.totalorder %s44, 3
      %p739 = por %p737, %p738
      %p740 = scmp.ne.s32.totalorder %s732, %s735
      %p741 = scmp.eq.s32.totalorder %s44, 0
      %p742 = por %p740, %p741
      %p743 = scmp.ne.s32.totalorder %s732, %s735
      %p744 = scmp.eq.s32.totalorder %s49, 3
      %p745 = por %p743, %p744
      %p746 = scmp.ne.s32.totalorder %s735, %s736
      %p747 = scmp.eq.s32.totalorder %s49, 0
      %p748 = por %p746, %p747
      %p749 = scmp.ne.s32.totalorder %s735, %s736
      %p750 = scmp.eq.s32.totalorder %s50, 3
      %p751 = por %p749, %p750
      %p753 = scmp.ne.s32.totalorder %s736, %s752
      %p754 = scmp.eq.s32.totalorder %s50, 0
      %p755 = por %p753, %p754
      %s756 = ssub.s32 %s51, %s63
      %p757 = scmp.eq.s32.totalorder %s756, 0
      %s759 = sadd.s32 %s758, 1
      %s760 = scalar_select %p757, %s758, %s759
      %p763 = pneg %p757
      %p764 = scmp.eq.s32.totalorder %s44, 3
      %p765 = por %p763, %p764
      %p766 = scmp.ne.s32.totalorder %s758, %s761
      %p767 = scmp.eq.s32.totalorder %s44, 0
      %p768 = por %p766, %p767
      %p769 = scmp.ne.s32.totalorder %s758, %s761
      %p770 = scmp.eq.s32.totalorder %s49, 3
      %p771 = por %p769, %p770
      %p772 = scmp.ne.s32.totalorder %s761, %s762
      %p773 = scmp.eq.s32.totalorder %s49, 0
      %p774 = por %p772, %p773
      %p775 = scmp.ne.s32.totalorder %s761, %s762
      %p776 = scmp.eq.s32.totalorder %s50, 3
      %p777 = por %p775, %p776
      %p779 = scmp.ne.s32.totalorder %s762, %s778
      %p780 = scmp.eq.s32.totalorder %s50, 0
      %p781 = por %p779, %p780
      %p782 = scmp.le.s32.totalorder 1, %s44
      %p783 = scmp.lt.s32.totalorder %s44, 5
      %p784 = pnand %p782, %p783
      %p785 = pneg %p784
      // Predicated region
      $region9: #{tpu_custom_call.1} parent=5 // pred_check
        _
      $region10: #{tpu_custom_call.1} parent=5 // pred_check_branch
        %787 = sbr.rel (%p784) target = $region12
      $region11: #{tpu_custom_call.1} parent=5 // pred_region
        %s788 = ssub.s32 %s44, 1
        // Predicated region
        $region13: #{tpu_custom_call.1} parent=11 // pred_check
          %p789 = pneg %p155
        $region14: #{tpu_custom_call.1} parent=11 // pred_check_branch
          %791 = sbr.rel (%p789) target = $region16
        $region15: #{tpu_custom_call.1} parent=11 // pred_region
          _
        $region16: #{tpu_custom_call.1} parent=11 // pred_fallthru
          _
        // Predicated region
        $region17: #{tpu_custom_call.1} parent=11 // pred_check
          %p792 = pneg %p176
        $region18: #{tpu_custom_call.1} parent=11 // pred_check_branch
          %794 = sbr.rel (%p792) target = $region20
        $region19: #{tpu_custom_call.1} parent=11 // pred_region
          %s796 = ssub.s32 64, 64
          %797 = vsyncadd [#allocation7], %s796
          %s799 = sshll.u32 [#allocation6], 4
          %s800 = int_to_ptr.vmem [resolvable:$true] %s799
          %802 = dma.hbm_to_vmem [thread:$0]  %s4, 64, %s800, [#allocation7]
        $region20: #{tpu_custom_call.1} parent=11 // pred_fallthru
          _
      $region12: #{tpu_custom_call.1} parent=5 // pred_fallthru
        _
      %p803 = scmp.lt.s32.totalorder %s44, 4
      // Predicated region
      $region21: #{tpu_custom_call.1} parent=5 // pred_check
        %p804 = pneg %p803
      $region22: #{tpu_custom_call.1} parent=5 // pred_check_branch
        %806 = sbr.rel (%p804) target = $region24
      $region23: #{tpu_custom_call.1} parent=5 // pred_region
        // Predicated region
        $region25: #{tpu_custom_call.1} parent=23 // pred_check
          %p807 = pneg %p76
        $region26: #{tpu_custom_call.1} parent=23 // pred_check_branch
          %809 = sbr.rel (%p807) target = $region28
        $region27: #{tpu_custom_call.1} parent=23 // pred_region
          %s810 = sand.u32 %s44, 1
          %s811 = scalar_lea.sflag [#allocation4], %s810
          %s812 = sand.u32 %s66, 1
          %s813 = smul.addr %s812, 8
          %s814 = scalar_lea.vmem [#allocation3], %s813
          %s816 = ssub.s32 128, 128
          %817 = vsyncadd %s811, %s816
          %s818 = smul.addr %s51, 128
          %s819 = scalar_lea.hbm %s0, %s818
          %s821 = sshll.u32 %s814, 4
          %s822 = int_to_ptr.vmem [resolvable:$true] %s821
          %824 = dma.hbm_to_vmem [thread:$0]  %s819, 128, %s822, %s811
        $region28: #{tpu_custom_call.1} parent=23 // pred_fallthru
          _
        // Predicated region
        $region29: #{tpu_custom_call.1} parent=23 // pred_check
          %p825 = pneg %p102
        $region30: #{tpu_custom_call.1} parent=23 // pred_check_branch
          %827 = sbr.rel (%p825) target = $region32
        $region31: #{tpu_custom_call.1} parent=23 // pred_region
          %p828 = scmp.lt.s32.totalorder %s51, 1
          %s829 = scalar_select %p828, %s51, 1
          %s830 = smul.addr %s829, 8
          %s831 = smul.addr %s830, 4
          %s832 = scalar_lea.vmem %s1, %s831
        $region32: #{tpu_custom_call.1} parent=23 // pred_fallthru
          _
        // Predicated region
        $region33: #{tpu_custom_call.1} parent=23 // pred_check
          %p833 = pneg %p128
        $region34: #{tpu_custom_call.1} parent=23 // pred_check_branch
          %835 = sbr.rel (%p833) target = $region36
        $region35: #{tpu_custom_call.1} parent=23 // pred_region
          %p836 = scmp.lt.s32.totalorder %s51, 1
          %s837 = scalar_select %p836, %s51, 1
          %s838 = smul.addr %s837, 8
          %s839 = scalar_lea.vmem %s2, %s838
        $region36: #{tpu_custom_call.1} parent=23 // pred_fallthru
          _
        // Predicated region
        $region37: #{tpu_custom_call.1} parent=23 // pred_check
          %p840 = pneg %p196
        $region38: #{tpu_custom_call.1} parent=23 // pred_check_branch
          %842 = sbr.rel (%p840) target = $region40
        $region39: #{tpu_custom_call.1} parent=23 // pred_region
          %p843 = scmp.lt.s32.totalorder %s52, 1
          %s844 = scalar_select %p843, %s52, 1
          %s845 = scalar_lea.vmem %s5, %s844
        $region40: #{tpu_custom_call.1} parent=23 // pred_fallthru
          _
        // Predicated region
        $region41: #{tpu_custom_call.1} parent=23 // pred_check
          %p846 = pneg %p222
        $region42: #{tpu_custom_call.1} parent=23 // pred_check_branch
          %848 = sbr.rel (%p846) target = $region44
        $region43: #{tpu_custom_call.1} parent=23 // pred_region
          %s849 = sand.u32 %s44, 1
          %s850 = scalar_lea.sflag [#allocation4], %s849
          %s851 = sand.u32 %s212, 1
          %s852 = scalar_lea.vmem [#allocation8], %s851
          %s854 = ssub.s32 16, 16
          %855 = vsyncadd %s850, %s854
          %s856 = smul.addr %s52, 16
          %s857 = scalar_lea.hbm %s6, %s856
          %s859 = sshll.u32 %s852, 4
          %s860 = int_to_ptr.vmem [resolvable:$true] %s859
          %862 = dma.hbm_to_vmem [thread:$0]  %s857, 16, %s860, %s850
        $region44: #{tpu_custom_call.1} parent=23 // pred_fallthru
          _
        // Predicated region
        $region45: #{tpu_custom_call.1} parent=23 // pred_check
          %p863 = pneg %p248
        $region46: #{tpu_custom_call.1} parent=23 // pred_check_branch
          %865 = sbr.rel (%p863) target = $region48
        $region47: #{tpu_custom_call.1} parent=23 // pred_region
          %p866 = scmp.lt.s32.totalorder %s52, 1
          %s867 = scalar_select %p866, %s52, 1
          %s868 = smul.addr %s867, 4
          %s869 = smul.addr %s868, 8
          %s870 = scalar_lea.vmem %s7, %s869
        $region48: #{tpu_custom_call.1} parent=23 // pred_fallthru
          _
        // Predicated region
        $region49: #{tpu_custom_call.1} parent=23 // pred_check
          %p871 = pneg %p274
        $region50: #{tpu_custom_call.1} parent=23 // pred_check_branch
          %873 = sbr.rel (%p871) target = $region52
        $region51: #{tpu_custom_call.1} parent=23 // pred_region
          %p874 = scmp.lt.s32.totalorder %s52, 1
          %s875 = scalar_select %p874, %s52, 1
          %s876 = scalar_lea.vmem %s8, %s875
        $region52: #{tpu_custom_call.1} parent=23 // pred_fallthru
          _
        // Predicated region
        $region53: #{tpu_custom_call.1} parent=23 // pred_check
          %p877 = pneg %p300
        $region54: #{tpu_custom_call.1} parent=23 // pred_check_branch
          %879 = sbr.rel (%p877) target = $region56
        $region55: #{tpu_custom_call.1} parent=23 // pred_region
          %p880 = scmp.lt.s32.totalorder %s52, 1
          %s881 = scalar_select %p880, %s52, 1
          %s882 = smul.addr %s881, 4
          %s883 = smul.addr %s882, 8
          %s884 = scalar_lea.vmem %s9, %s883
        $region56: #{tpu_custom_call.1} parent=23 // pred_fallthru
          _
        // Predicated region
        $region57: #{tpu_custom_call.1} parent=23 // pred_check
          %p885 = pneg %p326
        $region58: #{tpu_custom_call.1} parent=23 // pred_check_branch
          %887 = sbr.rel (%p885) target = $region60
        $region59: #{tpu_custom_call.1} parent=23 // pred_region
          %p888 = scmp.lt.s32.totalorder %s52, 1
          %s889 = scalar_select %p888, %s52, 1
          %s890 = scalar_lea.vmem %s10, %s889
        $region60: #{tpu_custom_call.1} parent=23 // pred_fallthru
          _
        // Predicated region
        $region61: #{tpu_custom_call.1} parent=23 // pred_check
          %p891 = pneg %p352
        $region62: #{tpu_custom_call.1} parent=23 // pred_check_branch
          %893 = sbr.rel (%p891) target = $region64
        $region63: #{tpu_custom_call.1} parent=23 // pred_region
          %p894 = scmp.lt.s32.totalorder %s52, 1
          %s895 = scalar_select %p894, %s52, 1
          %s896 = smul.addr %s895, 4
          %s897 = smul.addr %s896, 8
          %s898 = scalar_lea.vmem %s11, %s897
        $region64: #{tpu_custom_call.1} parent=23 // pred_fallthru
          _
        // Predicated region
        $region65: #{tpu_custom_call.1} parent=23 // pred_check
          %p899 = pneg %p378
        $region66: #{tpu_custom_call.1} parent=23 // pred_check_branch
          %901 = sbr.rel (%p899) target = $region68
        $region67: #{tpu_custom_call.1} parent=23 // pred_region
          %p902 = scmp.lt.s32.totalorder %s52, 1
          %s903 = scalar_select %p902, %s52, 1
          %s904 = scalar_lea.vmem %s12, %s903
        $region68: #{tpu_custom_call.1} parent=23 // pred_fallthru
          _
        // Predicated region
        $region69: #{tpu_custom_call.1} parent=23 // pred_check
          %p905 = pneg %p404
        $region70: #{tpu_custom_call.1} parent=23 // pred_check_branch
          %907 = sbr.rel (%p905) target = $region72
        $region71: #{tpu_custom_call.1} parent=23 // pred_region
          %p908 = scmp.lt.s32.totalorder %s52, 1
          %s909 = scalar_select %p908, %s52, 1
          %s910 = scalar_lea.vmem %s13, %s909
        $region72: #{tpu_custom_call.1} parent=23 // pred_fallthru
          _
        // Predicated region
        $region73: #{tpu_custom_call.1} parent=23 // pred_check
          %p911 = pneg %p430
        $region74: #{tpu_custom_call.1} parent=23 // pred_check_branch
          %913 = sbr.rel (%p911) target = $region76
        $region75: #{tpu_custom_call.1} parent=23 // pred_region
          %p914 = scmp.lt.s32.totalorder %s52, 1
          %s915 = scalar_select %p914, %s52, 1
          %s916 = scalar_lea.vmem %s14, %s915
        $region76: #{tpu_custom_call.1} parent=23 // pred_fallthru
          _
        // Predicated region
        $region77: #{tpu_custom_call.1} parent=23 // pred_check
          %p917 = pneg %p456
        $region78: #{tpu_custom_call.1} parent=23 // pred_check_branch
          %919 = sbr.rel (%p917) target = $region80
        $region79: #{tpu_custom_call.1} parent=23 // pred_region
          %p920 = scmp.lt.s32.totalorder %s52, 1
          %s921 = scalar_select %p920, %s52, 1
          %s922 = smul.addr %s921, 4
          %s923 = smul.addr %s922, 8
          %s924 = scalar_lea.vmem %s15, %s923
        $region80: #{tpu_custom_call.1} parent=23 // pred_fallthru
          _
        // Predicated region
        $region81: #{tpu_custom_call.1} parent=23 // pred_check
          %p925 = pneg %p482
        $region82: #{tpu_custom_call.1} parent=23 // pred_check_branch
          %927 = sbr.rel (%p925) target = $region84
        $region83: #{tpu_custom_call.1} parent=23 // pred_region
          %p928 = scmp.lt.s32.totalorder %s52, 1
          %s929 = scalar_select %p928, %s52, 1
          %s930 = scalar_lea.vmem %s16, %s929
        $region84: #{tpu_custom_call.1} parent=23 // pred_fallthru
          _
        // Predicated region
        $region85: #{tpu_custom_call.1} parent=23 // pred_check
          %p931 = pneg %p508
        $region86: #{tpu_custom_call.1} parent=23 // pred_check_branch
          %933 = sbr.rel (%p931) target = $region88
        $region87: #{tpu_custom_call.1} parent=23 // pred_region
          %p934 = scmp.lt.s32.totalorder %s52, 1
          %s935 = scalar_select %p934, %s52, 1
          %s936 = smul.addr %s935, 4
          %s937 = smul.addr %s936, 8
          %s938 = scalar_lea.vmem %s17, %s937
        $region88: #{tpu_custom_call.1} parent=23 // pred_fallthru
          _
        // Predicated region
        $region89: #{tpu_custom_call.1} parent=23 // pred_check
          %p939 = pneg %p534
        $region90: #{tpu_custom_call.1} parent=23 // pred_check_branch
          %941 = sbr.rel (%p939) target = $region92
        $region91: #{tpu_custom_call.1} parent=23 // pred_region
          %p942 = scmp.lt.s32.totalorder %s52, 1
          %s943 = scalar_select %p942, %s52, 1
          %s944 = scalar_lea.vmem %s18, %s943
        $region92: #{tpu_custom_call.1} parent=23 // pred_fallthru
          _
        // Predicated region
        $region93: #{tpu_custom_call.1} parent=23 // pred_check
          %p945 = pneg %p560
        $region94: #{tpu_custom_call.1} parent=23 // pred_check_branch
          %947 = sbr.rel (%p945) target = $region96
        $region95: #{tpu_custom_call.1} parent=23 // pred_region
          %p948 = scmp.lt.s32.totalorder %s52, 1
          %s949 = scalar_select %p948, %s52, 1
          %s950 = scalar_lea.vmem %s19, %s949
        $region96: #{tpu_custom_call.1} parent=23 // pred_fallthru
          _
        // Predicated region
        $region97: #{tpu_custom_call.1} parent=23 // pred_check
          %p951 = pneg %p586
        $region98: #{tpu_custom_call.1} parent=23 // pred_check_branch
          %953 = sbr.rel (%p951) target = $region100
        $region99: #{tpu_custom_call.1} parent=23 // pred_region
          %p954 = scmp.lt.s32.totalorder %s52, 1
          %s955 = scalar_select %p954, %s52, 1
          %s956 = scalar_lea.vmem %s20, %s955
        $region100: #{tpu_custom_call.1} parent=23 // pred_fallthru
          _
        // Predicated region
        $region101: #{tpu_custom_call.1} parent=23 // pred_check
          %p957 = pneg %p612
        $region102: #{tpu_custom_call.1} parent=23 // pred_check_branch
          %959 = sbr.rel (%p957) target = $region104
        $region103: #{tpu_custom_call.1} parent=23 // pred_region
          %s960 = sand.u32 %s44, 1
          %s961 = scalar_lea.sflag [#allocation4], %s960
          %s962 = sand.u32 %s602, 1
          %s963 = smul.addr %s962, 32
          %s964 = scalar_lea.vmem [#allocation9], %s963
          %s966 = ssub.s32 512, 512
          %967 = vsyncadd %s961, %s966
          %s968 = smul.addr %s52, 4
          %s969 = smul.addr %s968, 128
          %s970 = scalar_lea.hbm %s21, %s969
          %s971 = sshll.u32 %s964, 4
          %s972 = int_to_ptr.vmem [resolvable:$true] %s971
          %977 = dma.hbm_to_vmem [thread:$0]  %s970, 512, %s972, %s961, 128, 128, 8
        $region104: #{tpu_custom_call.1} parent=23 // pred_fallthru
          _
        // Predicated region
        $region105: #{tpu_custom_call.1} parent=23 // pred_check
          %p978 = pneg %p638
        $region106: #{tpu_custom_call.1} parent=23 // pred_check_branch
          %980 = sbr.rel (%p978) target = $region108
        $region107: #{tpu_custom_call.1} parent=23 // pred_region
          %p981 = scmp.lt.s32.totalorder %s52, 1
          %s982 = scalar_select %p981, %s52, 1
          %s983 = scalar_lea.vmem %s22, %s982
        $region108: #{tpu_custom_call.1} parent=23 // pred_fallthru
          _
        // Predicated region
        $region109: #{tpu_custom_call.1} parent=23 // pred_check
          %p984 = pneg %p664
        $region110: #{tpu_custom_call.1} parent=23 // pred_check_branch
          %986 = sbr.rel (%p984) target = $region112
        $region111: #{tpu_custom_call.1} parent=23 // pred_region
          %p987 = scmp.lt.s32.totalorder %s52, 1
          %s988 = scalar_select %p987, %s52, 1
          %s989 = smul.addr %s988, 8
          %s990 = smul.addr %s989, 8
          %s991 = scalar_lea.vmem %s23, %s990
        $region112: #{tpu_custom_call.1} parent=23 // pred_fallthru
          _
        // Predicated region
        $region113: #{tpu_custom_call.1} parent=23 // pred_check
          %p992 = pneg %p690
        $region114: #{tpu_custom_call.1} parent=23 // pred_check_branch
          %994 = sbr.rel (%p992) target = $region116
        $region115: #{tpu_custom_call.1} parent=23 // pred_region
          %p995 = scmp.lt.s32.totalorder %s52, 1
          %s996 = scalar_select %p995, %s52, 1
          %s997 = scalar_lea.vmem %s24, %s996
        $region116: #{tpu_custom_call.1} parent=23 // pred_fallthru
          _
      $region24: #{tpu_custom_call.1} parent=5 // pred_fallthru
        _
      %p998 = scmp.le.s32.totalorder 1, %s44
      %p999 = scmp.lt.s32.totalorder %s44, 5
      %p1000 = pnand %p998, %p999
      %p1001 = pneg %p1000
      // Predicated region
      $region117: #{tpu_custom_call.1} parent=5 // pred_check
        _
      $region118: #{tpu_custom_call.1} parent=5 // pred_check_branch
        %1003 = sbr.rel (%p1000) target = $region120
      $region119: #{tpu_custom_call.1} parent=5 // pred_region
        %s1004 = ssub.s32 %s44, 1
        %s1005 = sand.u32 %s49, 1
        %s1006 = scalar_lea.sflag [#allocation4], %s1005
        %s1007 = sand.u32 %s69, 1
        %s1008 = smul.addr %s1007, 8
        %s1009 = scalar_lea.vmem [#allocation3], %s1008
        // Predicated region
        $region121: #{tpu_custom_call.1} parent=119 // pred_check
          %p1010 = pneg %p82
        $region122: #{tpu_custom_call.1} parent=119 // pred_check_branch
          %1012 = sbr.rel (%p1010) target = $region124
        $region123: #{tpu_custom_call.1} parent=119 // pred_region
          %1013 = dma.done %s1006, 128
        $region124: #{tpu_custom_call.1} parent=119 // pred_fallthru
          _
        // Predicated region
        $region125: #{tpu_custom_call.1} parent=119 // pred_check
          %p1014 = pneg %p176
        $region126: #{tpu_custom_call.1} parent=119 // pred_check_branch
          %1016 = sbr.rel (%p1014) target = $region128
        $region127: #{tpu_custom_call.1} parent=119 // pred_region
          %1017 = dma.done [#allocation7], 64
        $region128: #{tpu_custom_call.1} parent=119 // pred_fallthru
          _
        %s1018 = sand.u32 %s49, 1
        %s1019 = scalar_lea.sflag [#allocation4], %s1018
        %s1020 = sand.u32 %s215, 1
        %s1021 = scalar_lea.vmem [#allocation8], %s1020
        // Predicated region
        $region129: #{tpu_custom_call.1} parent=119 // pred_check
          %p1022 = pneg %p228
        $region130: #{tpu_custom_call.1} parent=119 // pred_check_branch
          %1024 = sbr.rel (%p1022) target = $region132
        $region131: #{tpu_custom_call.1} parent=119 // pred_region
          %1025 = dma.done %s1019, 16
        $region132: #{tpu_custom_call.1} parent=119 // pred_fallthru
          _
        %s1026 = sand.u32 %s49, 1
        %s1027 = scalar_lea.sflag [#allocation4], %s1026
        %s1028 = sand.u32 %s605, 1
        %s1029 = smul.addr %s1028, 32
        %s1030 = scalar_lea.vmem [#allocation9], %s1029
        // Predicated region
        $region133: #{tpu_custom_call.1} parent=119 // pred_check
          %p1031 = pneg %p618
        $region134: #{tpu_custom_call.1} parent=119 // pred_check_branch
          %1033 = sbr.rel (%p1031) target = $region136
        $region135: #{tpu_custom_call.1} parent=119 // pred_region
          %1034 = dma.done %s1027, 512
        $region136: #{tpu_custom_call.1} parent=119 // pred_fallthru
          _
        %s1035 = sand.u32 %s49, 1
        %s1036 = scalar_lea.sflag [#allocation4], %s1035
        %s1037 = sand.u32 %s69, 1
        %s1038 = smul.addr %s1037, 8
        %s1039 = scalar_lea.vmem [#allocation3], %s1038
        %p1040 = pneg %p82
        %p1041 = pneg %p79
        %p1042 = scmp.lt.s32.totalorder %s53, 1
        %s1043 = scalar_select %p1042, %s53, 1
        %s1044 = smul.addr %s1043, 8
        %s1045 = smul.addr %s1044, 4
        %s1046 = scalar_lea.vmem %s1, %s1045
        %p1047 = pneg %p108
        %p1048 = pneg %p105
        %p1049 = scmp.lt.s32.totalorder %s53, 1
        %s1050 = scalar_select %p1049, %s53, 1
        %s1051 = smul.addr %s1050, 8
        %s1052 = scalar_lea.vmem %s2, %s1051
        %p1053 = pneg %p134
        %p1054 = pneg %p131
        %p1055 = pneg %p155
        %p1056 = pneg %p152
        %p1057 = pneg %p176
        %p1058 = pneg %p173
        %p1059 = scmp.lt.s32.totalorder %s54, 1
        %s1060 = scalar_select %p1059, %s54, 1
        %s1061 = scalar_lea.vmem %s5, %s1060
        %p1062 = pneg %p202
        %p1063 = pneg %p199
        %s1064 = sand.u32 %s49, 1
        %s1065 = scalar_lea.sflag [#allocation4], %s1064
        %s1066 = sand.u32 %s215, 1
        %s1067 = scalar_lea.vmem [#allocation8], %s1066
        %p1068 = pneg %p228
        %p1069 = pneg %p225
        %p1070 = scmp.lt.s32.totalorder %s54, 1
        %s1071 = scalar_select %p1070, %s54, 1
        %s1072 = smul.addr %s1071, 4
        %s1073 = smul.addr %s1072, 8
        %s1074 = scalar_lea.vmem %s7, %s1073
        %p1075 = pneg %p254
        %p1076 = pneg %p251
        %p1077 = scmp.lt.s32.totalorder %s54, 1
        %s1078 = scalar_select %p1077, %s54, 1
        %s1079 = scalar_lea.vmem %s8, %s1078
        %p1080 = pneg %p280
        %p1081 = pneg %p277
        %p1082 = scmp.lt.s32.totalorder %s54, 1
        %s1083 = scalar_select %p1082, %s54, 1
        %s1084 = smul.addr %s1083, 4
        %s1085 = smul.addr %s1084, 8
        %s1086 = scalar_lea.vmem %s9, %s1085
        %p1087 = pneg %p306
        %p1088 = pneg %p303
        %p1089 = scmp.lt.s32.totalorder %s54, 1
        %s1090 = scalar_select %p1089, %s54, 1
        %s1091 = scalar_lea.vmem %s10, %s1090
        %p1092 = pneg %p332
        %p1093 = pneg %p329
        %p1094 = scmp.lt.s32.totalorder %s54, 1
        %s1095 = scalar_select %p1094, %s54, 1
        %s1096 = smul.addr %s1095, 4
        %s1097 = smul.addr %s1096, 8
        %s1098 = scalar_lea.vmem %s11, %s1097
        %p1099 = pneg %p358
        %p1100 = pneg %p355
        %p1101 = scmp.lt.s32.totalorder %s54, 1
        %s1102 = scalar_select %p1101, %s54, 1
        %s1103 = scalar_lea.vmem %s12, %s1102
        %p1104 = pneg %p384
        %p1105 = pneg %p381
        %p1106 = scmp.lt.s32.totalorder %s54, 1
        %s1107 = scalar_select %p1106, %s54, 1
        %s1108 = scalar_lea.vmem %s13, %s1107
        %p1109 = pneg %p410
        %p1110 = pneg %p407
        %p1111 = scmp.lt.s32.totalorder %s54, 1
        %s1112 = scalar_select %p1111, %s54, 1
        %s1113 = scalar_lea.vmem %s14, %s1112
        %p1114 = pneg %p436
        %p1115 = pneg %p433
        %p1116 = scmp.lt.s32.totalorder %s54, 1
        %s1117 = scalar_select %p1116, %s54, 1
        %s1118 = smul.addr %s1117, 4
        %s1119 = smul.addr %s1118, 8
        %s1120 = scalar_lea.vmem %s15, %s1119
        %p1121 = pneg %p462
        %p1122 = pneg %p459
        %p1123 = scmp.lt.s32.totalorder %s54, 1
        %s1124 = scalar_select %p1123, %s54, 1
        %s1125 = scalar_lea.vmem %s16, %s1124
        %p1126 = pneg %p488
        %p1127 = pneg %p485
        %p1128 = scmp.lt.s32.totalorder %s54, 1
        %s1129 = scalar_select %p1128, %s54, 1
        %s1130 = smul.addr %s1129, 4
        %s1131 = smul.addr %s1130, 8
        %s1132 = scalar_lea.vmem %s17, %s1131
        %p1133 = pneg %p514
        %p1134 = pneg %p511
        %p1135 = scmp.lt.s32.totalorder %s54, 1
        %s1136 = scalar_select %p1135, %s54, 1
        %s1137 = scalar_lea.vmem %s18, %s1136
        %p1138 = pneg %p540
        %p1139 = pneg %p537
        %p1140 = scmp.lt.s32.totalorder %s54, 1
        %s1141 = scalar_select %p1140, %s54, 1
        %s1142 = scalar_lea.vmem %s19, %s1141
        %p1143 = pneg %p566
        %p1144 = pneg %p563
        %p1145 = scmp.lt.s32.totalorder %s54, 1
        %s1146 = scalar_select %p1145, %s54, 1
        %s1147 = scalar_lea.vmem %s20, %s1146
        %p1148 = pneg %p592
        %p1149 = pneg %p589
        %s1150 = sand.u32 %s49, 1
        %s1151 = scalar_lea.sflag [#allocation4], %s1150
        %s1152 = sand.u32 %s605, 1
        %s1153 = smul.addr %s1152, 32
        %s1154 = scalar_lea.vmem [#allocation9], %s1153
        %p1155 = pneg %p618
        %p1156 = pneg %p615
        %p1157 = scmp.lt.s32.totalorder %s54, 1
        %s1158 = scalar_select %p1157, %s54, 1
        %s1159 = scalar_lea.vmem %s22, %s1158
        %p1160 = pneg %p644
        %p1161 = pneg %p641
        %p1162 = scmp.lt.s32.totalorder %s54, 1
        %s1163 = scalar_select %p1162, %s54, 1
        %s1164 = smul.addr %s1163, 8
        %s1165 = smul.addr %s1164, 8
        %s1166 = scalar_lea.vmem %s23, %s1165
        %p1167 = pneg %p670
        %p1168 = pneg %p667
        %p1169 = scmp.lt.s32.totalorder %s54, 1
        %s1170 = scalar_select %p1169, %s54, 1
        %s1171 = scalar_lea.vmem %s24, %s1170
        %p1172 = pneg %p696
        %p1173 = pneg %p693
        %p1174 = pneg %p722
        %p1175 = pneg %p719
        %s1176 = sand.u32 %s709, 1
        %s1177 = scalar_lea.sflag [#allocation5], %s1176
        %s1178 = sand.u32 %s709, 1
        %s1179 = smul.addr %s1178, 8
        %s1180 = scalar_lea.vmem [#allocation10], %s1179
        %p1181 = pneg %p748
        %p1182 = pneg %p745
        %s1183 = sand.u32 %s735, 1
        %s1184 = scalar_lea.sflag [#allocation12], %s1183
        %s1185 = sand.u32 %s735, 1
        %s1186 = smul.addr %s1185, 8
        %s1187 = scalar_lea.vmem [#allocation11], %s1186
        %p1188 = pneg %p774
        %p1189 = pneg %p771
        %p1190 = scmp.lt.s32.totalorder %s53, 1
        %s1191 = scalar_select %p1190, %s53, 1
        %s1192 = smul.addr %s1191, 8
        %s1193 = smul.addr %s1192, 4
        %s1194 = scalar_lea.vmem %s27, %s1193
        %p1195 = scmp.lt.s32.totalorder %s53, 1
        %s1196 = scalar_select %p1195, %s53, 1
        %s1197 = smul.addr %s1196, 8
        %s1198 = smul.addr %s1197, 4
        %s1199 = scalar_lea.vmem %s1, %s1198
        %p1200 = scmp.lt.s32.totalorder %s53, 1
        %s1201 = scalar_select %p1200, %s53, 1
        %s1202 = smul.addr %s1201, 8
        %s1203 = scalar_lea.vmem %s2, %s1202
        %p1204 = scmp.lt.s32.totalorder %s54, 1
        %s1205 = scalar_select %p1204, %s54, 1
        %s1206 = scalar_lea.vmem %s5, %s1205
        %p1207 = scmp.lt.s32.totalorder %s54, 1
        %s1208 = scalar_select %p1207, %s54, 1
        %s1209 = smul.addr %s1208, 4
        %s1210 = smul.addr %s1209, 8
        %s1211 = scalar_lea.vmem %s7, %s1210
        %p1212 = scmp.lt.s32.totalorder %s54, 1
        %s1213 = scalar_select %p1212, %s54, 1
        %s1214 = scalar_lea.vmem %s8, %s1213
        %p1215 = scmp.lt.s32.totalorder %s54, 1
        %s1216 = scalar_select %p1215, %s54, 1
        %s1217 = smul.addr %s1216, 4
        %s1218 = smul.addr %s1217, 8
        %s1219 = scalar_lea.vmem %s9, %s1218
        %p1220 = scmp.lt.s32.totalorder %s54, 1
        %s1221 = scalar_select %p1220, %s54, 1
        %s1222 = scalar_lea.vmem %s10, %s1221
        %p1223 = scmp.lt.s32.totalorder %s54, 1
        %s1224 = scalar_select %p1223, %s54, 1
        %s1225 = smul.addr %s1224, 4
        %s1226 = smul.addr %s1225, 8
        %s1227 = scalar_lea.vmem %s11, %s1226
        %p1228 = scmp.lt.s32.totalorder %s54, 1
        %s1229 = scalar_select %p1228, %s54, 1
        %s1230 = scalar_lea.vmem %s12, %s1229
        %p1231 = scmp.lt.s32.totalorder %s54, 1
        %s1232 = scalar_select %p1231, %s54, 1
        %s1233 = scalar_lea.vmem %s13, %s1232
        %p1234 = scmp.lt.s32.totalorder %s54, 1
        %s1235 = scalar_select %p1234, %s54, 1
        %s1236 = scalar_lea.vmem %s14, %s1235
        %p1237 = scmp.lt.s32.totalorder %s54, 1
        %s1238 = scalar_select %p1237, %s54, 1
        %s1239 = smul.addr %s1238, 4
        %s1240 = smul.addr %s1239, 8
        %s1241 = scalar_lea.vmem %s15, %s1240
        %p1242 = scmp.lt.s32.totalorder %s54, 1
        %s1243 = scalar_select %p1242, %s54, 1
        %s1244 = scalar_lea.vmem %s16, %s1243
        %p1245 = scmp.lt.s32.totalorder %s54, 1
        %s1246 = scalar_select %p1245, %s54, 1
        %s1247 = smul.addr %s1246, 4
        %s1248 = smul.addr %s1247, 8
        %s1249 = scalar_lea.vmem %s17, %s1248
        %p1250 = scmp.lt.s32.totalorder %s54, 1
        %s1251 = scalar_select %p1250, %s54, 1
        %s1252 = scalar_lea.vmem %s18, %s1251
        %p1253 = scmp.lt.s32.totalorder %s54, 1
        %s1254 = scalar_select %p1253, %s54, 1
        %s1255 = scalar_lea.vmem %s19, %s1254
        %p1256 = scmp.lt.s32.totalorder %s54, 1
        %s1257 = scalar_select %p1256, %s54, 1
        %s1258 = scalar_lea.vmem %s20, %s1257
        %p1259 = scmp.lt.s32.totalorder %s54, 1
        %s1260 = scalar_select %p1259, %s54, 1
        %s1261 = scalar_lea.vmem %s22, %s1260
        %p1262 = scmp.lt.s32.totalorder %s54, 1
        %s1263 = scalar_select %p1262, %s54, 1
        %s1264 = smul.addr %s1263, 8
        %s1265 = smul.addr %s1264, 8
        %s1266 = scalar_lea.vmem %s23, %s1265
        %p1267 = scmp.lt.s32.totalorder %s54, 1
        %s1268 = scalar_select %p1267, %s54, 1
        %s1269 = scalar_lea.vmem %s24, %s1268
        %p1270 = scmp.lt.s32.totalorder %s53, 1
        %s1271 = scalar_select %p1270, %s53, 1
        %s1272 = smul.addr %s1271, 8
        %s1273 = smul.addr %s1272, 4
        %s1274 = scalar_lea.vmem %s27, %s1273
        %p1275 = scmp.eq.s32.totalorder %s54, 0
        // Predicated region
        $region137: #{tpu_custom_call.1} parent=119 // pred_check
          %p1276 = pneg %p1275
        $region138: #{tpu_custom_call.1} parent=119 // pred_check_branch
          %1278 = sbr.rel (%p1276) target = $region140
        $region139: #{tpu_custom_call.1} parent=119 // pred_region
          %v1279 = vld [vmem:[%s1009] sm:$0xff]
          %vm1280 = vcmask 261120
          %1281 = vst.msk [vmem:[#allocation2] sm:$0xff] %vm1280, %v1279
        $region140: #{tpu_custom_call.1} parent=119 // pred_fallthru
          _
        %v1282 = vld [vmem:[#allocation2] sm:$0xff]
        %v1283 = vld [vmem:[%s1199] sm:$0x7]
        %v1284 = vld [vmem:[%s1199 + $0x4] sm:$0x7]
        %v1285 = vld [vmem:[%s1199 + $0x8] sm:$0x7]
        %v1286 = vld [vmem:[%s1199 + $0xc] sm:$0x7]
        %v1287 = vld [vmem:[%s1199 + $0x10] sm:$0x7]
        %v1288 = vld [vmem:[%s1199 + $0x14] sm:$0x7]
        %v1289 = vld [vmem:[%s1199 + $0x18] sm:$0x7]
        %v1290 = vld [vmem:[%s1199 + $0x1c] sm:$0x7]
        %v1300 = vunpack.c.l.s4 1966171168
        %v1301 = vunpack.c.0.s8 %v1300
        %v1302 = vlaneseq
        %v1303 = vshrl.u32 %v1302, 7
        %v1304 = vsub.s32 %v1301, %v1303
        %v1305 = vrot.slane %v1283, %v1304
        %v1306 = vcombine.high %v1305, %v1305
        %v1308 = vunpack.c.l.s4 1966171168
        %v1309 = vunpack.c.0.s8 %v1308
        %v1310 = vlaneseq
        %v1311 = vshrl.u32 %v1310, 7
        %v1312 = vsub.s32 %v1309, %v1311
        %v1313 = vrot.slane %v1305, %v1312
        %v1315 = vunpack.c.l.s4 1966171168
        %v1316 = vunpack.c.0.s8 %v1315
        %v1317 = vlaneseq
        %v1318 = vshrl.u32 %v1317, 7
        %v1319 = vsub.s32 %v1316, %v1318
        %v1320 = vrot.slane %v1306, %v1319
        %v1321 = vcombine.high %v1313, %v1313
        %v1323 = vunpack.c.l.s4 1966171168
        %v1324 = vunpack.c.0.s8 %v1323
        %v1325 = vlaneseq
        %v1326 = vshrl.u32 %v1325, 7
        %v1327 = vsub.s32 %v1324, %v1326
        %v1328 = vrot.slane %v1284, %v1327
        %v1329 = vcombine.high %v1328, %v1328
        %v1331 = vunpack.c.l.s4 1966171168
        %v1332 = vunpack.c.0.s8 %v1331
        %v1333 = vlaneseq
        %v1334 = vshrl.u32 %v1333, 7
        %v1335 = vsub.s32 %v1332, %v1334
        %v1336 = vrot.slane %v1328, %v1335
        %v1338 = vunpack.c.l.s4 1966171168
        %v1339 = vunpack.c.0.s8 %v1338
        %v1340 = vlaneseq
        %v1341 = vshrl.u32 %v1340, 7
        %v1342 = vsub.s32 %v1339, %v1341
        %v1343 = vrot.slane %v1329, %v1342
        %v1344 = vcombine.high %v1336, %v1336
        %v1346 = vunpack.c.l.s4 1966171168
        %v1347 = vunpack.c.0.s8 %v1346
        %v1348 = vlaneseq
        %v1349 = vshrl.u32 %v1348, 7
        %v1350 = vsub.s32 %v1347, %v1349
        %v1351 = vrot.slane %v1285, %v1350
        %v1352 = vcombine.high %v1351, %v1351
        %v1354 = vunpack.c.l.s4 1966171168
        %v1355 = vunpack.c.0.s8 %v1354
        %v1356 = vlaneseq
        %v1357 = vshrl.u32 %v1356, 7
        %v1358 = vsub.s32 %v1355, %v1357
        %v1359 = vrot.slane %v1351, %v1358
        %v1361 = vunpack.c.l.s4 1966171168
        %v1362 = vunpack.c.0.s8 %v1361
        %v1363 = vlaneseq
        %v1364 = vshrl.u32 %v1363, 7
        %v1365 = vsub.s32 %v1362, %v1364
        %v1366 = vrot.slane %v1352, %v1365
        %v1367 = vcombine.high %v1359, %v1359
        %v1369 = vunpack.c.l.s4 1966171168
        %v1370 = vunpack.c.0.s8 %v1369
        %v1371 = vlaneseq
        %v1372 = vshrl.u32 %v1371, 7
        %v1373 = vsub.s32 %v1370, %v1372
        %v1374 = vrot.slane %v1286, %v1373
        %v1375 = vcombine.high %v1374, %v1374
        %v1377 = vunpack.c.l.s4 1966171168
        %v1378 = vunpack.c.0.s8 %v1377
        %v1379 = vlaneseq
        %v1380 = vshrl.u32 %v1379, 7
        %v1381 = vsub.s32 %v1378, %v1380
        %v1382 = vrot.slane %v1374, %v1381
        %v1384 = vunpack.c.l.s4 1966171168
        %v1385 = vunpack.c.0.s8 %v1384
        %v1386 = vlaneseq
        %v1387 = vshrl.u32 %v1386, 7
        %v1388 = vsub.s32 %v1385, %v1387
        %v1389 = vrot.slane %v1375, %v1388
        %v1390 = vcombine.high %v1382, %v1382
        %v1392 = vunpack.c.l.s4 1966171168
        %v1393 = vunpack.c.0.s8 %v1392
        %v1394 = vlaneseq
        %v1395 = vshrl.u32 %v1394, 7
        %v1396 = vsub.s32 %v1393, %v1395
        %v1397 = vrot.slane %v1287, %v1396
        %v1398 = vcombine.high %v1397, %v1397
        %v1400 = vunpack.c.l.s4 1966171168
        %v1401 = vunpack.c.0.s8 %v1400
        %v1402 = vlaneseq
        %v1403 = vshrl.u32 %v1402, 7
        %v1404 = vsub.s32 %v1401, %v1403
        %v1405 = vrot.slane %v1397, %v1404
        %v1407 = vunpack.c.l.s4 1966171168
        %v1408 = vunpack.c.0.s8 %v1407
        %v1409 = vlaneseq
        %v1410 = vshrl.u32 %v1409, 7
        %v1411 = vsub.s32 %v1408, %v1410
        %v1412 = vrot.slane %v1398, %v1411
        %v1413 = vcombine.high %v1405, %v1405
        %v1415 = vunpack.c.l.s4 1966171168
        %v1416 = vunpack.c.0.s8 %v1415
        %v1417 = vlaneseq
        %v1418 = vshrl.u32 %v1417, 7
        %v1419 = vsub.s32 %v1416, %v1418
        %v1420 = vrot.slane %v1288, %v1419
        %v1421 = vcombine.high %v1420, %v1420
        %v1423 = vunpack.c.l.s4 1966171168
        %v1424 = vunpack.c.0.s8 %v1423
        %v1425 = vlaneseq
        %v1426 = vshrl.u32 %v1425, 7
        %v1427 = vsub.s32 %v1424, %v1426
        %v1428 = vrot.slane %v1420, %v1427
        %v1430 = vunpack.c.l.s4 1966171168
        %v1431 = vunpack.c.0.s8 %v1430
        %v1432 = vlaneseq
        %v1433 = vshrl.u32 %v1432, 7
        %v1434 = vsub.s32 %v1431, %v1433
        %v1435 = vrot.slane %v1421, %v1434
        %v1436 = vcombine.high %v1428, %v1428
        %v1438 = vunpack.c.l.s4 1966171168
        %v1439 = vunpack.c.0.s8 %v1438
        %v1440 = vlaneseq
        %v1441 = vshrl.u32 %v1440, 7
        %v1442 = vsub.s32 %v1439, %v1441
        %v1443 = vrot.slane %v1289, %v1442
        %v1444 = vcombine.high %v1443, %v1443
        %v1446 = vunpack.c.l.s4 1966171168
        %v1447 = vunpack.c.0.s8 %v1446
        %v1448 = vlaneseq
        %v1449 = vshrl.u32 %v1448, 7
        %v1450 = vsub.s32 %v1447, %v1449
        %v1451 = vrot.slane %v1443, %v1450
        %v1453 = vunpack.c.l.s4 1966171168
        %v1454 = vunpack.c.0.s8 %v1453
        %v1455 = vlaneseq
        %v1456 = vshrl.u32 %v1455, 7
        %v1457 = vsub.s32 %v1454, %v1456
        %v1458 = vrot.slane %v1444, %v1457
        %v1459 = vcombine.high %v1451, %v1451
        %v1461 = vunpack.c.l.s4 1966171168
        %v1462 = vunpack.c.0.s8 %v1461
        %v1463 = vlaneseq
        %v1464 = vshrl.u32 %v1463, 7
        %v1465 = vsub.s32 %v1462, %v1464
        %v1466 = vrot.slane %v1290, %v1465
        %v1467 = vcombine.high %v1466, %v1466
        %v1469 = vunpack.c.l.s4 1966171168
        %v1470 = vunpack.c.0.s8 %v1469
        %v1471 = vlaneseq
        %v1472 = vshrl.u32 %v1471, 7
        %v1473 = vsub.s32 %v1470, %v1472
        %v1474 = vrot.slane %v1466, %v1473
        %v1476 = vunpack.c.l.s4 1966171168
        %v1477 = vunpack.c.0.s8 %v1476
        %v1478 = vlaneseq
        %v1479 = vshrl.u32 %v1478, 7
        %v1480 = vsub.s32 %v1477, %v1479
        %v1481 = vrot.slane %v1467, %v1480
        %v1482 = vcombine.high %v1474, %v1474
        %v1483 = vld [vmem:[%s1203] sm:$0xff]
        %v1484 = vld [vmem:[%s3] sm:$0xff]
        %v1485 = vld [vmem:[%s3 + $0x8] sm:$0xff]
        %v1486 = vld [vmem:[%s3 + $0x10] sm:$0xff]
        %v1487 = vld [vmem:[%s3 + $0x18] sm:$0xff]
        %v1488 = vld [vmem:[#allocation6] sm:$0xf]
        %v1489 = vld [vmem:[%s1206] sm:$0x1]
        %v1490 = vld [vmem:[%s1021] sm:$0x1]
        %vm1491 = vcmask 261120
        %v1492 = vsel %vm1491, %v1282, 0.0
        %1493 = vadd.xlane.f32.xlu0 %v1492
        %v1494 = vpop.xlane.xlu0 %1493
        %v1495 = vrcp.pop 32.0
        %v1496 = vmul.f32 %v1494, %v1495
        %v1497 = vsub.f32 %v1282, %v1496
        %v1498 = vmul.f32 %v1497, %v1497
        %v1499 = vsel %vm1491, %v1498, 0.0
        %1500 = vadd.xlane.f32.xlu0 %v1499
        %v1501 = vpop.xlane.xlu0 %1500
        %v1502 = vmul.f32 %v1501, %v1495
        %v1503 = vadd.f32 %v1502, 1e-05
        %v1504 = vrsqrt.pop %v1503
        %v1505 = vmul.f32 %v1497, %v1504
        %v1507 = vlaneseq
        %v1508 = vshrl.u32 %v1507, 7
        %v1509 = vsub.s32 0, %v1508
        %v1510 = vrot.slane %v1489, %v1509
        %v1512 = vmul.f32 %v1505, %v1510
        %v1514 = vlaneseq
        %v1515 = vshrl.u32 %v1514, 7
        %v1516 = vsub.s32 0, %v1515
        %v1517 = vrot.slane %v1490, %v1516
        %v1519 = vadd.f32 %v1512, %v1517
        %v1520 = vld [vmem:[%s1211] sm:$0xff]
        %v1521 = vld [vmem:[%s1211 + $0x8] sm:$0xff]
        %v1522 = vld [vmem:[%s1211 + $0x10] sm:$0xff]
        %v1523 = vld [vmem:[%s1211 + $0x18] sm:$0xff]
        %v1524 = vld [vmem:[%s1214] sm:$0x1]
        %v1526 = vlaneseq
        %v1527 = vshrl.u32 %v1526, 7
        %v1528 = vsub.s32 0, %v1527
        %v1529 = vrot.slane %v1524, %v1528
        %v1532 = vsel %vm1491, %v1519, 0
        %1534 = vmatprep.subr.mxu0 0.0
        %1535 = vmatpush1.msra.mxu0 %v1520
        %1536 = vmatprep.subr.mxu0 0.0
        %1537 = vmatpush1.msra.mxu0 %v1521
        %1538 = vmatprep.subr.mxu0 0.0
        %1539 = vmatpush1.msra.mxu0 %v1522
        %1540 = vmatprep.subr.mxu0 0.0
        %1541 = vmatpush1.msra.mxu0 %v1523
        %1542 = vmatprep.subr.mxu0 0.0
        %1543 = vmatpush1.msra.mxu0 0.0
        %1544 = vmatprep.subr.mxu0 0.0
        %1545 = vmatpush1.msra.mxu0 0.0
        %1546 = vmatprep.subr.mxu0 0.0
        %1547 = vmatpush1.msra.mxu0 0.0
        %1548 = vmatprep.subr.mxu0 0.0
        %1549 = vmatpush1.msra.mxu0 0.0
        %1550 = vmatprep.subr.mxu0 0.0
        %1551 = vmatpush1.msra.mxu0 0.0
        %1552 = vmatprep.subr.mxu0 0.0
        %1553 = vmatpush1.msra.mxu0 0.0
        %1554 = vmatprep.subr.mxu0 0.0
        %1555 = vmatpush1.msra.mxu0 0.0
        %1556 = vmatprep.subr.mxu0 0.0
        %1557 = vmatpush1.msra.mxu0 0.0
        %1558 = vmatprep.subr.mxu0 0.0
        %1559 = vmatpush1.msra.mxu0 0.0
        %1560 = vmatprep.subr.mxu0 0.0
        %1561 = vmatpush1.msra.mxu0 0.0
        %1562 = vmatprep.subr.mxu0 0.0
        %1563 = vmatpush1.msra.mxu0 0.0
        %1564 = vmatprep.subr.mxu0 0.0
        %1565 = vmatpush1.msra.mxu0 0.0
        %1566 = vmatprep.subr.mxu0 0.0
        %1567 = vmatpush1.msra.mxu0 0.0
        %1568 = vmatprep.subr.mxu0 0.0
        %1569 = vmatpush1.msra.mxu0 0.0
        %1570 = vmatprep.subr.mxu0 0.0
        %1571 = vmatpush1.msra.mxu0 0.0
        %1572 = vmatprep.subr.mxu0 0.0
        %1573 = vmatpush1.msra.mxu0 0.0
        %1574 = vmatprep.subr.mxu0 0.0
        %1575 = vmatpush1.msra.mxu0 0.0
        %1576 = vmatprep.subr.mxu0 0.0
        %1577 = vmatpush1.msra.mxu0 0.0
        %1578 = vmatprep.subr.mxu0 0.0
        %1579 = vmatpush1.msra.mxu0 0.0
        %1580 = vmatprep.subr.mxu0 0.0
        %1581 = vmatpush1.msra.mxu0 0.0
        %1582 = vmatprep.subr.mxu0 0.0
        %1583 = vmatpush1.msra.mxu0 0.0
        %1584 = vmatprep.subr.mxu0 0.0
        %1585 = vmatpush1.msra.mxu0 0.0
        %1586 = vmatprep.subr.mxu0 0.0
        %1587 = vmatpush1.msra.mxu0 0.0
        %1588 = vmatprep.subr.mxu0 0.0
        %1589 = vmatpush1.msra.mxu0 0.0
        %1590 = vmatprep.subr.mxu0 0.0
        %1591 = vmatpush1.msra.mxu0 0.0
        %1592 = vmatprep.subr.mxu0 0.0
        %1593 = vmatpush1.msra.mxu0 0.0
        %1594 = vmatprep.subr.mxu0 0.0
        %1595 = vmatpush1.msra.mxu0 0.0
        %1596 = vmatprep.subr.mxu0 0.0
        %1597 = vmatpush1.msra.mxu0 0.0
        %1598 = vmatprep.mubr.f32.mxu0 0.0
        %1599 = vmatmul.mubr.f32.gmra.mrb[0].mxu0 %v1532
        %v1600 = vpop.f32.mrb[0].mxu0
        %v1601 = vadd.f32 %v1529, %v1600
        %v1602 = vpop.f32.mrb[0].mxu0
        %1603 = vdwg.mxu0
        %v1604 = vld [vmem:[%s1219] sm:$0xff]
        %v1605 = vld [vmem:[%s1219 + $0x8] sm:$0xff]
        %v1606 = vld [vmem:[%s1219 + $0x10] sm:$0xff]
        %v1607 = vld [vmem:[%s1219 + $0x18] sm:$0xff]
        %v1608 = vld [vmem:[%s1222] sm:$0x1]
        %v1610 = vlaneseq
        %v1611 = vshrl.u32 %v1610, 7
        %v1612 = vsub.s32 0, %v1611
        %v1613 = vrot.slane %v1608, %v1612
        %v1615 = vcombine.low %v1313, %v1320
        %v1616 = vcombine.low %v1321, %v1336
        %v1617 = vcombine.low %v1343, %v1344
        %v1618 = vcombine.low %v1359, %v1366
        %v1620 = vunpack.c.l.s4 1966171168
        %v1621 = vunpack.c.0.s8 %v1620
        %v1622 = vlaneseq
        %v1623 = vshrl.u32 %v1622, 7
        %v1624 = vsub.s32 %v1621, %v1623
        %v1625 = vrot.slane %v1615, %v1624
        %v1627 = vunpack.c.l.s4 1966171168
        %v1628 = vunpack.c.0.s8 %v1627
        %v1629 = vlaneseq
        %v1630 = vshrl.u32 %v1629, 7
        %v1631 = vsub.s32 %v1628, %v1630
        %v1632 = vrot.slane %v1616, %v1631
        %v1634 = vunpack.c.l.s4 1966171168
        %v1635 = vunpack.c.0.s8 %v1634
        %v1636 = vlaneseq
        %v1637 = vshrl.u32 %v1636, 7
        %v1638 = vsub.s32 %v1635, %v1637
        %v1639 = vrot.slane %v1617, %v1638
        %v1641 = vunpack.c.l.s4 1966171168
        %v1642 = vunpack.c.0.s8 %v1641
        %v1643 = vlaneseq
        %v1644 = vshrl.u32 %v1643, 7
        %v1645 = vsub.s32 %v1642, %v1644
        %v1646 = vrot.slane %v1618, %v1645
        %v1647 = vcombine.low %v1625, %v1632
        %v1648 = vcombine.low %v1639, %v1646
        %v1650 = vunpack.c.l.s4 1966171168
        %v1651 = vunpack.c.0.s8 %v1650
        %v1652 = vlaneseq
        %v1653 = vshrl.u32 %v1652, 7
        %v1654 = vsub.s32 %v1651, %v1653
        %v1655 = vrot.slane %v1647, %v1654
        %v1657 = vunpack.c.l.s4 1966171168
        %v1658 = vunpack.c.0.s8 %v1657
        %v1659 = vlaneseq
        %v1660 = vshrl.u32 %v1659, 7
        %v1661 = vsub.s32 %v1658, %v1660
        %v1662 = vrot.slane %v1648, %v1661
        %v1663 = vcombine.low %v1655, %v1662
        %v1664 = vcombine.low %v1367, %v1382
        %v1665 = vcombine.low %v1389, %v1390
        %v1666 = vcombine.low %v1405, %v1412
        %v1667 = vcombine.low %v1413, %v1428
        %v1669 = vunpack.c.l.s4 1966171168
        %v1670 = vunpack.c.0.s8 %v1669
        %v1671 = vlaneseq
        %v1672 = vshrl.u32 %v1671, 7
        %v1673 = vsub.s32 %v1670, %v1672
        %v1674 = vrot.slane %v1664, %v1673
        %v1676 = vunpack.c.l.s4 1966171168
        %v1677 = vunpack.c.0.s8 %v1676
        %v1678 = vlaneseq
        %v1679 = vshrl.u32 %v1678, 7
        %v1680 = vsub.s32 %v1677, %v1679
        %v1681 = vrot.slane %v1665, %v1680
        %v1683 = vunpack.c.l.s4 1966171168
        %v1684 = vunpack.c.0.s8 %v1683
        %v1685 = vlaneseq
        %v1686 = vshrl.u32 %v1685, 7
        %v1687 = vsub.s32 %v1684, %v1686
        %v1688 = vrot.slane %v1666, %v1687
        %v1690 = vunpack.c.l.s4 1966171168
        %v1691 = vunpack.c.0.s8 %v1690
        %v1692 = vlaneseq
        %v1693 = vshrl.u32 %v1692, 7
        %v1694 = vsub.s32 %v1691, %v1693
        %v1695 = vrot.slane %v1667, %v1694
        %v1696 = vcombine.low %v1674, %v1681
        %v1697 = vcombine.low %v1688, %v1695
        %v1699 = vunpack.c.l.s4 1966171168
        %v1700 = vunpack.c.0.s8 %v1699
        %v1701 = vlaneseq
        %v1702 = vshrl.u32 %v1701, 7
        %v1703 = vsub.s32 %v1700, %v1702
        %v1704 = vrot.slane %v1696, %v1703
        %v1706 = vunpack.c.l.s4 1966171168
        %v1707 = vunpack.c.0.s8 %v1706
        %v1708 = vlaneseq
        %v1709 = vshrl.u32 %v1708, 7
        %v1710 = vsub.s32 %v1707, %v1709
        %v1711 = vrot.slane %v1697, %v1710
        %v1712 = vcombine.low %v1704, %v1711
        %v1713 = vcombine.low %v1435, %v1436
        %v1714 = vcombine.low %v1451, %v1458
        %v1715 = vcombine.low %v1459, %v1474
        %v1716 = vcombine.low %v1481, %v1482
        %v1718 = vunpack.c.l.s4 1966171168
        %v1719 = vunpack.c.0.s8 %v1718
        %v1720 = vlaneseq
        %v1721 = vshrl.u32 %v1720, 7
        %v1722 = vsub.s32 %v1719, %v1721
        %v1723 = vrot.slane %v1713, %v1722
        %v1725 = vunpack.c.l.s4 1966171168
        %v1726 = vunpack.c.0.s8 %v1725
        %v1727 = vlaneseq
        %v1728 = vshrl.u32 %v1727, 7
        %v1729 = vsub.s32 %v1726, %v1728
        %v1730 = vrot.slane %v1714, %v1729
        %v1732 = vunpack.c.l.s4 1966171168
        %v1733 = vunpack.c.0.s8 %v1732
        %v1734 = vlaneseq
        %v1735 = vshrl.u32 %v1734, 7
        %v1736 = vsub.s32 %v1733, %v1735
        %v1737 = vrot.slane %v1715, %v1736
        %v1739 = vunpack.c.l.s4 1966171168
        %v1740 = vunpack.c.0.s8 %v1739
        %v1741 = vlaneseq
        %v1742 = vshrl.u32 %v1741, 7
        %v1743 = vsub.s32 %v1740, %v1742
        %v1744 = vrot.slane %v1716, %v1743
        %v1745 = vcombine.low %v1723, %v1730
        %v1746 = vcombine.low %v1737, %v1744
        %v1748 = vunpack.c.l.s4 1966171168
        %v1749 = vunpack.c.0.s8 %v1748
        %v1750 = vlaneseq
        %v1751 = vshrl.u32 %v1750, 7
        %v1752 = vsub.s32 %v1749, %v1751
        %v1753 = vrot.slane %v1745, %v1752
        %v1755 = vunpack.c.l.s4 1966171168
        %v1756 = vunpack.c.0.s8 %v1755
        %v1757 = vlaneseq
        %v1758 = vshrl.u32 %v1757, 7
        %v1759 = vsub.s32 %v1756, %v1758
        %v1760 = vrot.slane %v1746, %v1759
        %v1761 = vcombine.low %v1753, %v1760
        %v1762 = vsel %vm1491, %v1663, 0
        %v1764 = vsel %vm1491, %v1712, 0
        %v1766 = vsel %vm1491, %v1761, 0
        %1768 = vmatprep.subr.mxu0 0.0
        %1769 = vmatpush1.msra.mxu0 %v1604
        %1770 = vmatprep.subr.mxu0 0.0
        %1771 = vmatpush1.msra.mxu0 %v1605
        %1772 = vmatprep.subr.mxu0 0.0
        %1773 = vmatpush1.msra.mxu0 %v1606
        %1774 = vmatprep.subr.mxu0 0.0
        %1775 = vmatpush1.msra.mxu0 %v1607
        %1776 = vmatprep.subr.mxu0 0.0
        %1777 = vmatpush1.msra.mxu0 0.0
        %1778 = vmatprep.subr.mxu0 0.0
        %1779 = vmatpush1.msra.mxu0 0.0
        %1780 = vmatprep.subr.mxu0 0.0
        %1781 = vmatpush1.msra.mxu0 0.0
        %1782 = vmatprep.subr.mxu0 0.0
        %1783 = vmatpush1.msra.mxu0 0.0
        %1784 = vmatprep.subr.mxu0 0.0
        %1785 = vmatpush1.msra.mxu0 0.0
        %1786 = vmatprep.subr.mxu0 0.0
        %1787 = vmatpush1.msra.mxu0 0.0
        %1788 = vmatprep.subr.mxu0 0.0
        %1789 = vmatpush1.msra.mxu0 0.0
        %1790 = vmatprep.subr.mxu0 0.0
        %1791 = vmatpush1.msra.mxu0 0.0
        %1792 = vmatprep.subr.mxu0 0.0
        %1793 = vmatpush1.msra.mxu0 0.0
        %1794 = vmatprep.subr.mxu0 0.0
        %1795 = vmatpush1.msra.mxu0 0.0
        %1796 = vmatprep.subr.mxu0 0.0
        %1797 = vmatpush1.msra.mxu0 0.0
        %1798 = vmatprep.subr.mxu0 0.0
        %1799 = vmatpush1.msra.mxu0 0.0
        %1800 = vmatprep.subr.mxu0 0.0
        %1801 = vmatpush1.msra.mxu0 0.0
        %1802 = vmatprep.subr.mxu0 0.0
        %1803 = vmatpush1.msra.mxu0 0.0
        %1804 = vmatprep.subr.mxu0 0.0
        %1805 = vmatpush1.msra.mxu0 0.0
        %1806 = vmatprep.subr.mxu0 0.0
        %1807 = vmatpush1.msra.mxu0 0.0
        %1808 = vmatprep.subr.mxu0 0.0
        %1809 = vmatpush1.msra.mxu0 0.0
        %1810 = vmatprep.subr.mxu0 0.0
        %1811 = vmatpush1.msra.mxu0 0.0
        %1812 = vmatprep.subr.mxu0 0.0
        %1813 = vmatpush1.msra.mxu0 0.0
        %1814 = vmatprep.subr.mxu0 0.0
        %1815 = vmatpush1.msra.mxu0 0.0
        %1816 = vmatprep.subr.mxu0 0.0
        %1817 = vmatpush1.msra.mxu0 0.0
        %1818 = vmatprep.subr.mxu0 0.0
        %1819 = vmatpush1.msra.mxu0 0.0
        %1820 = vmatprep.subr.mxu0 0.0
        %1821 = vmatpush1.msra.mxu0 0.0
        %1822 = vmatprep.subr.mxu0 0.0
        %1823 = vmatpush1.msra.mxu0 0.0
        %1824 = vmatprep.subr.mxu0 0.0
        %1825 = vmatpush1.msra.mxu0 0.0
        %1826 = vmatprep.subr.mxu0 0.0
        %1827 = vmatpush1.msra.mxu0 0.0
        %1828 = vmatprep.subr.mxu0 0.0
        %1829 = vmatpush1.msra.mxu0 0.0
        %1830 = vmatprep.subr.mxu0 0.0
        %1831 = vmatpush1.msra.mxu0 0.0
        %1832 = vmatprep.mubr.f32.mxu0 0.0
        %1833 = vmatmul.mubr.f32.gmra.mrb[0].mxu0 %v1762
        %v1834 = vpop.f32.mrb[0].mxu0
        %v1835 = vadd.f32 %v1613, %v1834
        %v1836 = vpop.f32.mrb[0].mxu0
        %1837 = vmatprep.mubr.f32.mxu0 0.0
        %1838 = vmatmul.mubr.f32.gmra.mrb[0].mxu0 %v1764
        %v1839 = vpop.f32.mrb[0].mxu0
        %v1840 = vadd.f32 %v1613, %v1839
        %v1841 = vpop.f32.mrb[0].mxu0
        %1842 = vmatprep.mubr.f32.mxu0 0.0
        %1843 = vmatmul.mubr.f32.gmra.mrb[0].mxu0 %v1766
        %v1844 = vpop.f32.mrb[0].mxu0
        %v1845 = vadd.f32 %v1613, %v1844
        %v1846 = vpop.f32.mrb[0].mxu0
        %1847 = vdwg.mxu0
        %v1848 = vld [vmem:[%s1227] sm:$0xff]
        %v1849 = vld [vmem:[%s1227 + $0x8] sm:$0xff]
        %v1850 = vld [vmem:[%s1227 + $0x10] sm:$0xff]
        %v1851 = vld [vmem:[%s1227 + $0x18] sm:$0xff]
        %v1852 = vld [vmem:[%s1230] sm:$0x1]
        %v1854 = vlaneseq
        %v1855 = vshrl.u32 %v1854, 7
        %v1856 = vsub.s32 0, %v1855
        %v1857 = vrot.slane %v1852, %v1856
        %1859 = vmatprep.subr.mxu0 0.0
        %1860 = vmatpush1.msra.mxu0 %v1848
        %1861 = vmatprep.subr.mxu0 0.0
        %1862 = vmatpush1.msra.mxu0 %v1849
        %1863 = vmatprep.subr.mxu0 0.0
        %1864 = vmatpush1.msra.mxu0 %v1850
        %1865 = vmatprep.subr.mxu0 0.0
        %1866 = vmatpush1.msra.mxu0 %v1851
        %1867 = vmatprep.subr.mxu0 0.0
        %1868 = vmatpush1.msra.mxu0 0.0
        %1869 = vmatprep.subr.mxu0 0.0
        %1870 = vmatpush1.msra.mxu0 0.0
        %1871 = vmatprep.subr.mxu0 0.0
        %1872 = vmatpush1.msra.mxu0 0.0
        %1873 = vmatprep.subr.mxu0 0.0
        %1874 = vmatpush1.msra.mxu0 0.0
        %1875 = vmatprep.subr.mxu0 0.0
        %1876 = vmatpush1.msra.mxu0 0.0
        %1877 = vmatprep.subr.mxu0 0.0
        %1878 = vmatpush1.msra.mxu0 0.0
        %1879 = vmatprep.subr.mxu0 0.0
        %1880 = vmatpush1.msra.mxu0 0.0
        %1881 = vmatprep.subr.mxu0 0.0
        %1882 = vmatpush1.msra.mxu0 0.0
        %1883 = vmatprep.subr.mxu0 0.0
        %1884 = vmatpush1.msra.mxu0 0.0
        %1885 = vmatprep.subr.mxu0 0.0
        %1886 = vmatpush1.msra.mxu0 0.0
        %1887 = vmatprep.subr.mxu0 0.0
        %1888 = vmatpush1.msra.mxu0 0.0
        %1889 = vmatprep.subr.mxu0 0.0
        %1890 = vmatpush1.msra.mxu0 0.0
        %1891 = vmatprep.subr.mxu0 0.0
        %1892 = vmatpush1.msra.mxu0 0.0
        %1893 = vmatprep.subr.mxu0 0.0
        %1894 = vmatpush1.msra.mxu0 0.0
        %1895 = vmatprep.subr.mxu0 0.0
        %1896 = vmatpush1.msra.mxu0 0.0
        %1897 = vmatprep.subr.mxu0 0.0
        %1898 = vmatpush1.msra.mxu0 0.0
        %1899 = vmatprep.subr.mxu0 0.0
        %1900 = vmatpush1.msra.mxu0 0.0
        %1901 = vmatprep.subr.mxu0 0.0
        %1902 = vmatpush1.msra.mxu0 0.0
        %1903 = vmatprep.subr.mxu0 0.0
        %1904 = vmatpush1.msra.mxu0 0.0
        %1905 = vmatprep.subr.mxu0 0.0
        %1906 = vmatpush1.msra.mxu0 0.0
        %1907 = vmatprep.subr.mxu0 0.0
        %1908 = vmatpush1.msra.mxu0 0.0
        %1909 = vmatprep.subr.mxu0 0.0
        %1910 = vmatpush1.msra.mxu0 0.0
        %1911 = vmatprep.subr.mxu0 0.0
        %1912 = vmatpush1.msra.mxu0 0.0
        %1913 = vmatprep.subr.mxu0 0.0
        %1914 = vmatpush1.msra.mxu0 0.0
        %1915 = vmatprep.subr.mxu0 0.0
        %1916 = vmatpush1.msra.mxu0 0.0
        %1917 = vmatprep.subr.mxu0 0.0
        %1918 = vmatpush1.msra.mxu0 0.0
        %1919 = vmatprep.subr.mxu0 0.0
        %1920 = vmatpush1.msra.mxu0 0.0
        %1921 = vmatprep.subr.mxu0 0.0
        %1922 = vmatpush1.msra.mxu0 0.0
        %1923 = vmatprep.mubr.f32.mxu0 0.0
        %1924 = vmatmul.mubr.f32.gmra.mrb[0].mxu0 %v1762
        %v1925 = vpop.f32.mrb[0].mxu0
        %v1926 = vadd.f32 %v1857, %v1925
        %v1927 = vpop.f32.mrb[0].mxu0
        %1928 = vmatprep.mubr.f32.mxu0 0.0
        %1929 = vmatmul.mubr.f32.gmra.mrb[0].mxu0 %v1764
        %v1930 = vpop.f32.mrb[0].mxu0
        %v1931 = vadd.f32 %v1857, %v1930
        %v1932 = vpop.f32.mrb[0].mxu0
        %1933 = vmatprep.mubr.f32.mxu0 0.0
        %1934 = vmatmul.mubr.f32.gmra.mrb[0].mxu0 %v1766
        %v1935 = vpop.f32.mrb[0].mxu0
        %v1936 = vadd.f32 %v1857, %v1935
        %v1937 = vpop.f32.mrb[0].mxu0
        %1938 = vdwg.mxu0
        %v1940 = vcombine.high %v1601, %v1601
        %v1942 = vunpack.c.l.s4 1966171168
        %v1943 = vunpack.c.0.s8 %v1942
        %v1944 = vlaneseq
        %v1945 = vshrl.u32 %v1944, 7
        %v1946 = vsub.s32 %v1943, %v1945
        %v1947 = vrot.slane %v1601, %v1946
        %v1949 = vunpack.c.l.s4 1966171168
        %v1950 = vunpack.c.0.s8 %v1949
        %v1951 = vlaneseq
        %v1952 = vshrl.u32 %v1951, 7
        %v1953 = vsub.s32 %v1950, %v1952
        %v1954 = vrot.slane %v1940, %v1953
        %v1955 = vcombine.high %v1947, %v1947
        %v1956 = vcombine.high %v1954, %v1954
        %v1958 = vunpack.c.l.s4 1966171168
        %v1959 = vunpack.c.0.s8 %v1958
        %v1960 = vlaneseq
        %v1961 = vshrl.u32 %v1960, 7
        %v1962 = vsub.s32 %v1959, %v1961
        %v1963 = vrot.slane %v1947, %v1962
        %v1965 = vunpack.c.l.s4 1966171168
        %v1966 = vunpack.c.0.s8 %v1965
        %v1967 = vlaneseq
        %v1968 = vshrl.u32 %v1967, 7
        %v1969 = vsub.s32 %v1966, %v1968
        %v1970 = vrot.slane %v1954, %v1969
        %v1972 = vunpack.c.l.s4 1966171168
        %v1973 = vunpack.c.0.s8 %v1972
        %v1974 = vlaneseq
        %v1975 = vshrl.u32 %v1974, 7
        %v1976 = vsub.s32 %v1973, %v1975
        %v1977 = vrot.slane %v1955, %v1976
        %v1979 = vunpack.c.l.s4 1966171168
        %v1980 = vunpack.c.0.s8 %v1979
        %v1981 = vlaneseq
        %v1982 = vshrl.u32 %v1981, 7
        %v1983 = vsub.s32 %v1980, %v1982
        %v1984 = vrot.slane %v1956, %v1983
        %v1985 = vcombine.high %v1963, %v1963
        %v1986 = vcombine.high %v1970, %v1970
        %v1987 = vcombine.high %v1977, %v1977
        %v1988 = vcombine.high %v1984, %v1984
        %v1992 = vcombine.high %v1835, %v1835
        %v1994 = vunpack.c.l.s4 1966171168
        %v1995 = vunpack.c.0.s8 %v1994
        %v1996 = vlaneseq
        %v1997 = vshrl.u32 %v1996, 7
        %v1998 = vsub.s32 %v1995, %v1997
        %v1999 = vrot.slane %v1835, %v1998
        %v2001 = vunpack.c.l.s4 1966171168
        %v2002 = vunpack.c.0.s8 %v2001
        %v2003 = vlaneseq
        %v2004 = vshrl.u32 %v2003, 7
        %v2005 = vsub.s32 %v2002, %v2004
        %v2006 = vrot.slane %v1992, %v2005
        %v2007 = vcombine.high %v1999, %v1999
        %v2008 = vcombine.high %v2006, %v2006
        %v2010 = vunpack.c.l.s4 1966171168
        %v2011 = vunpack.c.0.s8 %v2010
        %v2012 = vlaneseq
        %v2013 = vshrl.u32 %v2012, 7
        %v2014 = vsub.s32 %v2011, %v2013
        %v2015 = vrot.slane %v1999, %v2014
        %v2017 = vunpack.c.l.s4 1966171168
        %v2018 = vunpack.c.0.s8 %v2017
        %v2019 = vlaneseq
        %v2020 = vshrl.u32 %v2019, 7
        %v2021 = vsub.s32 %v2018, %v2020
        %v2022 = vrot.slane %v2006, %v2021
        %v2024 = vunpack.c.l.s4 1966171168
        %v2025 = vunpack.c.0.s8 %v2024
        %v2026 = vlaneseq
        %v2027 = vshrl.u32 %v2026, 7
        %v2028 = vsub.s32 %v2025, %v2027
        %v2029 = vrot.slane %v2007, %v2028
        %v2031 = vunpack.c.l.s4 1966171168
        %v2032 = vunpack.c.0.s8 %v2031
        %v2033 = vlaneseq
        %v2034 = vshrl.u32 %v2033, 7
        %v2035 = vsub.s32 %v2032, %v2034
        %v2036 = vrot.slane %v2008, %v2035
        %v2037 = vcombine.high %v2015, %v2015
        %v2038 = vcombine.high %v2022, %v2022
        %v2039 = vcombine.high %v2029, %v2029
        %v2040 = vcombine.high %v2036, %v2036
        %v2041 = vcombine.high %v1840, %v1840
        %v2043 = vunpack.c.l.s4 1966171168
        %v2044 = vunpack.c.0.s8 %v2043
        %v2045 = vlaneseq
        %v2046 = vshrl.u32 %v2045, 7
        %v2047 = vsub.s32 %v2044, %v2046
        %v2048 = vrot.slane %v1840, %v2047
        %v2050 = vunpack.c.l.s4 1966171168
        %v2051 = vunpack.c.0.s8 %v2050
        %v2052 = vlaneseq
        %v2053 = vshrl.u32 %v2052, 7
        %v2054 = vsub.s32 %v2051, %v2053
        %v2055 = vrot.slane %v2041, %v2054
        %v2056 = vcombine.high %v2048, %v2048
        %v2057 = vcombine.high %v2055, %v2055
        %v2059 = vunpack.c.l.s4 1966171168
        %v2060 = vunpack.c.0.s8 %v2059
        %v2061 = vlaneseq
        %v2062 = vshrl.u32 %v2061, 7
        %v2063 = vsub.s32 %v2060, %v2062
        %v2064 = vrot.slane %v2048, %v2063
        %v2066 = vunpack.c.l.s4 1966171168
        %v2067 = vunpack.c.0.s8 %v2066
        %v2068 = vlaneseq
        %v2069 = vshrl.u32 %v2068, 7
        %v2070 = vsub.s32 %v2067, %v2069
        %v2071 = vrot.slane %v2055, %v2070
        %v2073 = vunpack.c.l.s4 1966171168
        %v2074 = vunpack.c.0.s8 %v2073
        %v2075 = vlaneseq
        %v2076 = vshrl.u32 %v2075, 7
        %v2077 = vsub.s32 %v2074, %v2076
        %v2078 = vrot.slane %v2056, %v2077
        %v2080 = vunpack.c.l.s4 1966171168
        %v2081 = vunpack.c.0.s8 %v2080
        %v2082 = vlaneseq
        %v2083 = vshrl.u32 %v2082, 7
        %v2084 = vsub.s32 %v2081, %v2083
        %v2085 = vrot.slane %v2057, %v2084
        %v2086 = vcombine.high %v2064, %v2064
        %v2087 = vcombine.high %v2071, %v2071
        %v2088 = vcombine.high %v2078, %v2078
        %v2089 = vcombine.high %v2085, %v2085
        %v2090 = vcombine.high %v1845, %v1845
        %v2092 = vunpack.c.l.s4 1966171168
        %v2093 = vunpack.c.0.s8 %v2092
        %v2094 = vlaneseq
        %v2095 = vshrl.u32 %v2094, 7
        %v2096 = vsub.s32 %v2093, %v2095
        %v2097 = vrot.slane %v1845, %v2096
        %v2099 = vunpack.c.l.s4 1966171168
        %v2100 = vunpack.c.0.s8 %v2099
        %v2101 = vlaneseq
        %v2102 = vshrl.u32 %v2101, 7
        %v2103 = vsub.s32 %v2100, %v2102
        %v2104 = vrot.slane %v2090, %v2103
        %v2105 = vcombine.high %v2097, %v2097
        %v2106 = vcombine.high %v2104, %v2104
        %v2108 = vunpack.c.l.s4 1966171168
        %v2109 = vunpack.c.0.s8 %v2108
        %v2110 = vlaneseq
        %v2111 = vshrl.u32 %v2110, 7
        %v2112 = vsub.s32 %v2109, %v2111
        %v2113 = vrot.slane %v2097, %v2112
        %v2115 = vunpack.c.l.s4 1966171168
        %v2116 = vunpack.c.0.s8 %v2115
        %v2117 = vlaneseq
        %v2118 = vshrl.u32 %v2117, 7
        %v2119 = vsub.s32 %v2116, %v2118
        %v2120 = vrot.slane %v2104, %v2119
        %v2122 = vunpack.c.l.s4 1966171168
        %v2123 = vunpack.c.0.s8 %v2122
        %v2124 = vlaneseq
        %v2125 = vshrl.u32 %v2124, 7
        %v2126 = vsub.s32 %v2123, %v2125
        %v2127 = vrot.slane %v2105, %v2126
        %v2129 = vunpack.c.l.s4 1966171168
        %v2130 = vunpack.c.0.s8 %v2129
        %v2131 = vlaneseq
        %v2132 = vshrl.u32 %v2131, 7
        %v2133 = vsub.s32 %v2130, %v2132
        %v2134 = vrot.slane %v2106, %v2133
        %v2135 = vcombine.high %v2113, %v2113
        %v2136 = vcombine.high %v2120, %v2120
        %v2137 = vcombine.high %v2127, %v2127
        %v2138 = vcombine.high %v2134, %v2134
        %v2139 = vlaneseq
        %v2140 = vshrl.u32 %v2139, 7
        %v2141 = vsub.s32 0, %v2140
        %v2142 = vrot.slane %v1963, %v2141
        %v2143 = vlaneseq
        %v2144 = vshrl.u32 %v2143, 7
        %v2145 = vsub.s32 0, %v2144
        %v2146 = vrot.slane %v1977, %v2145
        %v2147 = vlaneseq
        %v2148 = vshrl.u32 %v2147, 7
        %v2149 = vsub.s32 0, %v2148
        %v2150 = vrot.slane %v1985, %v2149
        %v2151 = vlaneseq
        %v2152 = vshrl.u32 %v2151, 7
        %v2153 = vsub.s32 0, %v2152
        %v2154 = vrot.slane %v1987, %v2153
        %v2155 = vlaneseq
        %v2156 = vshrl.u32 %v2155, 7
        %v2157 = vsub.s32 0, %v2156
        %v2158 = vrot.slane %v1970, %v2157
        %v2159 = vlaneseq
        %v2160 = vshrl.u32 %v2159, 7
        %v2161 = vsub.s32 0, %v2160
        %v2162 = vrot.slane %v1984, %v2161
        %v2163 = vlaneseq
        %v2164 = vshrl.u32 %v2163, 7
        %v2165 = vsub.s32 0, %v2164
        %v2166 = vrot.slane %v1986, %v2165
        %v2167 = vlaneseq
        %v2168 = vshrl.u32 %v2167, 7
        %v2169 = vsub.s32 0, %v2168
        %v2170 = vrot.slane %v1988, %v2169
        %v2179 = vcombine.low %v2015, %v2029
        %v2181 = vunpack.c.l.s4 1966171168
        %v2182 = vunpack.c.0.s8 %v2181
        %v2183 = vlaneseq
        %v2184 = vshrl.u32 %v2183, 7
        %v2185 = vsub.s32 %v2182, %v2184
        %v2186 = vrot.slane %v2179, %v2185
        %v2188 = vunpack.c.l.s4 1966171168
        %v2189 = vunpack.c.0.s8 %v2188
        %v2190 = vlaneseq
        %v2191 = vshrl.u32 %v2190, 7
        %v2192 = vsub.s32 %v2189, %v2191
        %v2193 = vrot.slane %v2037, %v2192
        %v2194 = vcombine.low %v2186, %v2193
        %v2196 = vunpack.c.l.s4 1966171168
        %v2197 = vunpack.c.0.s8 %v2196
        %v2198 = vlaneseq
        %v2199 = vshrl.u32 %v2198, 7
        %v2200 = vsub.s32 %v2197, %v2199
        %v2201 = vrot.slane %v2194, %v2200
        %v2202 = vcombine.low %v2039, %v2022
        %v2204 = vunpack.c.l.s4 1966171168
        %v2205 = vunpack.c.0.s8 %v2204
        %v2206 = vlaneseq
        %v2207 = vshrl.u32 %v2206, 7
        %v2208 = vsub.s32 %v2205, %v2207
        %v2209 = vrot.slane %v2202, %v2208
        %v2211 = vunpack.c.l.s4 1966171168
        %v2212 = vunpack.c.0.s8 %v2211
        %v2213 = vlaneseq
        %v2214 = vshrl.u32 %v2213, 7
        %v2215 = vsub.s32 %v2212, %v2214
        %v2216 = vrot.slane %v2036, %v2215
        %v2217 = vcombine.low %v2209, %v2216
        %v2219 = vunpack.c.l.s4 1966171168
        %v2220 = vunpack.c.0.s8 %v2219
        %v2221 = vlaneseq
        %v2222 = vshrl.u32 %v2221, 7
        %v2223 = vsub.s32 %v2220, %v2222
        %v2224 = vrot.slane %v2217, %v2223
        %v2225 = vcombine.low %v2038, %v2040
        %v2227 = vunpack.c.l.s4 1966171168
        %v2228 = vunpack.c.0.s8 %v2227
        %v2229 = vlaneseq
        %v2230 = vshrl.u32 %v2229, 7
        %v2231 = vsub.s32 %v2228, %v2230
        %v2232 = vrot.slane %v2225, %v2231
        %v2234 = vunpack.c.l.s4 1966171168
        %v2235 = vunpack.c.0.s8 %v2234
        %v2236 = vlaneseq
        %v2237 = vshrl.u32 %v2236, 7
        %v2238 = vsub.s32 %v2235, %v2237
        %v2239 = vrot.slane %v2064, %v2238
        %v2240 = vcombine.low %v2232, %v2239
        %v2242 = vunpack.c.l.s4 1966171168
        %v2243 = vunpack.c.0.s8 %v2242
        %v2244 = vlaneseq
        %v2245 = vshrl.u32 %v2244, 7
        %v2246 = vsub.s32 %v2243, %v2245
        %v2247 = vrot.slane %v2240, %v2246
        %v2248 = vcombine.low %v2078, %v2086
        %v2250 = vunpack.c.l.s4 1966171168
        %v2251 = vunpack.c.0.s8 %v2250
        %v2252 = vlaneseq
        %v2253 = vshrl.u32 %v2252, 7
        %v2254 = vsub.s32 %v2251, %v2253
        %v2255 = vrot.slane %v2248, %v2254
        %v2257 = vunpack.c.l.s4 1966171168
        %v2258 = vunpack.c.0.s8 %v2257
        %v2259 = vlaneseq
        %v2260 = vshrl.u32 %v2259, 7
        %v2261 = vsub.s32 %v2258, %v2260
        %v2262 = vrot.slane %v2088, %v2261
        %v2263 = vcombine.low %v2255, %v2262
        %v2265 = vunpack.c.l.s4 1966171168
        %v2266 = vunpack.c.0.s8 %v2265
        %v2267 = vlaneseq
        %v2268 = vshrl.u32 %v2267, 7
        %v2269 = vsub.s32 %v2266, %v2268
        %v2270 = vrot.slane %v2263, %v2269
        %v2271 = vcombine.low %v2071, %v2085
        %v2273 = vunpack.c.l.s4 1966171168
        %v2274 = vunpack.c.0.s8 %v2273
        %v2275 = vlaneseq
        %v2276 = vshrl.u32 %v2275, 7
        %v2277 = vsub.s32 %v2274, %v2276
        %v2278 = vrot.slane %v2271, %v2277
        %v2280 = vunpack.c.l.s4 1966171168
        %v2281 = vunpack.c.0.s8 %v2280
        %v2282 = vlaneseq
        %v2283 = vshrl.u32 %v2282, 7
        %v2284 = vsub.s32 %v2281, %v2283
        %v2285 = vrot.slane %v2087, %v2284
        %v2286 = vcombine.low %v2278, %v2285
        %v2288 = vunpack.c.l.s4 1966171168
        %v2289 = vunpack.c.0.s8 %v2288
        %v2290 = vlaneseq
        %v2291 = vshrl.u32 %v2290, 7
        %v2292 = vsub.s32 %v2289, %v2291
        %v2293 = vrot.slane %v2286, %v2292
        %v2294 = vcombine.low %v2089, %v2113
        %v2296 = vunpack.c.l.s4 1966171168
        %v2297 = vunpack.c.0.s8 %v2296
        %v2298 = vlaneseq
        %v2299 = vshrl.u32 %v2298, 7
        %v2300 = vsub.s32 %v2297, %v2299
        %v2301 = vrot.slane %v2294, %v2300
        %v2303 = vunpack.c.l.s4 1966171168
        %v2304 = vunpack.c.0.s8 %v2303
        %v2305 = vlaneseq
        %v2306 = vshrl.u32 %v2305, 7
        %v2307 = vsub.s32 %v2304, %v2306
        %v2308 = vrot.slane %v2127, %v2307
        %v2309 = vcombine.low %v2301, %v2308
        %v2311 = vunpack.c.l.s4 1966171168
        %v2312 = vunpack.c.0.s8 %v2311
        %v2313 = vlaneseq
        %v2314 = vshrl.u32 %v2313, 7
        %v2315 = vsub.s32 %v2312, %v2314
        %v2316 = vrot.slane %v2309, %v2315
        %v2317 = vcombine.low %v2135, %v2137
        %v2319 = vunpack.c.l.s4 1966171168
        %v2320 = vunpack.c.0.s8 %v2319
        %v2321 = vlaneseq
        %v2322 = vshrl.u32 %v2321, 7
        %v2323 = vsub.s32 %v2320, %v2322
        %v2324 = vrot.slane %v2317, %v2323
        %v2326 = vunpack.c.l.s4 1966171168
        %v2327 = vunpack.c.0.s8 %v2326
        %v2328 = vlaneseq
        %v2329 = vshrl.u32 %v2328, 7
        %v2330 = vsub.s32 %v2327, %v2329
        %v2331 = vrot.slane %v2120, %v2330
        %v2332 = vcombine.low %v2324, %v2331
        %v2334 = vunpack.c.l.s4 1966171168
        %v2335 = vunpack.c.0.s8 %v2334
        %v2336 = vlaneseq
        %v2337 = vshrl.u32 %v2336, 7
        %v2338 = vsub.s32 %v2335, %v2337
        %v2339 = vrot.slane %v2332, %v2338
        %v2340 = vcombine.low %v2134, %v2136
        %v2342 = vunpack.c.l.s4 1966171168
        %v2343 = vunpack.c.0.s8 %v2342
        %v2344 = vlaneseq
        %v2345 = vshrl.u32 %v2344, 7
        %v2346 = vsub.s32 %v2343, %v2345
        %v2347 = vrot.slane %v2340, %v2346
        %v2349 = vunpack.c.l.s4 1966171168
        %v2350 = vunpack.c.0.s8 %v2349
        %v2351 = vlaneseq
        %v2352 = vshrl.u32 %v2351, 7
        %v2353 = vsub.s32 %v2350, %v2352
        %v2354 = vrot.slane %v2138, %v2353
        %v2355 = vcombine.low %v2347, %v2354
        %v2357 = vunpack.c.l.s4 1966171168
        %v2358 = vunpack.c.0.s8 %v2357
        %v2359 = vlaneseq
        %v2360 = vshrl.u32 %v2359, 7
        %v2361 = vsub.s32 %v2358, %v2360
        %v2362 = vrot.slane %v2355, %v2361
        %v2371 = vmul.f32 %v2142, %v2201
        %v2372 = vmul.f32 %v2146, %v2224
        %v2373 = vmul.f32 %v2150, %v2247
        %v2374 = vmul.f32 %v2154, %v2270
        %v2375 = vmul.f32 %v2158, %v2293
        %v2376 = vmul.f32 %v2162, %v2316
        %v2377 = vmul.f32 %v2166, %v2339
        %v2378 = vmul.f32 %v2170, %v2362
        %v2388 = vunpack.c.l.s4 1966171168
        %v2389 = vunpack.c.0.s8 %v2388
        %v2390 = vlaneseq
        %v2391 = vshrl.u32 %v2390, 7
        %v2392 = vsub.s32 %v2389, %v2391
        %v2393 = vrot.slane %v2371, %v2392
        %v2394 = vcombine.high %v2393, %v2393
        %v2396 = vunpack.c.l.s4 1966171168
        %v2397 = vunpack.c.0.s8 %v2396
        %v2398 = vlaneseq
        %v2399 = vshrl.u32 %v2398, 7
        %v2400 = vsub.s32 %v2397, %v2399
        %v2401 = vrot.slane %v2393, %v2400
        %v2403 = vunpack.c.l.s4 1966171168
        %v2404 = vunpack.c.0.s8 %v2403
        %v2405 = vlaneseq
        %v2406 = vshrl.u32 %v2405, 7
        %v2407 = vsub.s32 %v2404, %v2406
        %v2408 = vrot.slane %v2394, %v2407
        %v2409 = vcombine.high %v2401, %v2401
        %v2411 = vunpack.c.l.s4 1966171168
        %v2412 = vunpack.c.0.s8 %v2411
        %v2413 = vlaneseq
        %v2414 = vshrl.u32 %v2413, 7
        %v2415 = vsub.s32 %v2412, %v2414
        %v2416 = vrot.slane %v2372, %v2415
        %v2417 = vcombine.high %v2416, %v2416
        %v2419 = vunpack.c.l.s4 1966171168
        %v2420 = vunpack.c.0.s8 %v2419
        %v2421 = vlaneseq
        %v2422 = vshrl.u32 %v2421, 7
        %v2423 = vsub.s32 %v2420, %v2422
        %v2424 = vrot.slane %v2416, %v2423
        %v2426 = vunpack.c.l.s4 1966171168
        %v2427 = vunpack.c.0.s8 %v2426
        %v2428 = vlaneseq
        %v2429 = vshrl.u32 %v2428, 7
        %v2430 = vsub.s32 %v2427, %v2429
        %v2431 = vrot.slane %v2417, %v2430
        %v2432 = vcombine.high %v2424, %v2424
        %v2434 = vunpack.c.l.s4 1966171168
        %v2435 = vunpack.c.0.s8 %v2434
        %v2436 = vlaneseq
        %v2437 = vshrl.u32 %v2436, 7
        %v2438 = vsub.s32 %v2435, %v2437
        %v2439 = vrot.slane %v2373, %v2438
        %v2440 = vcombine.high %v2439, %v2439
        %v2442 = vunpack.c.l.s4 1966171168
        %v2443 = vunpack.c.0.s8 %v2442
        %v2444 = vlaneseq
        %v2445 = vshrl.u32 %v2444, 7
        %v2446 = vsub.s32 %v2443, %v2445
        %v2447 = vrot.slane %v2439, %v2446
        %v2449 = vunpack.c.l.s4 1966171168
        %v2450 = vunpack.c.0.s8 %v2449
        %v2451 = vlaneseq
        %v2452 = vshrl.u32 %v2451, 7
        %v2453 = vsub.s32 %v2450, %v2452
        %v2454 = vrot.slane %v2440, %v2453
        %v2455 = vcombine.high %v2447, %v2447
        %v2457 = vunpack.c.l.s4 1966171168
        %v2458 = vunpack.c.0.s8 %v2457
        %v2459 = vlaneseq
        %v2460 = vshrl.u32 %v2459, 7
        %v2461 = vsub.s32 %v2458, %v2460
        %v2462 = vrot.slane %v2374, %v2461
        %v2463 = vcombine.high %v2462, %v2462
        %v2465 = vunpack.c.l.s4 1966171168
        %v2466 = vunpack.c.0.s8 %v2465
        %v2467 = vlaneseq
        %v2468 = vshrl.u32 %v2467, 7
        %v2469 = vsub.s32 %v2466, %v2468
        %v2470 = vrot.slane %v2462, %v2469
        %v2472 = vunpack.c.l.s4 1966171168
        %v2473 = vunpack.c.0.s8 %v2472
        %v2474 = vlaneseq
        %v2475 = vshrl.u32 %v2474, 7
        %v2476 = vsub.s32 %v2473, %v2475
        %v2477 = vrot.slane %v2463, %v2476
        %v2478 = vcombine.high %v2470, %v2470
        %v2480 = vunpack.c.l.s4 1966171168
        %v2481 = vunpack.c.0.s8 %v2480
        %v2482 = vlaneseq
        %v2483 = vshrl.u32 %v2482, 7
        %v2484 = vsub.s32 %v2481, %v2483
        %v2485 = vrot.slane %v2375, %v2484
        %v2486 = vcombine.high %v2485, %v2485
        %v2488 = vunpack.c.l.s4 1966171168
        %v2489 = vunpack.c.0.s8 %v2488
        %v2490 = vlaneseq
        %v2491 = vshrl.u32 %v2490, 7
        %v2492 = vsub.s32 %v2489, %v2491
        %v2493 = vrot.slane %v2485, %v2492
        %v2495 = vunpack.c.l.s4 1966171168
        %v2496 = vunpack.c.0.s8 %v2495
        %v2497 = vlaneseq
        %v2498 = vshrl.u32 %v2497, 7
        %v2499 = vsub.s32 %v2496, %v2498
        %v2500 = vrot.slane %v2486, %v2499
        %v2501 = vcombine.high %v2493, %v2493
        %v2503 = vunpack.c.l.s4 1966171168
        %v2504 = vunpack.c.0.s8 %v2503
        %v2505 = vlaneseq
        %v2506 = vshrl.u32 %v2505, 7
        %v2507 = vsub.s32 %v2504, %v2506
        %v2508 = vrot.slane %v2376, %v2507
        %v2509 = vcombine.high %v2508, %v2508
        %v2511 = vunpack.c.l.s4 1966171168
        %v2512 = vunpack.c.0.s8 %v2511
        %v2513 = vlaneseq
        %v2514 = vshrl.u32 %v2513, 7
        %v2515 = vsub.s32 %v2512, %v2514
        %v2516 = vrot.slane %v2508, %v2515
        %v2518 = vunpack.c.l.s4 1966171168
        %v2519 = vunpack.c.0.s8 %v2518
        %v2520 = vlaneseq
        %v2521 = vshrl.u32 %v2520, 7
        %v2522 = vsub.s32 %v2519, %v2521
        %v2523 = vrot.slane %v2509, %v2522
        %v2524 = vcombine.high %v2516, %v2516
        %v2526 = vunpack.c.l.s4 1966171168
        %v2527 = vunpack.c.0.s8 %v2526
        %v2528 = vlaneseq
        %v2529 = vshrl.u32 %v2528, 7
        %v2530 = vsub.s32 %v2527, %v2529
        %v2531 = vrot.slane %v2377, %v2530
        %v2532 = vcombine.high %v2531, %v2531
        %v2534 = vunpack.c.l.s4 1966171168
        %v2535 = vunpack.c.0.s8 %v2534
        %v2536 = vlaneseq
        %v2537 = vshrl.u32 %v2536, 7
        %v2538 = vsub.s32 %v2535, %v2537
        %v2539 = vrot.slane %v2531, %v2538
        %v2541 = vunpack.c.l.s4 1966171168
        %v2542 = vunpack.c.0.s8 %v2541
        %v2543 = vlaneseq
        %v2544 = vshrl.u32 %v2543, 7
        %v2545 = vsub.s32 %v2542, %v2544
        %v2546 = vrot.slane %v2532, %v2545
        %v2547 = vcombine.high %v2539, %v2539
        %v2549 = vunpack.c.l.s4 1966171168
        %v2550 = vunpack.c.0.s8 %v2549
        %v2551 = vlaneseq
        %v2552 = vshrl.u32 %v2551, 7
        %v2553 = vsub.s32 %v2550, %v2552
        %v2554 = vrot.slane %v2378, %v2553
        %v2555 = vcombine.high %v2554, %v2554
        %v2557 = vunpack.c.l.s4 1966171168
        %v2558 = vunpack.c.0.s8 %v2557
        %v2559 = vlaneseq
        %v2560 = vshrl.u32 %v2559, 7
        %v2561 = vsub.s32 %v2558, %v2560
        %v2562 = vrot.slane %v2554, %v2561
        %v2564 = vunpack.c.l.s4 1966171168
        %v2565 = vunpack.c.0.s8 %v2564
        %v2566 = vlaneseq
        %v2567 = vshrl.u32 %v2566, 7
        %v2568 = vsub.s32 %v2565, %v2567
        %v2569 = vrot.slane %v2555, %v2568
        %v2570 = vcombine.high %v2562, %v2562
        %v2571 = vcombine.low %v2401, %v2408
        %v2572 = vcombine.low %v2409, %v2424
        %v2573 = vcombine.low %v2431, %v2432
        %v2574 = vcombine.low %v2447, %v2454
        %v2576 = vunpack.c.l.s4 1966171168
        %v2577 = vunpack.c.0.s8 %v2576
        %v2578 = vlaneseq
        %v2579 = vshrl.u32 %v2578, 7
        %v2580 = vsub.s32 %v2577, %v2579
        %v2581 = vrot.slane %v2571, %v2580
        %v2583 = vunpack.c.l.s4 1966171168
        %v2584 = vunpack.c.0.s8 %v2583
        %v2585 = vlaneseq
        %v2586 = vshrl.u32 %v2585, 7
        %v2587 = vsub.s32 %v2584, %v2586
        %v2588 = vrot.slane %v2572, %v2587
        %v2590 = vunpack.c.l.s4 1966171168
        %v2591 = vunpack.c.0.s8 %v2590
        %v2592 = vlaneseq
        %v2593 = vshrl.u32 %v2592, 7
        %v2594 = vsub.s32 %v2591, %v2593
        %v2595 = vrot.slane %v2573, %v2594
        %v2597 = vunpack.c.l.s4 1966171168
        %v2598 = vunpack.c.0.s8 %v2597
        %v2599 = vlaneseq
        %v2600 = vshrl.u32 %v2599, 7
        %v2601 = vsub.s32 %v2598, %v2600
        %v2602 = vrot.slane %v2574, %v2601
        %v2603 = vcombine.low %v2581, %v2588
        %v2604 = vcombine.low %v2595, %v2602
        %v2606 = vunpack.c.l.s4 1966171168
        %v2607 = vunpack.c.0.s8 %v2606
        %v2608 = vlaneseq
        %v2609 = vshrl.u32 %v2608, 7
        %v2610 = vsub.s32 %v2607, %v2609
        %v2611 = vrot.slane %v2603, %v2610
        %v2613 = vunpack.c.l.s4 1966171168
        %v2614 = vunpack.c.0.s8 %v2613
        %v2615 = vlaneseq
        %v2616 = vshrl.u32 %v2615, 7
        %v2617 = vsub.s32 %v2614, %v2616
        %v2618 = vrot.slane %v2604, %v2617
        %v2619 = vcombine.low %v2611, %v2618
        %v2620 = vcombine.low %v2455, %v2470
        %v2621 = vcombine.low %v2477, %v2478
        %v2622 = vcombine.low %v2493, %v2500
        %v2623 = vcombine.low %v2501, %v2516
        %v2625 = vunpack.c.l.s4 1966171168
        %v2626 = vunpack.c.0.s8 %v2625
        %v2627 = vlaneseq
        %v2628 = vshrl.u32 %v2627, 7
        %v2629 = vsub.s32 %v2626, %v2628
        %v2630 = vrot.slane %v2620, %v2629
        %v2632 = vunpack.c.l.s4 1966171168
        %v2633 = vunpack.c.0.s8 %v2632
        %v2634 = vlaneseq
        %v2635 = vshrl.u32 %v2634, 7
        %v2636 = vsub.s32 %v2633, %v2635
        %v2637 = vrot.slane %v2621, %v2636
        %v2639 = vunpack.c.l.s4 1966171168
        %v2640 = vunpack.c.0.s8 %v2639
        %v2641 = vlaneseq
        %v2642 = vshrl.u32 %v2641, 7
        %v2643 = vsub.s32 %v2640, %v2642
        %v2644 = vrot.slane %v2622, %v2643
        %v2646 = vunpack.c.l.s4 1966171168
        %v2647 = vunpack.c.0.s8 %v2646
        %v2648 = vlaneseq
        %v2649 = vshrl.u32 %v2648, 7
        %v2650 = vsub.s32 %v2647, %v2649
        %v2651 = vrot.slane %v2623, %v2650
        %v2652 = vcombine.low %v2630, %v2637
        %v2653 = vcombine.low %v2644, %v2651
        %v2655 = vunpack.c.l.s4 1966171168
        %v2656 = vunpack.c.0.s8 %v2655
        %v2657 = vlaneseq
        %v2658 = vshrl.u32 %v2657, 7
        %v2659 = vsub.s32 %v2656, %v2658
        %v2660 = vrot.slane %v2652, %v2659
        %v2662 = vunpack.c.l.s4 1966171168
        %v2663 = vunpack.c.0.s8 %v2662
        %v2664 = vlaneseq
        %v2665 = vshrl.u32 %v2664, 7
        %v2666 = vsub.s32 %v2663, %v2665
        %v2667 = vrot.slane %v2653, %v2666
        %v2668 = vcombine.low %v2660, %v2667
        %v2669 = vcombine.low %v2523, %v2524
        %v2670 = vcombine.low %v2539, %v2546
        %v2671 = vcombine.low %v2547, %v2562
        %v2672 = vcombine.low %v2569, %v2570
        %v2674 = vunpack.c.l.s4 1966171168
        %v2675 = vunpack.c.0.s8 %v2674
        %v2676 = vlaneseq
        %v2677 = vshrl.u32 %v2676, 7
        %v2678 = vsub.s32 %v2675, %v2677
        %v2679 = vrot.slane %v2669, %v2678
        %v2681 = vunpack.c.l.s4 1966171168
        %v2682 = vunpack.c.0.s8 %v2681
        %v2683 = vlaneseq
        %v2684 = vshrl.u32 %v2683, 7
        %v2685 = vsub.s32 %v2682, %v2684
        %v2686 = vrot.slane %v2670, %v2685
        %v2688 = vunpack.c.l.s4 1966171168
        %v2689 = vunpack.c.0.s8 %v2688
        %v2690 = vlaneseq
        %v2691 = vshrl.u32 %v2690, 7
        %v2692 = vsub.s32 %v2689, %v2691
        %v2693 = vrot.slane %v2671, %v2692
        %v2695 = vunpack.c.l.s4 1966171168
        %v2696 = vunpack.c.0.s8 %v2695
        %v2697 = vlaneseq
        %v2698 = vshrl.u32 %v2697, 7
        %v2699 = vsub.s32 %v2696, %v2698
        %v2700 = vrot.slane %v2672, %v2699
        %v2701 = vcombine.low %v2679, %v2686
        %v2702 = vcombine.low %v2693, %v2700
        %v2704 = vunpack.c.l.s4 1966171168
        %v2705 = vunpack.c.0.s8 %v2704
        %v2706 = vlaneseq
        %v2707 = vshrl.u32 %v2706, 7
        %v2708 = vsub.s32 %v2705, %v2707
        %v2709 = vrot.slane %v2701, %v2708
        %v2711 = vunpack.c.l.s4 1966171168
        %v2712 = vunpack.c.0.s8 %v2711
        %v2713 = vlaneseq
        %v2714 = vshrl.u32 %v2713, 7
        %v2715 = vsub.s32 %v2712, %v2714
        %v2716 = vrot.slane %v2702, %v2715
        %v2717 = vcombine.low %v2709, %v2716
        %v2718 = vsel %vm1491, %v2619, 0
        %v2720 = vsel %vm1491, %v2668, 0
        %v2722 = vsel %vm1491, %v2717, 0
        %2724 = vmatprep.subr.mxu0 0.0
        %2725 = vmatpush1.msra.mxu0 %v1484
        %2726 = vmatprep.subr.mxu0 0.0
        %2727 = vmatpush1.msra.mxu0 %v1485
        %2728 = vmatprep.subr.mxu0 0.0
        %2729 = vmatpush1.msra.mxu0 %v1486
        %2730 = vmatprep.subr.mxu0 0.0
        %2731 = vmatpush1.msra.mxu0 %v1487
        %2732 = vmatprep.subr.mxu0 0.0
        %2733 = vmatpush1.msra.mxu0 0.0
        %2734 = vmatprep.subr.mxu0 0.0
        %2735 = vmatpush1.msra.mxu0 0.0
        %2736 = vmatprep.subr.mxu0 0.0
        %2737 = vmatpush1.msra.mxu0 0.0
        %2738 = vmatprep.subr.mxu0 0.0
        %2739 = vmatpush1.msra.mxu0 0.0
        %2740 = vmatprep.subr.mxu0 0.0
        %2741 = vmatpush1.msra.mxu0 0.0
        %2742 = vmatprep.subr.mxu0 0.0
        %2743 = vmatpush1.msra.mxu0 0.0
        %2744 = vmatprep.subr.mxu0 0.0
        %2745 = vmatpush1.msra.mxu0 0.0
        %2746 = vmatprep.subr.mxu0 0.0
        %2747 = vmatpush1.msra.mxu0 0.0
        %2748 = vmatprep.subr.mxu0 0.0
        %2749 = vmatpush1.msra.mxu0 0.0
        %2750 = vmatprep.subr.mxu0 0.0
        %2751 = vmatpush1.msra.mxu0 0.0
        %2752 = vmatprep.subr.mxu0 0.0
        %2753 = vmatpush1.msra.mxu0 0.0
        %2754 = vmatprep.subr.mxu0 0.0
        %2755 = vmatpush1.msra.mxu0 0.0
        %2756 = vmatprep.subr.mxu0 0.0
        %2757 = vmatpush1.msra.mxu0 0.0
        %2758 = vmatprep.subr.mxu0 0.0
        %2759 = vmatpush1.msra.mxu0 0.0
        %2760 = vmatprep.subr.mxu0 0.0
        %2761 = vmatpush1.msra.mxu0 0.0
        %2762 = vmatprep.subr.mxu0 0.0
        %2763 = vmatpush1.msra.mxu0 0.0
        %2764 = vmatprep.subr.mxu0 0.0
        %2765 = vmatpush1.msra.mxu0 0.0
        %2766 = vmatprep.subr.mxu0 0.0
        %2767 = vmatpush1.msra.mxu0 0.0
        %2768 = vmatprep.subr.mxu0 0.0
        %2769 = vmatpush1.msra.mxu0 0.0
        %2770 = vmatprep.subr.mxu0 0.0
        %2771 = vmatpush1.msra.mxu0 0.0
        %2772 = vmatprep.subr.mxu0 0.0
        %2773 = vmatpush1.msra.mxu0 0.0
        %2774 = vmatprep.subr.mxu0 0.0
        %2775 = vmatpush1.msra.mxu0 0.0
        %2776 = vmatprep.subr.mxu0 0.0
        %2777 = vmatpush1.msra.mxu0 0.0
        %2778 = vmatprep.subr.mxu0 0.0
        %2779 = vmatpush1.msra.mxu0 0.0
        %2780 = vmatprep.subr.mxu0 0.0
        %2781 = vmatpush1.msra.mxu0 0.0
        %2782 = vmatprep.subr.mxu0 0.0
        %2783 = vmatpush1.msra.mxu0 0.0
        %2784 = vmatprep.subr.mxu0 0.0
        %2785 = vmatpush1.msra.mxu0 0.0
        %2786 = vmatprep.subr.mxu0 0.0
        %2787 = vmatpush1.msra.mxu0 0.0
        %2788 = vmatprep.mubr.f32.mxu0 0.0
        %2789 = vmatmul.mubr.f32.gmra.mrb[0].mxu0 %v2718
        %v2790 = vpop.f32.mrb[0].mxu0
        %v2791 = vadd.f32 0.0, %v2790
        %v2792 = vpop.f32.mrb[0].mxu0
        %2793 = vmatprep.mubr.f32.mxu0 0.0
        %2794 = vmatmul.mubr.f32.gmra.mrb[0].mxu0 %v2720
        %v2795 = vpop.f32.mrb[0].mxu0
        %v2796 = vadd.f32 0.0, %v2795
        %v2797 = vpop.f32.mrb[0].mxu0
        %2798 = vmatprep.mubr.f32.mxu0 0.0
        %2799 = vmatmul.mubr.f32.gmra.mrb[0].mxu0 %v2722
        %v2800 = vpop.f32.mrb[0].mxu0
        %v2801 = vadd.f32 0.0, %v2800
        %v2802 = vpop.f32.mrb[0].mxu0
        %2803 = vdwg.mxu0
        %v2807 = vcombine.high %v2791, %v2791
        %v2809 = vunpack.c.l.s4 1966171168
        %v2810 = vunpack.c.0.s8 %v2809
        %v2811 = vlaneseq
        %v2812 = vshrl.u32 %v2811, 7
        %v2813 = vsub.s32 %v2810, %v2812
        %v2814 = vrot.slane %v2791, %v2813
        %v2816 = vunpack.c.l.s4 1966171168
        %v2817 = vunpack.c.0.s8 %v2816
        %v2818 = vlaneseq
        %v2819 = vshrl.u32 %v2818, 7
        %v2820 = vsub.s32 %v2817, %v2819
        %v2821 = vrot.slane %v2807, %v2820
        %v2822 = vcombine.high %v2814, %v2814
        %v2823 = vcombine.high %v2821, %v2821
        %v2825 = vunpack.c.l.s4 1966171168
        %v2826 = vunpack.c.0.s8 %v2825
        %v2827 = vlaneseq
        %v2828 = vshrl.u32 %v2827, 7
        %v2829 = vsub.s32 %v2826, %v2828
        %v2830 = vrot.slane %v2814, %v2829
        %v2832 = vunpack.c.l.s4 1966171168
        %v2833 = vunpack.c.0.s8 %v2832
        %v2834 = vlaneseq
        %v2835 = vshrl.u32 %v2834, 7
        %v2836 = vsub.s32 %v2833, %v2835
        %v2837 = vrot.slane %v2821, %v2836
        %v2839 = vunpack.c.l.s4 1966171168
        %v2840 = vunpack.c.0.s8 %v2839
        %v2841 = vlaneseq
        %v2842 = vshrl.u32 %v2841, 7
        %v2843 = vsub.s32 %v2840, %v2842
        %v2844 = vrot.slane %v2822, %v2843
        %v2846 = vunpack.c.l.s4 1966171168
        %v2847 = vunpack.c.0.s8 %v2846
        %v2848 = vlaneseq
        %v2849 = vshrl.u32 %v2848, 7
        %v2850 = vsub.s32 %v2847, %v2849
        %v2851 = vrot.slane %v2823, %v2850
        %v2852 = vcombine.high %v2830, %v2830
        %v2853 = vcombine.high %v2837, %v2837
        %v2854 = vcombine.high %v2844, %v2844
        %v2855 = vcombine.high %v2851, %v2851
        %v2856 = vcombine.high %v2796, %v2796
        %v2858 = vunpack.c.l.s4 1966171168
        %v2859 = vunpack.c.0.s8 %v2858
        %v2860 = vlaneseq
        %v2861 = vshrl.u32 %v2860, 7
        %v2862 = vsub.s32 %v2859, %v2861
        %v2863 = vrot.slane %v2796, %v2862
        %v2865 = vunpack.c.l.s4 1966171168
        %v2866 = vunpack.c.0.s8 %v2865
        %v2867 = vlaneseq
        %v2868 = vshrl.u32 %v2867, 7
        %v2869 = vsub.s32 %v2866, %v2868
        %v2870 = vrot.slane %v2856, %v2869
        %v2871 = vcombine.high %v2863, %v2863
        %v2872 = vcombine.high %v2870, %v2870
        %v2874 = vunpack.c.l.s4 1966171168
        %v2875 = vunpack.c.0.s8 %v2874
        %v2876 = vlaneseq
        %v2877 = vshrl.u32 %v2876, 7
        %v2878 = vsub.s32 %v2875, %v2877
        %v2879 = vrot.slane %v2863, %v2878
        %v2881 = vunpack.c.l.s4 1966171168
        %v2882 = vunpack.c.0.s8 %v2881
        %v2883 = vlaneseq
        %v2884 = vshrl.u32 %v2883, 7
        %v2885 = vsub.s32 %v2882, %v2884
        %v2886 = vrot.slane %v2870, %v2885
        %v2888 = vunpack.c.l.s4 1966171168
        %v2889 = vunpack.c.0.s8 %v2888
        %v2890 = vlaneseq
        %v2891 = vshrl.u32 %v2890, 7
        %v2892 = vsub.s32 %v2889, %v2891
        %v2893 = vrot.slane %v2871, %v2892
        %v2895 = vunpack.c.l.s4 1966171168
        %v2896 = vunpack.c.0.s8 %v2895
        %v2897 = vlaneseq
        %v2898 = vshrl.u32 %v2897, 7
        %v2899 = vsub.s32 %v2896, %v2898
        %v2900 = vrot.slane %v2872, %v2899
        %v2901 = vcombine.high %v2879, %v2879
        %v2902 = vcombine.high %v2886, %v2886
        %v2903 = vcombine.high %v2893, %v2893
        %v2904 = vcombine.high %v2900, %v2900
        %v2905 = vcombine.high %v2801, %v2801
        %v2907 = vunpack.c.l.s4 1966171168
        %v2908 = vunpack.c.0.s8 %v2907
        %v2909 = vlaneseq
        %v2910 = vshrl.u32 %v2909, 7
        %v2911 = vsub.s32 %v2908, %v2910
        %v2912 = vrot.slane %v2801, %v2911
        %v2914 = vunpack.c.l.s4 1966171168
        %v2915 = vunpack.c.0.s8 %v2914
        %v2916 = vlaneseq
        %v2917 = vshrl.u32 %v2916, 7
        %v2918 = vsub.s32 %v2915, %v2917
        %v2919 = vrot.slane %v2905, %v2918
        %v2920 = vcombine.high %v2912, %v2912
        %v2921 = vcombine.high %v2919, %v2919
        %v2923 = vunpack.c.l.s4 1966171168
        %v2924 = vunpack.c.0.s8 %v2923
        %v2925 = vlaneseq
        %v2926 = vshrl.u32 %v2925, 7
        %v2927 = vsub.s32 %v2924, %v2926
        %v2928 = vrot.slane %v2912, %v2927
        %v2930 = vunpack.c.l.s4 1966171168
        %v2931 = vunpack.c.0.s8 %v2930
        %v2932 = vlaneseq
        %v2933 = vshrl.u32 %v2932, 7
        %v2934 = vsub.s32 %v2931, %v2933
        %v2935 = vrot.slane %v2919, %v2934
        %v2937 = vunpack.c.l.s4 1966171168
        %v2938 = vunpack.c.0.s8 %v2937
        %v2939 = vlaneseq
        %v2940 = vshrl.u32 %v2939, 7
        %v2941 = vsub.s32 %v2938, %v2940
        %v2942 = vrot.slane %v2920, %v2941
        %v2944 = vunpack.c.l.s4 1966171168
        %v2945 = vunpack.c.0.s8 %v2944
        %v2946 = vlaneseq
        %v2947 = vshrl.u32 %v2946, 7
        %v2948 = vsub.s32 %v2945, %v2947
        %v2949 = vrot.slane %v2921, %v2948
        %v2950 = vcombine.high %v2928, %v2928
        %v2951 = vcombine.high %v2935, %v2935
        %v2952 = vcombine.high %v2942, %v2942
        %v2953 = vcombine.high %v2949, %v2949
        %v2978 = vmul.f32 %v2830, 0.35355338
        %v2979 = vmul.f32 %v2844, 0.35355338
        %v2980 = vmul.f32 %v2852, 0.35355338
        %v2981 = vmul.f32 %v2854, 0.35355338
        %v2982 = vmul.f32 %v2837, 0.35355338
        %v2983 = vmul.f32 %v2851, 0.35355338
        %v2984 = vmul.f32 %v2853, 0.35355338
        %v2985 = vmul.f32 %v2855, 0.35355338
        %v2986 = vmul.f32 %v2879, 0.35355338
        %v2987 = vmul.f32 %v2893, 0.35355338
        %v2988 = vmul.f32 %v2901, 0.35355338
        %v2989 = vmul.f32 %v2903, 0.35355338
        %v2990 = vmul.f32 %v2886, 0.35355338
        %v2991 = vmul.f32 %v2900, 0.35355338
        %v2992 = vmul.f32 %v2902, 0.35355338
        %v2993 = vmul.f32 %v2904, 0.35355338
        %v2994 = vmul.f32 %v2928, 0.35355338
        %v2995 = vmul.f32 %v2942, 0.35355338
        %v2996 = vmul.f32 %v2950, 0.35355338
        %v2997 = vmul.f32 %v2952, 0.35355338
        %v2998 = vmul.f32 %v2935, 0.35355338
        %v2999 = vmul.f32 %v2949, 0.35355338
        %v3000 = vmul.f32 %v2951, 0.35355338
        %v3001 = vmul.f32 %v2953, 0.35355338
        %v3026 = vcombine.low %v2978, %v2979
        %v3028 = vunpack.c.l.s4 1966171168
        %v3029 = vunpack.c.0.s8 %v3028
        %v3030 = vlaneseq
        %v3031 = vshrl.u32 %v3030, 7
        %v3032 = vsub.s32 %v3029, %v3031
        %v3033 = vrot.slane %v3026, %v3032
        %v3035 = vunpack.c.l.s4 1966171168
        %v3036 = vunpack.c.0.s8 %v3035
        %v3037 = vlaneseq
        %v3038 = vshrl.u32 %v3037, 7
        %v3039 = vsub.s32 %v3036, %v3038
        %v3040 = vrot.slane %v2980, %v3039
        %v3041 = vcombine.low %v3033, %v3040
        %v3043 = vunpack.c.l.s4 1966171168
        %v3044 = vunpack.c.0.s8 %v3043
        %v3045 = vlaneseq
        %v3046 = vshrl.u32 %v3045, 7
        %v3047 = vsub.s32 %v3044, %v3046
        %v3048 = vrot.slane %v3041, %v3047
        %v3049 = vcombine.low %v2981, %v2982
        %v3051 = vunpack.c.l.s4 1966171168
        %v3052 = vunpack.c.0.s8 %v3051
        %v3053 = vlaneseq
        %v3054 = vshrl.u32 %v3053, 7
        %v3055 = vsub.s32 %v3052, %v3054
        %v3056 = vrot.slane %v3049, %v3055
        %v3058 = vunpack.c.l.s4 1966171168
        %v3059 = vunpack.c.0.s8 %v3058
        %v3060 = vlaneseq
        %v3061 = vshrl.u32 %v3060, 7
        %v3062 = vsub.s32 %v3059, %v3061
        %v3063 = vrot.slane %v2983, %v3062
        %v3064 = vcombine.low %v3056, %v3063
        %v3066 = vunpack.c.l.s4 1966171168
        %v3067 = vunpack.c.0.s8 %v3066
        %v3068 = vlaneseq
        %v3069 = vshrl.u32 %v3068, 7
        %v3070 = vsub.s32 %v3067, %v3069
        %v3071 = vrot.slane %v3064, %v3070
        %v3072 = vcombine.low %v2984, %v2985
        %v3074 = vunpack.c.l.s4 1966171168
        %v3075 = vunpack.c.0.s8 %v3074
        %v3076 = vlaneseq
        %v3077 = vshrl.u32 %v3076, 7
        %v3078 = vsub.s32 %v3075, %v3077
        %v3079 = vrot.slane %v3072, %v3078
        %v3081 = vunpack.c.l.s4 1966171168
        %v3082 = vunpack.c.0.s8 %v3081
        %v3083 = vlaneseq
        %v3084 = vshrl.u32 %v3083, 7
        %v3085 = vsub.s32 %v3082, %v3084
        %v3086 = vrot.slane %v2986, %v3085
        %v3087 = vcombine.low %v3079, %v3086
        %v3089 = vunpack.c.l.s4 1966171168
        %v3090 = vunpack.c.0.s8 %v3089
        %v3091 = vlaneseq
        %v3092 = vshrl.u32 %v3091, 7
        %v3093 = vsub.s32 %v3090, %v3092
        %v3094 = vrot.slane %v3087, %v3093
        %v3095 = vcombine.low %v2987, %v2988
        %v3097 = vunpack.c.l.s4 1966171168
        %v3098 = vunpack.c.0.s8 %v3097
        %v3099 = vlaneseq
        %v3100 = vshrl.u32 %v3099, 7
        %v3101 = vsub.s32 %v3098, %v3100
        %v3102 = vrot.slane %v3095, %v3101
        %v3104 = vunpack.c.l.s4 1966171168
        %v3105 = vunpack.c.0.s8 %v3104
        %v3106 = vlaneseq
        %v3107 = vshrl.u32 %v3106, 7
        %v3108 = vsub.s32 %v3105, %v3107
        %v3109 = vrot.slane %v2989, %v3108
        %v3110 = vcombine.low %v3102, %v3109
        %v3112 = vunpack.c.l.s4 1966171168
        %v3113 = vunpack.c.0.s8 %v3112
        %v3114 = vlaneseq
        %v3115 = vshrl.u32 %v3114, 7
        %v3116 = vsub.s32 %v3113, %v3115
        %v3117 = vrot.slane %v3110, %v3116
        %v3118 = vcombine.low %v2990, %v2991
        %v3120 = vunpack.c.l.s4 1966171168
        %v3121 = vunpack.c.0.s8 %v3120
        %v3122 = vlaneseq
        %v3123 = vshrl.u32 %v3122, 7
        %v3124 = vsub.s32 %v3121, %v3123
        %v3125 = vrot.slane %v3118, %v3124
        %v3127 = vunpack.c.l.s4 1966171168
        %v3128 = vunpack.c.0.s8 %v3127
        %v3129 = vlaneseq
        %v3130 = vshrl.u32 %v3129, 7
        %v3131 = vsub.s32 %v3128, %v3130
        %v3132 = vrot.slane %v2992, %v3131
        %v3133 = vcombine.low %v3125, %v3132
        %v3135 = vunpack.c.l.s4 1966171168
        %v3136 = vunpack.c.0.s8 %v3135
        %v3137 = vlaneseq
        %v3138 = vshrl.u32 %v3137, 7
        %v3139 = vsub.s32 %v3136, %v3138
        %v3140 = vrot.slane %v3133, %v3139
        %v3141 = vcombine.low %v2993, %v2994
        %v3143 = vunpack.c.l.s4 1966171168
        %v3144 = vunpack.c.0.s8 %v3143
        %v3145 = vlaneseq
        %v3146 = vshrl.u32 %v3145, 7
        %v3147 = vsub.s32 %v3144, %v3146
        %v3148 = vrot.slane %v3141, %v3147
        %v3150 = vunpack.c.l.s4 1966171168
        %v3151 = vunpack.c.0.s8 %v3150
        %v3152 = vlaneseq
        %v3153 = vshrl.u32 %v3152, 7
        %v3154 = vsub.s32 %v3151, %v3153
        %v3155 = vrot.slane %v2995, %v3154
        %v3156 = vcombine.low %v3148, %v3155
        %v3158 = vunpack.c.l.s4 1966171168
        %v3159 = vunpack.c.0.s8 %v3158
        %v3160 = vlaneseq
        %v3161 = vshrl.u32 %v3160, 7
        %v3162 = vsub.s32 %v3159, %v3161
        %v3163 = vrot.slane %v3156, %v3162
        %v3164 = vcombine.low %v2996, %v2997
        %v3166 = vunpack.c.l.s4 1966171168
        %v3167 = vunpack.c.0.s8 %v3166
        %v3168 = vlaneseq
        %v3169 = vshrl.u32 %v3168, 7
        %v3170 = vsub.s32 %v3167, %v3169
        %v3171 = vrot.slane %v3164, %v3170
        %v3173 = vunpack.c.l.s4 1966171168
        %v3174 = vunpack.c.0.s8 %v3173
        %v3175 = vlaneseq
        %v3176 = vshrl.u32 %v3175, 7
        %v3177 = vsub.s32 %v3174, %v3176
        %v3178 = vrot.slane %v2998, %v3177
        %v3179 = vcombine.low %v3171, %v3178
        %v3181 = vunpack.c.l.s4 1966171168
        %v3182 = vunpack.c.0.s8 %v3181
        %v3183 = vlaneseq
        %v3184 = vshrl.u32 %v3183, 7
        %v3185 = vsub.s32 %v3182, %v3184
        %v3186 = vrot.slane %v3179, %v3185
        %v3187 = vcombine.low %v2999, %v3000
        %v3189 = vunpack.c.l.s4 1966171168
        %v3190 = vunpack.c.0.s8 %v3189
        %v3191 = vlaneseq
        %v3192 = vshrl.u32 %v3191, 7
        %v3193 = vsub.s32 %v3190, %v3192
        %v3194 = vrot.slane %v3187, %v3193
        %v3196 = vunpack.c.l.s4 1966171168
        %v3197 = vunpack.c.0.s8 %v3196
        %v3198 = vlaneseq
        %v3199 = vshrl.u32 %v3198, 7
        %v3200 = vsub.s32 %v3197, %v3199
        %v3201 = vrot.slane %v3001, %v3200
        %v3202 = vcombine.low %v3194, %v3201
        %v3204 = vunpack.c.l.s4 1966171168
        %v3205 = vunpack.c.0.s8 %v3204
        %v3206 = vlaneseq
        %v3207 = vshrl.u32 %v3206, 7
        %v3208 = vsub.s32 %v3205, %v3207
        %v3209 = vrot.slane %v3202, %v3208
        %vm3218 = vcmask 26624
        %v3219 = vsel %vm3218, %v3048, -inf
        %v3220 = vrot.slane %v3219, 4
        %v3221 = vmax.f32 %v3219, %v3220
        %v3222 = vrot.slane %v3221, 2
        %v3223 = vmax.f32 %v3221, %v3222
        %v3224 = vrot.slane %v3223, 1
        %v3225 = vmax.f32 %v3223, %v3224
        %v3226 = vsel %vm3218, %v3071, -inf
        %v3227 = vrot.slane %v3226, 4
        %v3228 = vmax.f32 %v3226, %v3227
        %v3229 = vrot.slane %v3228, 2
        %v3230 = vmax.f32 %v3228, %v3229
        %v3231 = vrot.slane %v3230, 1
        %v3232 = vmax.f32 %v3230, %v3231
        %v3233 = vsel %vm3218, %v3094, -inf
        %v3234 = vrot.slane %v3233, 4
        %v3235 = vmax.f32 %v3233, %v3234
        %v3236 = vrot.slane %v3235, 2
        %v3237 = vmax.f32 %v3235, %v3236
        %v3238 = vrot.slane %v3237, 1
        %v3239 = vmax.f32 %v3237, %v3238
        %v3240 = vsel %vm3218, %v3117, -inf
        %v3241 = vrot.slane %v3240, 4
        %v3242 = vmax.f32 %v3240, %v3241
        %v3243 = vrot.slane %v3242, 2
        %v3244 = vmax.f32 %v3242, %v3243
        %v3245 = vrot.slane %v3244, 1
        %v3246 = vmax.f32 %v3244, %v3245
        %v3247 = vsel %vm3218, %v3140, -inf
        %v3248 = vrot.slane %v3247, 4
        %v3249 = vmax.f32 %v3247, %v3248
        %v3250 = vrot.slane %v3249, 2
        %v3251 = vmax.f32 %v3249, %v3250
        %v3252 = vrot.slane %v3251, 1
        %v3253 = vmax.f32 %v3251, %v3252
        %v3254 = vsel %vm3218, %v3163, -inf
        %v3255 = vrot.slane %v3254, 4
        %v3256 = vmax.f32 %v3254, %v3255
        %v3257 = vrot.slane %v3256, 2
        %v3258 = vmax.f32 %v3256, %v3257
        %v3259 = vrot.slane %v3258, 1
        %v3260 = vmax.f32 %v3258, %v3259
        %v3261 = vsel %vm3218, %v3186, -inf
        %v3262 = vrot.slane %v3261, 4
        %v3263 = vmax.f32 %v3261, %v3262
        %v3264 = vrot.slane %v3263, 2
        %v3265 = vmax.f32 %v3263, %v3264
        %v3266 = vrot.slane %v3265, 1
        %v3267 = vmax.f32 %v3265, %v3266
        %v3268 = vsel %vm3218, %v3209, -inf
        %v3269 = vrot.slane %v3268, 4
        %v3270 = vmax.f32 %v3268, %v3269
        %v3271 = vrot.slane %v3270, 2
        %v3272 = vmax.f32 %v3270, %v3271
        %v3273 = vrot.slane %v3272, 1
        %v3274 = vmax.f32 %v3272, %v3273
        %v3284 = vunpack.c.l.s4 1966171168
        %v3285 = vunpack.c.0.s8 %v3284
        %v3286 = vlaneseq
        %v3287 = vshrl.u32 %v3286, 7
        %v3288 = vsub.s32 %v3285, %v3287
        %v3289 = vrot.slane %v3225, %v3288
        %v3290 = vcombine.high %v3289, %v3289
        %v3292 = vunpack.c.l.s4 1966171168
        %v3293 = vunpack.c.0.s8 %v3292
        %v3294 = vlaneseq
        %v3295 = vshrl.u32 %v3294, 7
        %v3296 = vsub.s32 %v3293, %v3295
        %v3297 = vrot.slane %v3289, %v3296
        %v3299 = vunpack.c.l.s4 1966171168
        %v3300 = vunpack.c.0.s8 %v3299
        %v3301 = vlaneseq
        %v3302 = vshrl.u32 %v3301, 7
        %v3303 = vsub.s32 %v3300, %v3302
        %v3304 = vrot.slane %v3290, %v3303
        %v3305 = vcombine.high %v3297, %v3297
        %v3307 = vunpack.c.l.s4 1966171168
        %v3308 = vunpack.c.0.s8 %v3307
        %v3309 = vlaneseq
        %v3310 = vshrl.u32 %v3309, 7
        %v3311 = vsub.s32 %v3308, %v3310
        %v3312 = vrot.slane %v3232, %v3311
        %v3313 = vcombine.high %v3312, %v3312
        %v3315 = vunpack.c.l.s4 1966171168
        %v3316 = vunpack.c.0.s8 %v3315
        %v3317 = vlaneseq
        %v3318 = vshrl.u32 %v3317, 7
        %v3319 = vsub.s32 %v3316, %v3318
        %v3320 = vrot.slane %v3312, %v3319
        %v3322 = vunpack.c.l.s4 1966171168
        %v3323 = vunpack.c.0.s8 %v3322
        %v3324 = vlaneseq
        %v3325 = vshrl.u32 %v3324, 7
        %v3326 = vsub.s32 %v3323, %v3325
        %v3327 = vrot.slane %v3313, %v3326
        %v3328 = vcombine.high %v3320, %v3320
        %v3330 = vunpack.c.l.s4 1966171168
        %v3331 = vunpack.c.0.s8 %v3330
        %v3332 = vlaneseq
        %v3333 = vshrl.u32 %v3332, 7
        %v3334 = vsub.s32 %v3331, %v3333
        %v3335 = vrot.slane %v3239, %v3334
        %v3336 = vcombine.high %v3335, %v3335
        %v3338 = vunpack.c.l.s4 1966171168
        %v3339 = vunpack.c.0.s8 %v3338
        %v3340 = vlaneseq
        %v3341 = vshrl.u32 %v3340, 7
        %v3342 = vsub.s32 %v3339, %v3341
        %v3343 = vrot.slane %v3335, %v3342
        %v3345 = vunpack.c.l.s4 1966171168
        %v3346 = vunpack.c.0.s8 %v3345
        %v3347 = vlaneseq
        %v3348 = vshrl.u32 %v3347, 7
        %v3349 = vsub.s32 %v3346, %v3348
        %v3350 = vrot.slane %v3336, %v3349
        %v3351 = vcombine.high %v3343, %v3343
        %v3353 = vunpack.c.l.s4 1966171168
        %v3354 = vunpack.c.0.s8 %v3353
        %v3355 = vlaneseq
        %v3356 = vshrl.u32 %v3355, 7
        %v3357 = vsub.s32 %v3354, %v3356
        %v3358 = vrot.slane %v3246, %v3357
        %v3359 = vcombine.high %v3358, %v3358
        %v3361 = vunpack.c.l.s4 1966171168
        %v3362 = vunpack.c.0.s8 %v3361
        %v3363 = vlaneseq
        %v3364 = vshrl.u32 %v3363, 7
        %v3365 = vsub.s32 %v3362, %v3364
        %v3366 = vrot.slane %v3358, %v3365
        %v3368 = vunpack.c.l.s4 1966171168
        %v3369 = vunpack.c.0.s8 %v3368
        %v3370 = vlaneseq
        %v3371 = vshrl.u32 %v3370, 7
        %v3372 = vsub.s32 %v3369, %v3371
        %v3373 = vrot.slane %v3359, %v3372
        %v3374 = vcombine.high %v3366, %v3366
        %v3376 = vunpack.c.l.s4 1966171168
        %v3377 = vunpack.c.0.s8 %v3376
        %v3378 = vlaneseq
        %v3379 = vshrl.u32 %v3378, 7
        %v3380 = vsub.s32 %v3377, %v3379
        %v3381 = vrot.slane %v3253, %v3380
        %v3382 = vcombine.high %v3381, %v3381
        %v3384 = vunpack.c.l.s4 1966171168
        %v3385 = vunpack.c.0.s8 %v3384
        %v3386 = vlaneseq
        %v3387 = vshrl.u32 %v3386, 7
        %v3388 = vsub.s32 %v3385, %v3387
        %v3389 = vrot.slane %v3381, %v3388
        %v3391 = vunpack.c.l.s4 1966171168
        %v3392 = vunpack.c.0.s8 %v3391
        %v3393 = vlaneseq
        %v3394 = vshrl.u32 %v3393, 7
        %v3395 = vsub.s32 %v3392, %v3394
        %v3396 = vrot.slane %v3382, %v3395
        %v3397 = vcombine.high %v3389, %v3389
        %v3399 = vunpack.c.l.s4 1966171168
        %v3400 = vunpack.c.0.s8 %v3399
        %v3401 = vlaneseq
        %v3402 = vshrl.u32 %v3401, 7
        %v3403 = vsub.s32 %v3400, %v3402
        %v3404 = vrot.slane %v3260, %v3403
        %v3405 = vcombine.high %v3404, %v3404
        %v3407 = vunpack.c.l.s4 1966171168
        %v3408 = vunpack.c.0.s8 %v3407
        %v3409 = vlaneseq
        %v3410 = vshrl.u32 %v3409, 7
        %v3411 = vsub.s32 %v3408, %v3410
        %v3412 = vrot.slane %v3404, %v3411
        %v3414 = vunpack.c.l.s4 1966171168
        %v3415 = vunpack.c.0.s8 %v3414
        %v3416 = vlaneseq
        %v3417 = vshrl.u32 %v3416, 7
        %v3418 = vsub.s32 %v3415, %v3417
        %v3419 = vrot.slane %v3405, %v3418
        %v3420 = vcombine.high %v3412, %v3412
        %v3422 = vunpack.c.l.s4 1966171168
        %v3423 = vunpack.c.0.s8 %v3422
        %v3424 = vlaneseq
        %v3425 = vshrl.u32 %v3424, 7
        %v3426 = vsub.s32 %v3423, %v3425
        %v3427 = vrot.slane %v3267, %v3426
        %v3428 = vcombine.high %v3427, %v3427
        %v3430 = vunpack.c.l.s4 1966171168
        %v3431 = vunpack.c.0.s8 %v3430
        %v3432 = vlaneseq
        %v3433 = vshrl.u32 %v3432, 7
        %v3434 = vsub.s32 %v3431, %v3433
        %v3435 = vrot.slane %v3427, %v3434
        %v3437 = vunpack.c.l.s4 1966171168
        %v3438 = vunpack.c.0.s8 %v3437
        %v3439 = vlaneseq
        %v3440 = vshrl.u32 %v3439, 7
        %v3441 = vsub.s32 %v3438, %v3440
        %v3442 = vrot.slane %v3428, %v3441
        %v3443 = vcombine.high %v3435, %v3435
        %v3445 = vunpack.c.l.s4 1966171168
        %v3446 = vunpack.c.0.s8 %v3445
        %v3447 = vlaneseq
        %v3448 = vshrl.u32 %v3447, 7
        %v3449 = vsub.s32 %v3446, %v3448
        %v3450 = vrot.slane %v3274, %v3449
        %v3451 = vcombine.high %v3450, %v3450
        %v3453 = vunpack.c.l.s4 1966171168
        %v3454 = vunpack.c.0.s8 %v3453
        %v3455 = vlaneseq
        %v3456 = vshrl.u32 %v3455, 7
        %v3457 = vsub.s32 %v3454, %v3456
        %v3458 = vrot.slane %v3450, %v3457
        %v3460 = vunpack.c.l.s4 1966171168
        %v3461 = vunpack.c.0.s8 %v3460
        %v3462 = vlaneseq
        %v3463 = vshrl.u32 %v3462, 7
        %v3464 = vsub.s32 %v3461, %v3463
        %v3465 = vrot.slane %v3451, %v3464
        %v3466 = vcombine.high %v3458, %v3458
        %v3491 = vsub.f32 %v2978, %v3297
        %v3492 = vsub.f32 %v2979, %v3304
        %v3493 = vsub.f32 %v2980, %v3305
        %v3494 = vsub.f32 %v2981, %v3320
        %v3495 = vsub.f32 %v2982, %v3327
        %v3496 = vsub.f32 %v2983, %v3328
        %v3497 = vsub.f32 %v2984, %v3343
        %v3498 = vsub.f32 %v2985, %v3350
        %v3499 = vsub.f32 %v2986, %v3351
        %v3500 = vsub.f32 %v2987, %v3366
        %v3501 = vsub.f32 %v2988, %v3373
        %v3502 = vsub.f32 %v2989, %v3374
        %v3503 = vsub.f32 %v2990, %v3389
        %v3504 = vsub.f32 %v2991, %v3396
        %v3505 = vsub.f32 %v2992, %v3397
        %v3506 = vsub.f32 %v2993, %v3412
        %v3507 = vsub.f32 %v2994, %v3419
        %v3508 = vsub.f32 %v2995, %v3420
        %v3509 = vsub.f32 %v2996, %v3435
        %v3510 = vsub.f32 %v2997, %v3442
        %v3511 = vsub.f32 %v2998, %v3443
        %v3512 = vsub.f32 %v2999, %v3458
        %v3513 = vsub.f32 %v3000, %v3465
        %v3514 = vsub.f32 %v3001, %v3466
        %v3515 = vmul.f32 %v3491, 1.442695
        %v3516 = vpow.pop %v3515
        %v3517 = vmul.f32 %v3492, 1.442695
        %v3518 = vpow.pop %v3517
        %v3519 = vmul.f32 %v3493, 1.442695
        %v3520 = vpow.pop %v3519
        %v3521 = vmul.f32 %v3494, 1.442695
        %v3522 = vpow.pop %v3521
        %v3523 = vmul.f32 %v3495, 1.442695
        %v3524 = vpow.pop %v3523
        %v3525 = vmul.f32 %v3496, 1.442695
        %v3526 = vpow.pop %v3525
        %v3527 = vmul.f32 %v3497, 1.442695
        %v3528 = vpow.pop %v3527
        %v3529 = vmul.f32 %v3498, 1.442695
        %v3530 = vpow.pop %v3529
        %v3531 = vmul.f32 %v3499, 1.442695
        %v3532 = vpow.pop %v3531
        %v3533 = vmul.f32 %v3500, 1.442695
        %v3534 = vpow.pop %v3533
        %v3535 = vmul.f32 %v3501, 1.442695
        %v3536 = vpow.pop %v3535
        %v3537 = vmul.f32 %v3502, 1.442695
        %v3538 = vpow.pop %v3537
        %v3539 = vmul.f32 %v3503, 1.442695
        %v3540 = vpow.pop %v3539
        %v3541 = vmul.f32 %v3504, 1.442695
        %v3542 = vpow.pop %v3541
        %v3543 = vmul.f32 %v3505, 1.442695
        %v3544 = vpow.pop %v3543
        %v3545 = vmul.f32 %v3506, 1.442695
        %v3546 = vpow.pop %v3545
        %v3547 = vmul.f32 %v3507, 1.442695
        %v3548 = vpow.pop %v3547
        %v3549 = vmul.f32 %v3508, 1.442695
        %v3550 = vpow.pop %v3549
        %v3551 = vmul.f32 %v3509, 1.442695
        %v3552 = vpow.pop %v3551
        %v3553 = vmul.f32 %v3510, 1.442695
        %v3554 = vpow.pop %v3553
        %v3555 = vmul.f32 %v3511, 1.442695
        %v3556 = vpow.pop %v3555
        %v3557 = vmul.f32 %v3512, 1.442695
        %v3558 = vpow.pop %v3557
        %v3559 = vmul.f32 %v3513, 1.442695
        %v3560 = vpow.pop %v3559
        %v3561 = vmul.f32 %v3514, 1.442695
        %v3562 = vpow.pop %v3561
        %v3587 = vcombine.low %v3516, %v3518
        %v3589 = vunpack.c.l.s4 1966171168
        %v3590 = vunpack.c.0.s8 %v3589
        %v3591 = vlaneseq
        %v3592 = vshrl.u32 %v3591, 7
        %v3593 = vsub.s32 %v3590, %v3592
        %v3594 = vrot.slane %v3587, %v3593
        %v3596 = vunpack.c.l.s4 1966171168
        %v3597 = vunpack.c.0.s8 %v3596
        %v3598 = vlaneseq
        %v3599 = vshrl.u32 %v3598, 7
        %v3600 = vsub.s32 %v3597, %v3599
        %v3601 = vrot.slane %v3520, %v3600
        %v3602 = vcombine.low %v3594, %v3601
        %v3604 = vunpack.c.l.s4 1966171168
        %v3605 = vunpack.c.0.s8 %v3604
        %v3606 = vlaneseq
        %v3607 = vshrl.u32 %v3606, 7
        %v3608 = vsub.s32 %v3605, %v3607
        %v3609 = vrot.slane %v3602, %v3608
        %v3610 = vcombine.low %v3522, %v3524
        %v3612 = vunpack.c.l.s4 1966171168
        %v3613 = vunpack.c.0.s8 %v3612
        %v3614 = vlaneseq
        %v3615 = vshrl.u32 %v3614, 7
        %v3616 = vsub.s32 %v3613, %v3615
        %v3617 = vrot.slane %v3610, %v3616
        %v3619 = vunpack.c.l.s4 1966171168
        %v3620 = vunpack.c.0.s8 %v3619
        %v3621 = vlaneseq
        %v3622 = vshrl.u32 %v3621, 7
        %v3623 = vsub.s32 %v3620, %v3622
        %v3624 = vrot.slane %v3526, %v3623
        %v3625 = vcombine.low %v3617, %v3624
        %v3627 = vunpack.c.l.s4 1966171168
        %v3628 = vunpack.c.0.s8 %v3627
        %v3629 = vlaneseq
        %v3630 = vshrl.u32 %v3629, 7
        %v3631 = vsub.s32 %v3628, %v3630
        %v3632 = vrot.slane %v3625, %v3631
        %v3633 = vcombine.low %v3528, %v3530
        %v3635 = vunpack.c.l.s4 1966171168
        %v3636 = vunpack.c.0.s8 %v3635
        %v3637 = vlaneseq
        %v3638 = vshrl.u32 %v3637, 7
        %v3639 = vsub.s32 %v3636, %v3638
        %v3640 = vrot.slane %v3633, %v3639
        %v3642 = vunpack.c.l.s4 1966171168
        %v3643 = vunpack.c.0.s8 %v3642
        %v3644 = vlaneseq
        %v3645 = vshrl.u32 %v3644, 7
        %v3646 = vsub.s32 %v3643, %v3645
        %v3647 = vrot.slane %v3532, %v3646
        %v3648 = vcombine.low %v3640, %v3647
        %v3650 = vunpack.c.l.s4 1966171168
        %v3651 = vunpack.c.0.s8 %v3650
        %v3652 = vlaneseq
        %v3653 = vshrl.u32 %v3652, 7
        %v3654 = vsub.s32 %v3651, %v3653
        %v3655 = vrot.slane %v3648, %v3654
        %v3656 = vcombine.low %v3534, %v3536
        %v3658 = vunpack.c.l.s4 1966171168
        %v3659 = vunpack.c.0.s8 %v3658
        %v3660 = vlaneseq
        %v3661 = vshrl.u32 %v3660, 7
        %v3662 = vsub.s32 %v3659, %v3661
        %v3663 = vrot.slane %v3656, %v3662
        %v3665 = vunpack.c.l.s4 1966171168
        %v3666 = vunpack.c.0.s8 %v3665
        %v3667 = vlaneseq
        %v3668 = vshrl.u32 %v3667, 7
        %v3669 = vsub.s32 %v3666, %v3668
        %v3670 = vrot.slane %v3538, %v3669
        %v3671 = vcombine.low %v3663, %v3670
        %v3673 = vunpack.c.l.s4 1966171168
        %v3674 = vunpack.c.0.s8 %v3673
        %v3675 = vlaneseq
        %v3676 = vshrl.u32 %v3675, 7
        %v3677 = vsub.s32 %v3674, %v3676
        %v3678 = vrot.slane %v3671, %v3677
        %v3679 = vcombine.low %v3540, %v3542
        %v3681 = vunpack.c.l.s4 1966171168
        %v3682 = vunpack.c.0.s8 %v3681
        %v3683 = vlaneseq
        %v3684 = vshrl.u32 %v3683, 7
        %v3685 = vsub.s32 %v3682, %v3684
        %v3686 = vrot.slane %v3679, %v3685
        %v3688 = vunpack.c.l.s4 1966171168
        %v3689 = vunpack.c.0.s8 %v3688
        %v3690 = vlaneseq
        %v3691 = vshrl.u32 %v3690, 7
        %v3692 = vsub.s32 %v3689, %v3691
        %v3693 = vrot.slane %v3544, %v3692
        %v3694 = vcombine.low %v3686, %v3693
        %v3696 = vunpack.c.l.s4 1966171168
        %v3697 = vunpack.c.0.s8 %v3696
        %v3698 = vlaneseq
        %v3699 = vshrl.u32 %v3698, 7
        %v3700 = vsub.s32 %v3697, %v3699
        %v3701 = vrot.slane %v3694, %v3700
        %v3702 = vcombine.low %v3546, %v3548
        %v3704 = vunpack.c.l.s4 1966171168
        %v3705 = vunpack.c.0.s8 %v3704
        %v3706 = vlaneseq
        %v3707 = vshrl.u32 %v3706, 7
        %v3708 = vsub.s32 %v3705, %v3707
        %v3709 = vrot.slane %v3702, %v3708
        %v3711 = vunpack.c.l.s4 1966171168
        %v3712 = vunpack.c.0.s8 %v3711
        %v3713 = vlaneseq
        %v3714 = vshrl.u32 %v3713, 7
        %v3715 = vsub.s32 %v3712, %v3714
        %v3716 = vrot.slane %v3550, %v3715
        %v3717 = vcombine.low %v3709, %v3716
        %v3719 = vunpack.c.l.s4 1966171168
        %v3720 = vunpack.c.0.s8 %v3719
        %v3721 = vlaneseq
        %v3722 = vshrl.u32 %v3721, 7
        %v3723 = vsub.s32 %v3720, %v3722
        %v3724 = vrot.slane %v3717, %v3723
        %v3725 = vcombine.low %v3552, %v3554
        %v3727 = vunpack.c.l.s4 1966171168
        %v3728 = vunpack.c.0.s8 %v3727
        %v3729 = vlaneseq
        %v3730 = vshrl.u32 %v3729, 7
        %v3731 = vsub.s32 %v3728, %v3730
        %v3732 = vrot.slane %v3725, %v3731
        %v3734 = vunpack.c.l.s4 1966171168
        %v3735 = vunpack.c.0.s8 %v3734
        %v3736 = vlaneseq
        %v3737 = vshrl.u32 %v3736, 7
        %v3738 = vsub.s32 %v3735, %v3737
        %v3739 = vrot.slane %v3556, %v3738
        %v3740 = vcombine.low %v3732, %v3739
        %v3742 = vunpack.c.l.s4 1966171168
        %v3743 = vunpack.c.0.s8 %v3742
        %v3744 = vlaneseq
        %v3745 = vshrl.u32 %v3744, 7
        %v3746 = vsub.s32 %v3743, %v3745
        %v3747 = vrot.slane %v3740, %v3746
        %v3748 = vcombine.low %v3558, %v3560
        %v3750 = vunpack.c.l.s4 1966171168
        %v3751 = vunpack.c.0.s8 %v3750
        %v3752 = vlaneseq
        %v3753 = vshrl.u32 %v3752, 7
        %v3754 = vsub.s32 %v3751, %v3753
        %v3755 = vrot.slane %v3748, %v3754
        %v3757 = vunpack.c.l.s4 1966171168
        %v3758 = vunpack.c.0.s8 %v3757
        %v3759 = vlaneseq
        %v3760 = vshrl.u32 %v3759, 7
        %v3761 = vsub.s32 %v3758, %v3760
        %v3762 = vrot.slane %v3562, %v3761
        %v3763 = vcombine.low %v3755, %v3762
        %v3765 = vunpack.c.l.s4 1966171168
        %v3766 = vunpack.c.0.s8 %v3765
        %v3767 = vlaneseq
        %v3768 = vshrl.u32 %v3767, 7
        %v3769 = vsub.s32 %v3766, %v3768
        %v3770 = vrot.slane %v3763, %v3769
        %v3779 = vsel %vm3218, %v3609, 0.0
        %v3780 = vrot.slane %v3779, 4
        %v3781 = vadd.f32 %v3779, %v3780
        %v3782 = vrot.slane %v3781, 2
        %v3783 = vadd.f32 %v3781, %v3782
        %v3784 = vrot.slane %v3783, 1
        %v3785 = vadd.f32 %v3783, %v3784
        %v3786 = vsel %vm3218, %v3632, 0.0
        %v3787 = vrot.slane %v3786, 4
        %v3788 = vadd.f32 %v3786, %v3787
        %v3789 = vrot.slane %v3788, 2
        %v3790 = vadd.f32 %v3788, %v3789
        %v3791 = vrot.slane %v3790, 1
        %v3792 = vadd.f32 %v3790, %v3791
        %v3793 = vsel %vm3218, %v3655, 0.0
        %v3794 = vrot.slane %v3793, 4
        %v3795 = vadd.f32 %v3793, %v3794
        %v3796 = vrot.slane %v3795, 2
        %v3797 = vadd.f32 %v3795, %v3796
        %v3798 = vrot.slane %v3797, 1
        %v3799 = vadd.f32 %v3797, %v3798
        %v3800 = vsel %vm3218, %v3678, 0.0
        %v3801 = vrot.slane %v3800, 4
        %v3802 = vadd.f32 %v3800, %v3801
        %v3803 = vrot.slane %v3802, 2
        %v3804 = vadd.f32 %v3802, %v3803
        %v3805 = vrot.slane %v3804, 1
        %v3806 = vadd.f32 %v3804, %v3805
        %v3807 = vsel %vm3218, %v3701, 0.0
        %v3808 = vrot.slane %v3807, 4
        %v3809 = vadd.f32 %v3807, %v3808
        %v3810 = vrot.slane %v3809, 2
        %v3811 = vadd.f32 %v3809, %v3810
        %v3812 = vrot.slane %v3811, 1
        %v3813 = vadd.f32 %v3811, %v3812
        %v3814 = vsel %vm3218, %v3724, 0.0
        %v3815 = vrot.slane %v3814, 4
        %v3816 = vadd.f32 %v3814, %v3815
        %v3817 = vrot.slane %v3816, 2
        %v3818 = vadd.f32 %v3816, %v3817
        %v3819 = vrot.slane %v3818, 1
        %v3820 = vadd.f32 %v3818, %v3819
        %v3821 = vsel %vm3218, %v3747, 0.0
        %v3822 = vrot.slane %v3821, 4
        %v3823 = vadd.f32 %v3821, %v3822
        %v3824 = vrot.slane %v3823, 2
        %v3825 = vadd.f32 %v3823, %v3824
        %v3826 = vrot.slane %v3825, 1
        %v3827 = vadd.f32 %v3825, %v3826
        %v3828 = vsel %vm3218, %v3770, 0.0
        %v3829 = vrot.slane %v3828, 4
        %v3830 = vadd.f32 %v3828, %v3829
        %v3831 = vrot.slane %v3830, 2
        %v3832 = vadd.f32 %v3830, %v3831
        %v3833 = vrot.slane %v3832, 1
        %v3834 = vadd.f32 %v3832, %v3833
        %v3844 = vunpack.c.l.s4 1966171168
        %v3845 = vunpack.c.0.s8 %v3844
        %v3846 = vlaneseq
        %v3847 = vshrl.u32 %v3846, 7
        %v3848 = vsub.s32 %v3845, %v3847
        %v3849 = vrot.slane %v3785, %v3848
        %v3850 = vcombine.high %v3849, %v3849
        %v3852 = vunpack.c.l.s4 1966171168
        %v3853 = vunpack.c.0.s8 %v3852
        %v3854 = vlaneseq
        %v3855 = vshrl.u32 %v3854, 7
        %v3856 = vsub.s32 %v3853, %v3855
        %v3857 = vrot.slane %v3849, %v3856
        %v3859 = vunpack.c.l.s4 1966171168
        %v3860 = vunpack.c.0.s8 %v3859
        %v3861 = vlaneseq
        %v3862 = vshrl.u32 %v3861, 7
        %v3863 = vsub.s32 %v3860, %v3862
        %v3864 = vrot.slane %v3850, %v3863
        %v3865 = vcombine.high %v3857, %v3857
        %v3867 = vunpack.c.l.s4 1966171168
        %v3868 = vunpack.c.0.s8 %v3867
        %v3869 = vlaneseq
        %v3870 = vshrl.u32 %v3869, 7
        %v3871 = vsub.s32 %v3868, %v3870
        %v3872 = vrot.slane %v3792, %v3871
        %v3873 = vcombine.high %v3872, %v3872
        %v3875 = vunpack.c.l.s4 1966171168
        %v3876 = vunpack.c.0.s8 %v3875
        %v3877 = vlaneseq
        %v3878 = vshrl.u32 %v3877, 7
        %v3879 = vsub.s32 %v3876, %v3878
        %v3880 = vrot.slane %v3872, %v3879
        %v3882 = vunpack.c.l.s4 1966171168
        %v3883 = vunpack.c.0.s8 %v3882
        %v3884 = vlaneseq
        %v3885 = vshrl.u32 %v3884, 7
        %v3886 = vsub.s32 %v3883, %v3885
        %v3887 = vrot.slane %v3873, %v3886
        %v3888 = vcombine.high %v3880, %v3880
        %v3890 = vunpack.c.l.s4 1966171168
        %v3891 = vunpack.c.0.s8 %v3890
        %v3892 = vlaneseq
        %v3893 = vshrl.u32 %v3892, 7
        %v3894 = vsub.s32 %v3891, %v3893
        %v3895 = vrot.slane %v3799, %v3894
        %v3896 = vcombine.high %v3895, %v3895
        %v3898 = vunpack.c.l.s4 1966171168
        %v3899 = vunpack.c.0.s8 %v3898
        %v3900 = vlaneseq
        %v3901 = vshrl.u32 %v3900, 7
        %v3902 = vsub.s32 %v3899, %v3901
        %v3903 = vrot.slane %v3895, %v3902
        %v3905 = vunpack.c.l.s4 1966171168
        %v3906 = vunpack.c.0.s8 %v3905
        %v3907 = vlaneseq
        %v3908 = vshrl.u32 %v3907, 7
        %v3909 = vsub.s32 %v3906, %v3908
        %v3910 = vrot.slane %v3896, %v3909
        %v3911 = vcombine.high %v3903, %v3903
        %v3913 = vunpack.c.l.s4 1966171168
        %v3914 = vunpack.c.0.s8 %v3913
        %v3915 = vlaneseq
        %v3916 = vshrl.u32 %v3915, 7
        %v3917 = vsub.s32 %v3914, %v3916
        %v3918 = vrot.slane %v3806, %v3917
        %v3919 = vcombine.high %v3918, %v3918
        %v3921 = vunpack.c.l.s4 1966171168
        %v3922 = vunpack.c.0.s8 %v3921
        %v3923 = vlaneseq
        %v3924 = vshrl.u32 %v3923, 7
        %v3925 = vsub.s32 %v3922, %v3924
        %v3926 = vrot.slane %v3918, %v3925
        %v3928 = vunpack.c.l.s4 1966171168
        %v3929 = vunpack.c.0.s8 %v3928
        %v3930 = vlaneseq
        %v3931 = vshrl.u32 %v3930, 7
        %v3932 = vsub.s32 %v3929, %v3931
        %v3933 = vrot.slane %v3919, %v3932
        %v3934 = vcombine.high %v3926, %v3926
        %v3936 = vunpack.c.l.s4 1966171168
        %v3937 = vunpack.c.0.s8 %v3936
        %v3938 = vlaneseq
        %v3939 = vshrl.u32 %v3938, 7
        %v3940 = vsub.s32 %v3937, %v3939
        %v3941 = vrot.slane %v3813, %v3940
        %v3942 = vcombine.high %v3941, %v3941
        %v3944 = vunpack.c.l.s4 1966171168
        %v3945 = vunpack.c.0.s8 %v3944
        %v3946 = vlaneseq
        %v3947 = vshrl.u32 %v3946, 7
        %v3948 = vsub.s32 %v3945, %v3947
        %v3949 = vrot.slane %v3941, %v3948
        %v3951 = vunpack.c.l.s4 1966171168
        %v3952 = vunpack.c.0.s8 %v3951
        %v3953 = vlaneseq
        %v3954 = vshrl.u32 %v3953, 7
        %v3955 = vsub.s32 %v3952, %v3954
        %v3956 = vrot.slane %v3942, %v3955
        %v3957 = vcombine.high %v3949, %v3949
        %v3959 = vunpack.c.l.s4 1966171168
        %v3960 = vunpack.c.0.s8 %v3959
        %v3961 = vlaneseq
        %v3962 = vshrl.u32 %v3961, 7
        %v3963 = vsub.s32 %v3960, %v3962
        %v3964 = vrot.slane %v3820, %v3963
        %v3965 = vcombine.high %v3964, %v3964
        %v3967 = vunpack.c.l.s4 1966171168
        %v3968 = vunpack.c.0.s8 %v3967
        %v3969 = vlaneseq
        %v3970 = vshrl.u32 %v3969, 7
        %v3971 = vsub.s32 %v3968, %v3970
        %v3972 = vrot.slane %v3964, %v3971
        %v3974 = vunpack.c.l.s4 1966171168
        %v3975 = vunpack.c.0.s8 %v3974
        %v3976 = vlaneseq
        %v3977 = vshrl.u32 %v3976, 7
        %v3978 = vsub.s32 %v3975, %v3977
        %v3979 = vrot.slane %v3965, %v3978
        %v3980 = vcombine.high %v3972, %v3972
        %v3982 = vunpack.c.l.s4 1966171168
        %v3983 = vunpack.c.0.s8 %v3982
        %v3984 = vlaneseq
        %v3985 = vshrl.u32 %v3984, 7
        %v3986 = vsub.s32 %v3983, %v3985
        %v3987 = vrot.slane %v3827, %v3986
        %v3988 = vcombine.high %v3987, %v3987
        %v3990 = vunpack.c.l.s4 1966171168
        %v3991 = vunpack.c.0.s8 %v3990
        %v3992 = vlaneseq
        %v3993 = vshrl.u32 %v3992, 7
        %v3994 = vsub.s32 %v3991, %v3993
        %v3995 = vrot.slane %v3987, %v3994
        %v3997 = vunpack.c.l.s4 1966171168
        %v3998 = vunpack.c.0.s8 %v3997
        %v3999 = vlaneseq
        %v4000 = vshrl.u32 %v3999, 7
        %v4001 = vsub.s32 %v3998, %v4000
        %v4002 = vrot.slane %v3988, %v4001
        %v4003 = vcombine.high %v3995, %v3995
        %v4005 = vunpack.c.l.s4 1966171168
        %v4006 = vunpack.c.0.s8 %v4005
        %v4007 = vlaneseq
        %v4008 = vshrl.u32 %v4007, 7
        %v4009 = vsub.s32 %v4006, %v4008
        %v4010 = vrot.slane %v3834, %v4009
        %v4011 = vcombine.high %v4010, %v4010
        %v4013 = vunpack.c.l.s4 1966171168
        %v4014 = vunpack.c.0.s8 %v4013
        %v4015 = vlaneseq
        %v4016 = vshrl.u32 %v4015, 7
        %v4017 = vsub.s32 %v4014, %v4016
        %v4018 = vrot.slane %v4010, %v4017
        %v4020 = vunpack.c.l.s4 1966171168
        %v4021 = vunpack.c.0.s8 %v4020
        %v4022 = vlaneseq
        %v4023 = vshrl.u32 %v4022, 7
        %v4024 = vsub.s32 %v4021, %v4023
        %v4025 = vrot.slane %v4011, %v4024
        %v4026 = vcombine.high %v4018, %v4018
        %v4051 = vrcp.pop %v3857
        %v4052 = vmul.f32 %v3516, %v4051
        %v4053 = vrcp.pop %v3864
        %v4054 = vmul.f32 %v3518, %v4053
        %v4055 = vrcp.pop %v3865
        %v4056 = vmul.f32 %v3520, %v4055
        %v4057 = vrcp.pop %v3880
        %v4058 = vmul.f32 %v3522, %v4057
        %v4059 = vrcp.pop %v3887
        %v4060 = vmul.f32 %v3524, %v4059
        %v4061 = vrcp.pop %v3888
        %v4062 = vmul.f32 %v3526, %v4061
        %v4063 = vrcp.pop %v3903
        %v4064 = vmul.f32 %v3528, %v4063
        %v4065 = vrcp.pop %v3910
        %v4066 = vmul.f32 %v3530, %v4065
        %v4067 = vrcp.pop %v3911
        %v4068 = vmul.f32 %v3532, %v4067
        %v4069 = vrcp.pop %v3926
        %v4070 = vmul.f32 %v3534, %v4069
        %v4071 = vrcp.pop %v3933
        %v4072 = vmul.f32 %v3536, %v4071
        %v4073 = vrcp.pop %v3934
        %v4074 = vmul.f32 %v3538, %v4073
        %v4075 = vrcp.pop %v3949
        %v4076 = vmul.f32 %v3540, %v4075
        %v4077 = vrcp.pop %v3956
        %v4078 = vmul.f32 %v3542, %v4077
        %v4079 = vrcp.pop %v3957
        %v4080 = vmul.f32 %v3544, %v4079
        %v4081 = vrcp.pop %v3972
        %v4082 = vmul.f32 %v3546, %v4081
        %v4083 = vrcp.pop %v3979
        %v4084 = vmul.f32 %v3548, %v4083
        %v4085 = vrcp.pop %v3980
        %v4086 = vmul.f32 %v3550, %v4085
        %v4087 = vrcp.pop %v3995
        %v4088 = vmul.f32 %v3552, %v4087
        %v4089 = vrcp.pop %v4002
        %v4090 = vmul.f32 %v3554, %v4089
        %v4091 = vrcp.pop %v4003
        %v4092 = vmul.f32 %v3556, %v4091
        %v4093 = vrcp.pop %v4018
        %v4094 = vmul.f32 %v3558, %v4093
        %v4095 = vrcp.pop %v4025
        %v4096 = vmul.f32 %v3560, %v4095
        %v4097 = vrcp.pop %v4026
        %v4098 = vmul.f32 %v3562, %v4097
        %v4123 = vcombine.low %v4052, %v4054
        %v4124 = vcombine.low %v4056, %v4058
        %v4125 = vcombine.low %v4060, %v4062
        %v4126 = vcombine.low %v4064, %v4066
        %v4128 = vunpack.c.l.s4 1966171168
        %v4129 = vunpack.c.0.s8 %v4128
        %v4130 = vlaneseq
        %v4131 = vshrl.u32 %v4130, 7
        %v4132 = vsub.s32 %v4129, %v4131
        %v4133 = vrot.slane %v4123, %v4132
        %v4135 = vunpack.c.l.s4 1966171168
        %v4136 = vunpack.c.0.s8 %v4135
        %v4137 = vlaneseq
        %v4138 = vshrl.u32 %v4137, 7
        %v4139 = vsub.s32 %v4136, %v4138
        %v4140 = vrot.slane %v4124, %v4139
        %v4142 = vunpack.c.l.s4 1966171168
        %v4143 = vunpack.c.0.s8 %v4142
        %v4144 = vlaneseq
        %v4145 = vshrl.u32 %v4144, 7
        %v4146 = vsub.s32 %v4143, %v4145
        %v4147 = vrot.slane %v4125, %v4146
        %v4149 = vunpack.c.l.s4 1966171168
        %v4150 = vunpack.c.0.s8 %v4149
        %v4151 = vlaneseq
        %v4152 = vshrl.u32 %v4151, 7
        %v4153 = vsub.s32 %v4150, %v4152
        %v4154 = vrot.slane %v4126, %v4153
        %v4155 = vcombine.low %v4133, %v4140
        %v4156 = vcombine.low %v4147, %v4154
        %v4158 = vunpack.c.l.s4 1966171168
        %v4159 = vunpack.c.0.s8 %v4158
        %v4160 = vlaneseq
        %v4161 = vshrl.u32 %v4160, 7
        %v4162 = vsub.s32 %v4159, %v4161
        %v4163 = vrot.slane %v4155, %v4162
        %v4165 = vunpack.c.l.s4 1966171168
        %v4166 = vunpack.c.0.s8 %v4165
        %v4167 = vlaneseq
        %v4168 = vshrl.u32 %v4167, 7
        %v4169 = vsub.s32 %v4166, %v4168
        %v4170 = vrot.slane %v4156, %v4169
        %v4171 = vcombine.low %v4163, %v4170
        %v4172 = vcombine.low %v4068, %v4070
        %v4173 = vcombine.low %v4072, %v4074
        %v4174 = vcombine.low %v4076, %v4078
        %v4175 = vcombine.low %v4080, %v4082
        %v4177 = vunpack.c.l.s4 1966171168
        %v4178 = vunpack.c.0.s8 %v4177
        %v4179 = vlaneseq
        %v4180 = vshrl.u32 %v4179, 7
        %v4181 = vsub.s32 %v4178, %v4180
        %v4182 = vrot.slane %v4172, %v4181
        %v4184 = vunpack.c.l.s4 1966171168
        %v4185 = vunpack.c.0.s8 %v4184
        %v4186 = vlaneseq
        %v4187 = vshrl.u32 %v4186, 7
        %v4188 = vsub.s32 %v4185, %v4187
        %v4189 = vrot.slane %v4173, %v4188
        %v4191 = vunpack.c.l.s4 1966171168
        %v4192 = vunpack.c.0.s8 %v4191
        %v4193 = vlaneseq
        %v4194 = vshrl.u32 %v4193, 7
        %v4195 = vsub.s32 %v4192, %v4194
        %v4196 = vrot.slane %v4174, %v4195
        %v4198 = vunpack.c.l.s4 1966171168
        %v4199 = vunpack.c.0.s8 %v4198
        %v4200 = vlaneseq
        %v4201 = vshrl.u32 %v4200, 7
        %v4202 = vsub.s32 %v4199, %v4201
        %v4203 = vrot.slane %v4175, %v4202
        %v4204 = vcombine.low %v4182, %v4189
        %v4205 = vcombine.low %v4196, %v4203
        %v4207 = vunpack.c.l.s4 1966171168
        %v4208 = vunpack.c.0.s8 %v4207
        %v4209 = vlaneseq
        %v4210 = vshrl.u32 %v4209, 7
        %v4211 = vsub.s32 %v4208, %v4210
        %v4212 = vrot.slane %v4204, %v4211
        %v4214 = vunpack.c.l.s4 1966171168
        %v4215 = vunpack.c.0.s8 %v4214
        %v4216 = vlaneseq
        %v4217 = vshrl.u32 %v4216, 7
        %v4218 = vsub.s32 %v4215, %v4217
        %v4219 = vrot.slane %v4205, %v4218
        %v4220 = vcombine.low %v4212, %v4219
        %v4221 = vcombine.low %v4084, %v4086
        %v4222 = vcombine.low %v4088, %v4090
        %v4223 = vcombine.low %v4092, %v4094
        %v4224 = vcombine.low %v4096, %v4098
        %v4226 = vunpack.c.l.s4 1966171168
        %v4227 = vunpack.c.0.s8 %v4226
        %v4228 = vlaneseq
        %v4229 = vshrl.u32 %v4228, 7
        %v4230 = vsub.s32 %v4227, %v4229
        %v4231 = vrot.slane %v4221, %v4230
        %v4233 = vunpack.c.l.s4 1966171168
        %v4234 = vunpack.c.0.s8 %v4233
        %v4235 = vlaneseq
        %v4236 = vshrl.u32 %v4235, 7
        %v4237 = vsub.s32 %v4234, %v4236
        %v4238 = vrot.slane %v4222, %v4237
        %v4240 = vunpack.c.l.s4 1966171168
        %v4241 = vunpack.c.0.s8 %v4240
        %v4242 = vlaneseq
        %v4243 = vshrl.u32 %v4242, 7
        %v4244 = vsub.s32 %v4241, %v4243
        %v4245 = vrot.slane %v4223, %v4244
        %v4247 = vunpack.c.l.s4 1966171168
        %v4248 = vunpack.c.0.s8 %v4247
        %v4249 = vlaneseq
        %v4250 = vshrl.u32 %v4249, 7
        %v4251 = vsub.s32 %v4248, %v4250
        %v4252 = vrot.slane %v4224, %v4251
        %v4253 = vcombine.low %v4231, %v4238
        %v4254 = vcombine.low %v4245, %v4252
        %v4256 = vunpack.c.l.s4 1966171168
        %v4257 = vunpack.c.0.s8 %v4256
        %v4258 = vlaneseq
        %v4259 = vshrl.u32 %v4258, 7
        %v4260 = vsub.s32 %v4257, %v4259
        %v4261 = vrot.slane %v4253, %v4260
        %v4263 = vunpack.c.l.s4 1966171168
        %v4264 = vunpack.c.0.s8 %v4263
        %v4265 = vlaneseq
        %v4266 = vshrl.u32 %v4265, 7
        %v4267 = vsub.s32 %v4264, %v4266
        %v4268 = vrot.slane %v4254, %v4267
        %v4269 = vcombine.low %v4261, %v4268
        %vm4270 = vcmask 31744
        %v4271 = vsel %vm4270, %v4171, 0
        %v4273 = vsel %vm4270, %v4220, 0
        %v4275 = vsel %vm4270, %v4269, 0
        %vm4277 = vcmask 1043456
        %v4279 = vsel %vm4277, %v1488, 0
        %4281 = vmatprep.subr.mxu0 0.0
        %4282 = vmatpush1.msra.mxu0 %v4279
        %4283 = vmatprep.subr.mxu0 0.0
        %4284 = vmatpush1.msra.mxu0 0.0
        %4285 = vmatprep.subr.mxu0 0.0
        %4286 = vmatpush1.msra.mxu0 0.0
        %4287 = vmatprep.subr.mxu0 0.0
        %4288 = vmatpush1.msra.mxu0 0.0
        %4289 = vmatprep.subr.mxu0 0.0
        %4290 = vmatpush1.msra.mxu0 0.0
        %4291 = vmatprep.subr.mxu0 0.0
        %4292 = vmatpush1.msra.mxu0 0.0
        %4293 = vmatprep.subr.mxu0 0.0
        %4294 = vmatpush1.msra.mxu0 0.0
        %4295 = vmatprep.subr.mxu0 0.0
        %4296 = vmatpush1.msra.mxu0 0.0
        %4297 = vmatprep.subr.mxu0 0.0
        %4298 = vmatpush1.msra.mxu0 0.0
        %4299 = vmatprep.subr.mxu0 0.0
        %4300 = vmatpush1.msra.mxu0 0.0
        %4301 = vmatprep.subr.mxu0 0.0
        %4302 = vmatpush1.msra.mxu0 0.0
        %4303 = vmatprep.subr.mxu0 0.0
        %4304 = vmatpush1.msra.mxu0 0.0
        %4305 = vmatprep.subr.mxu0 0.0
        %4306 = vmatpush1.msra.mxu0 0.0
        %4307 = vmatprep.subr.mxu0 0.0
        %4308 = vmatpush1.msra.mxu0 0.0
        %4309 = vmatprep.subr.mxu0 0.0
        %4310 = vmatpush1.msra.mxu0 0.0
        %4311 = vmatprep.subr.mxu0 0.0
        %4312 = vmatpush1.msra.mxu0 0.0
        %4313 = vmatprep.subr.mxu0 0.0
        %4314 = vmatpush1.msra.mxu0 0.0
        %4315 = vmatprep.subr.mxu0 0.0
        %4316 = vmatpush1.msra.mxu0 0.0
        %4317 = vmatprep.subr.mxu0 0.0
        %4318 = vmatpush1.msra.mxu0 0.0
        %4319 = vmatprep.subr.mxu0 0.0
        %4320 = vmatpush1.msra.mxu0 0.0
        %4321 = vmatprep.subr.mxu0 0.0
        %4322 = vmatpush1.msra.mxu0 0.0
        %4323 = vmatprep.subr.mxu0 0.0
        %4324 = vmatpush1.msra.mxu0 0.0
        %4325 = vmatprep.subr.mxu0 0.0
        %4326 = vmatpush1.msra.mxu0 0.0
        %4327 = vmatprep.subr.mxu0 0.0
        %4328 = vmatpush1.msra.mxu0 0.0
        %4329 = vmatprep.subr.mxu0 0.0
        %4330 = vmatpush1.msra.mxu0 0.0
        %4331 = vmatprep.subr.mxu0 0.0
        %4332 = vmatpush1.msra.mxu0 0.0
        %4333 = vmatprep.subr.mxu0 0.0
        %4334 = vmatpush1.msra.mxu0 0.0
        %4335 = vmatprep.subr.mxu0 0.0
        %4336 = vmatpush1.msra.mxu0 0.0
        %4337 = vmatprep.subr.mxu0 0.0
        %4338 = vmatpush1.msra.mxu0 0.0
        %4339 = vmatprep.subr.mxu0 0.0
        %4340 = vmatpush1.msra.mxu0 0.0
        %4341 = vmatprep.subr.mxu0 0.0
        %4342 = vmatpush1.msra.mxu0 0.0
        %4343 = vmatprep.subr.mxu0 0.0
        %4344 = vmatpush1.msra.mxu0 0.0
        %4345 = vmatprep.mubr.f32.mxu0 0.0
        %4346 = vmatmul.mubr.f32.gmra.mrb[0].mxu0 %v4271
        %v4347 = vpop.f32.mrb[0].mxu0
        %v4348 = vadd.f32 0.0, %v4347
        %v4349 = vpop.f32.mrb[0].mxu0
        %4350 = vmatprep.mubr.f32.mxu0 0.0
        %4351 = vmatmul.mubr.f32.gmra.mrb[0].mxu0 %v4273
        %v4352 = vpop.f32.mrb[0].mxu0
        %v4353 = vadd.f32 0.0, %v4352
        %v4354 = vpop.f32.mrb[0].mxu0
        %4355 = vmatprep.mubr.f32.mxu0 0.0
        %4356 = vmatmul.mubr.f32.gmra.mrb[0].mxu0 %v4275
        %v4357 = vpop.f32.mrb[0].mxu0
        %v4358 = vadd.f32 0.0, %v4357
        %v4359 = vpop.f32.mrb[0].mxu0
        %4360 = vdwg.mxu0
        %v4364 = vcombine.high %v4348, %v4348
        %v4366 = vunpack.c.l.s4 1966171168
        %v4367 = vunpack.c.0.s8 %v4366
        %v4368 = vlaneseq
        %v4369 = vshrl.u32 %v4368, 7
        %v4370 = vsub.s32 %v4367, %v4369
        %v4371 = vrot.slane %v4348, %v4370
        %v4373 = vunpack.c.l.s4 1966171168
        %v4374 = vunpack.c.0.s8 %v4373
        %v4375 = vlaneseq
        %v4376 = vshrl.u32 %v4375, 7
        %v4377 = vsub.s32 %v4374, %v4376
        %v4378 = vrot.slane %v4364, %v4377
        %v4379 = vcombine.high %v4371, %v4371
        %v4380 = vcombine.high %v4378, %v4378
        %v4382 = vunpack.c.l.s4 1966171168
        %v4383 = vunpack.c.0.s8 %v4382
        %v4384 = vlaneseq
        %v4385 = vshrl.u32 %v4384, 7
        %v4386 = vsub.s32 %v4383, %v4385
        %v4387 = vrot.slane %v4371, %v4386
        %v4389 = vunpack.c.l.s4 1966171168
        %v4390 = vunpack.c.0.s8 %v4389
        %v4391 = vlaneseq
        %v4392 = vshrl.u32 %v4391, 7
        %v4393 = vsub.s32 %v4390, %v4392
        %v4394 = vrot.slane %v4378, %v4393
        %v4396 = vunpack.c.l.s4 1966171168
        %v4397 = vunpack.c.0.s8 %v4396
        %v4398 = vlaneseq
        %v4399 = vshrl.u32 %v4398, 7
        %v4400 = vsub.s32 %v4397, %v4399
        %v4401 = vrot.slane %v4379, %v4400
        %v4403 = vunpack.c.l.s4 1966171168
        %v4404 = vunpack.c.0.s8 %v4403
        %v4405 = vlaneseq
        %v4406 = vshrl.u32 %v4405, 7
        %v4407 = vsub.s32 %v4404, %v4406
        %v4408 = vrot.slane %v4380, %v4407
        %v4409 = vcombine.high %v4387, %v4387
        %v4410 = vcombine.high %v4394, %v4394
        %v4411 = vcombine.high %v4401, %v4401
        %v4412 = vcombine.high %v4408, %v4408
        %v4413 = vcombine.high %v4353, %v4353
        %v4415 = vunpack.c.l.s4 1966171168
        %v4416 = vunpack.c.0.s8 %v4415
        %v4417 = vlaneseq
        %v4418 = vshrl.u32 %v4417, 7
        %v4419 = vsub.s32 %v4416, %v4418
        %v4420 = vrot.slane %v4353, %v4419
        %v4422 = vunpack.c.l.s4 1966171168
        %v4423 = vunpack.c.0.s8 %v4422
        %v4424 = vlaneseq
        %v4425 = vshrl.u32 %v4424, 7
        %v4426 = vsub.s32 %v4423, %v4425
        %v4427 = vrot.slane %v4413, %v4426
        %v4428 = vcombine.high %v4420, %v4420
        %v4429 = vcombine.high %v4427, %v4427
        %v4431 = vunpack.c.l.s4 1966171168
        %v4432 = vunpack.c.0.s8 %v4431
        %v4433 = vlaneseq
        %v4434 = vshrl.u32 %v4433, 7
        %v4435 = vsub.s32 %v4432, %v4434
        %v4436 = vrot.slane %v4420, %v4435
        %v4438 = vunpack.c.l.s4 1966171168
        %v4439 = vunpack.c.0.s8 %v4438
        %v4440 = vlaneseq
        %v4441 = vshrl.u32 %v4440, 7
        %v4442 = vsub.s32 %v4439, %v4441
        %v4443 = vrot.slane %v4427, %v4442
        %v4445 = vunpack.c.l.s4 1966171168
        %v4446 = vunpack.c.0.s8 %v4445
        %v4447 = vlaneseq
        %v4448 = vshrl.u32 %v4447, 7
        %v4449 = vsub.s32 %v4446, %v4448
        %v4450 = vrot.slane %v4428, %v4449
        %v4452 = vunpack.c.l.s4 1966171168
        %v4453 = vunpack.c.0.s8 %v4452
        %v4454 = vlaneseq
        %v4455 = vshrl.u32 %v4454, 7
        %v4456 = vsub.s32 %v4453, %v4455
        %v4457 = vrot.slane %v4429, %v4456
        %v4458 = vcombine.high %v4436, %v4436
        %v4459 = vcombine.high %v4443, %v4443
        %v4460 = vcombine.high %v4450, %v4450
        %v4461 = vcombine.high %v4457, %v4457
        %v4462 = vcombine.high %v4358, %v4358
        %v4464 = vunpack.c.l.s4 1966171168
        %v4465 = vunpack.c.0.s8 %v4464
        %v4466 = vlaneseq
        %v4467 = vshrl.u32 %v4466, 7
        %v4468 = vsub.s32 %v4465, %v4467
        %v4469 = vrot.slane %v4358, %v4468
        %v4471 = vunpack.c.l.s4 1966171168
        %v4472 = vunpack.c.0.s8 %v4471
        %v4473 = vlaneseq
        %v4474 = vshrl.u32 %v4473, 7
        %v4475 = vsub.s32 %v4472, %v4474
        %v4476 = vrot.slane %v4462, %v4475
        %v4477 = vcombine.high %v4469, %v4469
        %v4478 = vcombine.high %v4476, %v4476
        %v4480 = vunpack.c.l.s4 1966171168
        %v4481 = vunpack.c.0.s8 %v4480
        %v4482 = vlaneseq
        %v4483 = vshrl.u32 %v4482, 7
        %v4484 = vsub.s32 %v4481, %v4483
        %v4485 = vrot.slane %v4469, %v4484
        %v4487 = vunpack.c.l.s4 1966171168
        %v4488 = vunpack.c.0.s8 %v4487
        %v4489 = vlaneseq
        %v4490 = vshrl.u32 %v4489, 7
        %v4491 = vsub.s32 %v4488, %v4490
        %v4492 = vrot.slane %v4476, %v4491
        %v4494 = vunpack.c.l.s4 1966171168
        %v4495 = vunpack.c.0.s8 %v4494
        %v4496 = vlaneseq
        %v4497 = vshrl.u32 %v4496, 7
        %v4498 = vsub.s32 %v4495, %v4497
        %v4499 = vrot.slane %v4477, %v4498
        %v4501 = vunpack.c.l.s4 1966171168
        %v4502 = vunpack.c.0.s8 %v4501
        %v4503 = vlaneseq
        %v4504 = vshrl.u32 %v4503, 7
        %v4505 = vsub.s32 %v4502, %v4504
        %v4506 = vrot.slane %v4478, %v4505
        %v4507 = vcombine.high %v4485, %v4485
        %v4508 = vcombine.high %v4492, %v4492
        %v4509 = vcombine.high %v4499, %v4499
        %v4510 = vcombine.high %v4506, %v4506
        %v4538 = vcombine.high %v1926, %v1926
        %v4540 = vunpack.c.l.s4 1966171168
        %v4541 = vunpack.c.0.s8 %v4540
        %v4542 = vlaneseq
        %v4543 = vshrl.u32 %v4542, 7
        %v4544 = vsub.s32 %v4541, %v4543
        %v4545 = vrot.slane %v1926, %v4544
        %v4547 = vunpack.c.l.s4 1966171168
        %v4548 = vunpack.c.0.s8 %v4547
        %v4549 = vlaneseq
        %v4550 = vshrl.u32 %v4549, 7
        %v4551 = vsub.s32 %v4548, %v4550
        %v4552 = vrot.slane %v4538, %v4551
        %v4553 = vcombine.high %v4545, %v4545
        %v4554 = vcombine.high %v4552, %v4552
        %v4556 = vunpack.c.l.s4 1966171168
        %v4557 = vunpack.c.0.s8 %v4556
        %v4558 = vlaneseq
        %v4559 = vshrl.u32 %v4558, 7
        %v4560 = vsub.s32 %v4557, %v4559
        %v4561 = vrot.slane %v4545, %v4560
        %v4563 = vunpack.c.l.s4 1966171168
        %v4564 = vunpack.c.0.s8 %v4563
        %v4565 = vlaneseq
        %v4566 = vshrl.u32 %v4565, 7
        %v4567 = vsub.s32 %v4564, %v4566
        %v4568 = vrot.slane %v4552, %v4567
        %v4570 = vunpack.c.l.s4 1966171168
        %v4571 = vunpack.c.0.s8 %v4570
        %v4572 = vlaneseq
        %v4573 = vshrl.u32 %v4572, 7
        %v4574 = vsub.s32 %v4571, %v4573
        %v4575 = vrot.slane %v4553, %v4574
        %v4577 = vunpack.c.l.s4 1966171168
        %v4578 = vunpack.c.0.s8 %v4577
        %v4579 = vlaneseq
        %v4580 = vshrl.u32 %v4579, 7
        %v4581 = vsub.s32 %v4578, %v4580
        %v4582 = vrot.slane %v4554, %v4581
        %v4583 = vcombine.high %v4561, %v4561
        %v4584 = vcombine.high %v4568, %v4568
        %v4585 = vcombine.high %v4575, %v4575
        %v4586 = vcombine.high %v4582, %v4582
        %v4587 = vcombine.high %v1931, %v1931
        %v4589 = vunpack.c.l.s4 1966171168
        %v4590 = vunpack.c.0.s8 %v4589
        %v4591 = vlaneseq
        %v4592 = vshrl.u32 %v4591, 7
        %v4593 = vsub.s32 %v4590, %v4592
        %v4594 = vrot.slane %v1931, %v4593
        %v4596 = vunpack.c.l.s4 1966171168
        %v4597 = vunpack.c.0.s8 %v4596
        %v4598 = vlaneseq
        %v4599 = vshrl.u32 %v4598, 7
        %v4600 = vsub.s32 %v4597, %v4599
        %v4601 = vrot.slane %v4587, %v4600
        %v4602 = vcombine.high %v4594, %v4594
        %v4603 = vcombine.high %v4601, %v4601
        %v4605 = vunpack.c.l.s4 1966171168
        %v4606 = vunpack.c.0.s8 %v4605
        %v4607 = vlaneseq
        %v4608 = vshrl.u32 %v4607, 7
        %v4609 = vsub.s32 %v4606, %v4608
        %v4610 = vrot.slane %v4594, %v4609
        %v4612 = vunpack.c.l.s4 1966171168
        %v4613 = vunpack.c.0.s8 %v4612
        %v4614 = vlaneseq
        %v4615 = vshrl.u32 %v4614, 7
        %v4616 = vsub.s32 %v4613, %v4615
        %v4617 = vrot.slane %v4601, %v4616
        %v4619 = vunpack.c.l.s4 1966171168
        %v4620 = vunpack.c.0.s8 %v4619
        %v4621 = vlaneseq
        %v4622 = vshrl.u32 %v4621, 7
        %v4623 = vsub.s32 %v4620, %v4622
        %v4624 = vrot.slane %v4602, %v4623
        %v4626 = vunpack.c.l.s4 1966171168
        %v4627 = vunpack.c.0.s8 %v4626
        %v4628 = vlaneseq
        %v4629 = vshrl.u32 %v4628, 7
        %v4630 = vsub.s32 %v4627, %v4629
        %v4631 = vrot.slane %v4603, %v4630
        %v4632 = vcombine.high %v4610, %v4610
        %v4633 = vcombine.high %v4617, %v4617
        %v4634 = vcombine.high %v4624, %v4624
        %v4635 = vcombine.high %v4631, %v4631
        %v4636 = vcombine.high %v1936, %v1936
        %v4638 = vunpack.c.l.s4 1966171168
        %v4639 = vunpack.c.0.s8 %v4638
        %v4640 = vlaneseq
        %v4641 = vshrl.u32 %v4640, 7
        %v4642 = vsub.s32 %v4639, %v4641
        %v4643 = vrot.slane %v1936, %v4642
        %v4645 = vunpack.c.l.s4 1966171168
        %v4646 = vunpack.c.0.s8 %v4645
        %v4647 = vlaneseq
        %v4648 = vshrl.u32 %v4647, 7
        %v4649 = vsub.s32 %v4646, %v4648
        %v4650 = vrot.slane %v4636, %v4649
        %v4651 = vcombine.high %v4643, %v4643
        %v4652 = vcombine.high %v4650, %v4650
        %v4654 = vunpack.c.l.s4 1966171168
        %v4655 = vunpack.c.0.s8 %v4654
        %v4656 = vlaneseq
        %v4657 = vshrl.u32 %v4656, 7
        %v4658 = vsub.s32 %v4655, %v4657
        %v4659 = vrot.slane %v4643, %v4658
        %v4661 = vunpack.c.l.s4 1966171168
        %v4662 = vunpack.c.0.s8 %v4661
        %v4663 = vlaneseq
        %v4664 = vshrl.u32 %v4663, 7
        %v4665 = vsub.s32 %v4662, %v4664
        %v4666 = vrot.slane %v4650, %v4665
        %v4668 = vunpack.c.l.s4 1966171168
        %v4669 = vunpack.c.0.s8 %v4668
        %v4670 = vlaneseq
        %v4671 = vshrl.u32 %v4670, 7
        %v4672 = vsub.s32 %v4669, %v4671
        %v4673 = vrot.slane %v4651, %v4672
        %v4675 = vunpack.c.l.s4 1966171168
        %v4676 = vunpack.c.0.s8 %v4675
        %v4677 = vlaneseq
        %v4678 = vshrl.u32 %v4677, 7
        %v4679 = vsub.s32 %v4676, %v4678
        %v4680 = vrot.slane %v4652, %v4679
        %v4681 = vcombine.high %v4659, %v4659
        %v4682 = vcombine.high %v4666, %v4666
        %v4683 = vcombine.high %v4673, %v4673
        %v4684 = vcombine.high %v4680, %v4680
        %v4709 = vmul.f32 %v4387, %v4561
        %v4710 = vmul.f32 %v4401, %v4575
        %v4711 = vmul.f32 %v4409, %v4583
        %v4712 = vmul.f32 %v4411, %v4585
        %v4713 = vmul.f32 %v4394, %v4568
        %v4714 = vmul.f32 %v4408, %v4582
        %v4715 = vmul.f32 %v4410, %v4584
        %v4716 = vmul.f32 %v4412, %v4586
        %v4717 = vmul.f32 %v4436, %v4610
        %v4718 = vmul.f32 %v4450, %v4624
        %v4719 = vmul.f32 %v4458, %v4632
        %v4720 = vmul.f32 %v4460, %v4634
        %v4721 = vmul.f32 %v4443, %v4617
        %v4722 = vmul.f32 %v4457, %v4631
        %v4723 = vmul.f32 %v4459, %v4633
        %v4724 = vmul.f32 %v4461, %v4635
        %v4725 = vmul.f32 %v4485, %v4659
        %v4726 = vmul.f32 %v4499, %v4673
        %v4727 = vmul.f32 %v4507, %v4681
        %v4728 = vmul.f32 %v4509, %v4683
        %v4729 = vmul.f32 %v4492, %v4666
        %v4730 = vmul.f32 %v4506, %v4680
        %v4731 = vmul.f32 %v4508, %v4682
        %v4732 = vmul.f32 %v4510, %v4684
        %v4757 = vcombine.low %v4709, %v4710
        %v4759 = vunpack.c.l.s4 1966171168
        %v4760 = vunpack.c.0.s8 %v4759
        %v4761 = vlaneseq
        %v4762 = vshrl.u32 %v4761, 7
        %v4763 = vsub.s32 %v4760, %v4762
        %v4764 = vrot.slane %v4757, %v4763
        %v4766 = vunpack.c.l.s4 1966171168
        %v4767 = vunpack.c.0.s8 %v4766
        %v4768 = vlaneseq
        %v4769 = vshrl.u32 %v4768, 7
        %v4770 = vsub.s32 %v4767, %v4769
        %v4771 = vrot.slane %v4711, %v4770
        %v4772 = vcombine.low %v4764, %v4771
        %v4774 = vunpack.c.l.s4 1966171168
        %v4775 = vunpack.c.0.s8 %v4774
        %v4776 = vlaneseq
        %v4777 = vshrl.u32 %v4776, 7
        %v4778 = vsub.s32 %v4775, %v4777
        %v4779 = vrot.slane %v4772, %v4778
        %v4780 = vcombine.low %v4712, %v4713
        %v4782 = vunpack.c.l.s4 1966171168
        %v4783 = vunpack.c.0.s8 %v4782
        %v4784 = vlaneseq
        %v4785 = vshrl.u32 %v4784, 7
        %v4786 = vsub.s32 %v4783, %v4785
        %v4787 = vrot.slane %v4780, %v4786
        %v4789 = vunpack.c.l.s4 1966171168
        %v4790 = vunpack.c.0.s8 %v4789
        %v4791 = vlaneseq
        %v4792 = vshrl.u32 %v4791, 7
        %v4793 = vsub.s32 %v4790, %v4792
        %v4794 = vrot.slane %v4714, %v4793
        %v4795 = vcombine.low %v4787, %v4794
        %v4797 = vunpack.c.l.s4 1966171168
        %v4798 = vunpack.c.0.s8 %v4797
        %v4799 = vlaneseq
        %v4800 = vshrl.u32 %v4799, 7
        %v4801 = vsub.s32 %v4798, %v4800
        %v4802 = vrot.slane %v4795, %v4801
        %v4803 = vcombine.low %v4715, %v4716
        %v4805 = vunpack.c.l.s4 1966171168
        %v4806 = vunpack.c.0.s8 %v4805
        %v4807 = vlaneseq
        %v4808 = vshrl.u32 %v4807, 7
        %v4809 = vsub.s32 %v4806, %v4808
        %v4810 = vrot.slane %v4803, %v4809
        %v4812 = vunpack.c.l.s4 1966171168
        %v4813 = vunpack.c.0.s8 %v4812
        %v4814 = vlaneseq
        %v4815 = vshrl.u32 %v4814, 7
        %v4816 = vsub.s32 %v4813, %v4815
        %v4817 = vrot.slane %v4717, %v4816
        %v4818 = vcombine.low %v4810, %v4817
        %v4820 = vunpack.c.l.s4 1966171168
        %v4821 = vunpack.c.0.s8 %v4820
        %v4822 = vlaneseq
        %v4823 = vshrl.u32 %v4822, 7
        %v4824 = vsub.s32 %v4821, %v4823
        %v4825 = vrot.slane %v4818, %v4824
        %v4826 = vcombine.low %v4718, %v4719
        %v4828 = vunpack.c.l.s4 1966171168
        %v4829 = vunpack.c.0.s8 %v4828
        %v4830 = vlaneseq
        %v4831 = vshrl.u32 %v4830, 7
        %v4832 = vsub.s32 %v4829, %v4831
        %v4833 = vrot.slane %v4826, %v4832
        %v4835 = vunpack.c.l.s4 1966171168
        %v4836 = vunpack.c.0.s8 %v4835
        %v4837 = vlaneseq
        %v4838 = vshrl.u32 %v4837, 7
        %v4839 = vsub.s32 %v4836, %v4838
        %v4840 = vrot.slane %v4720, %v4839
        %v4841 = vcombine.low %v4833, %v4840
        %v4843 = vunpack.c.l.s4 1966171168
        %v4844 = vunpack.c.0.s8 %v4843
        %v4845 = vlaneseq
        %v4846 = vshrl.u32 %v4845, 7
        %v4847 = vsub.s32 %v4844, %v4846
        %v4848 = vrot.slane %v4841, %v4847
        %v4849 = vcombine.low %v4721, %v4722
        %v4851 = vunpack.c.l.s4 1966171168
        %v4852 = vunpack.c.0.s8 %v4851
        %v4853 = vlaneseq
        %v4854 = vshrl.u32 %v4853, 7
        %v4855 = vsub.s32 %v4852, %v4854
        %v4856 = vrot.slane %v4849, %v4855
        %v4858 = vunpack.c.l.s4 1966171168
        %v4859 = vunpack.c.0.s8 %v4858
        %v4860 = vlaneseq
        %v4861 = vshrl.u32 %v4860, 7
        %v4862 = vsub.s32 %v4859, %v4861
        %v4863 = vrot.slane %v4723, %v4862
        %v4864 = vcombine.low %v4856, %v4863
        %v4866 = vunpack.c.l.s4 1966171168
        %v4867 = vunpack.c.0.s8 %v4866
        %v4868 = vlaneseq
        %v4869 = vshrl.u32 %v4868, 7
        %v4870 = vsub.s32 %v4867, %v4869
        %v4871 = vrot.slane %v4864, %v4870
        %v4872 = vcombine.low %v4724, %v4725
        %v4874 = vunpack.c.l.s4 1966171168
        %v4875 = vunpack.c.0.s8 %v4874
        %v4876 = vlaneseq
        %v4877 = vshrl.u32 %v4876, 7
        %v4878 = vsub.s32 %v4875, %v4877
        %v4879 = vrot.slane %v4872, %v4878
        %v4881 = vunpack.c.l.s4 1966171168
        %v4882 = vunpack.c.0.s8 %v4881
        %v4883 = vlaneseq
        %v4884 = vshrl.u32 %v4883, 7
        %v4885 = vsub.s32 %v4882, %v4884
        %v4886 = vrot.slane %v4726, %v4885
        %v4887 = vcombine.low %v4879, %v4886
        %v4889 = vunpack.c.l.s4 1966171168
        %v4890 = vunpack.c.0.s8 %v4889
        %v4891 = vlaneseq
        %v4892 = vshrl.u32 %v4891, 7
        %v4893 = vsub.s32 %v4890, %v4892
        %v4894 = vrot.slane %v4887, %v4893
        %v4895 = vcombine.low %v4727, %v4728
        %v4897 = vunpack.c.l.s4 1966171168
        %v4898 = vunpack.c.0.s8 %v4897
        %v4899 = vlaneseq
        %v4900 = vshrl.u32 %v4899, 7
        %v4901 = vsub.s32 %v4898, %v4900
        %v4902 = vrot.slane %v4895, %v4901
        %v4904 = vunpack.c.l.s4 1966171168
        %v4905 = vunpack.c.0.s8 %v4904
        %v4906 = vlaneseq
        %v4907 = vshrl.u32 %v4906, 7
        %v4908 = vsub.s32 %v4905, %v4907
        %v4909 = vrot.slane %v4729, %v4908
        %v4910 = vcombine.low %v4902, %v4909
        %v4912 = vunpack.c.l.s4 1966171168
        %v4913 = vunpack.c.0.s8 %v4912
        %v4914 = vlaneseq
        %v4915 = vshrl.u32 %v4914, 7
        %v4916 = vsub.s32 %v4913, %v4915
        %v4917 = vrot.slane %v4910, %v4916
        %v4918 = vcombine.low %v4730, %v4731
        %v4920 = vunpack.c.l.s4 1966171168
        %v4921 = vunpack.c.0.s8 %v4920
        %v4922 = vlaneseq
        %v4923 = vshrl.u32 %v4922, 7
        %v4924 = vsub.s32 %v4921, %v4923
        %v4925 = vrot.slane %v4918, %v4924
        %v4927 = vunpack.c.l.s4 1966171168
        %v4928 = vunpack.c.0.s8 %v4927
        %v4929 = vlaneseq
        %v4930 = vshrl.u32 %v4929, 7
        %v4931 = vsub.s32 %v4928, %v4930
        %v4932 = vrot.slane %v4732, %v4931
        %v4933 = vcombine.low %v4925, %v4932
        %v4935 = vunpack.c.l.s4 1966171168
        %v4936 = vunpack.c.0.s8 %v4935
        %v4937 = vlaneseq
        %v4938 = vshrl.u32 %v4937, 7
        %v4939 = vsub.s32 %v4936, %v4938
        %v4940 = vrot.slane %v4933, %v4939
        %vm4949 = vcmask 256000
        %v4950 = vsel %vm4949, %v4779, 0.0
        %v4951 = vrot.slane %v4950, 4
        %v4952 = vadd.f32 %v4950, %v4951
        %v4953 = vrot.slane %v4952, 2
        %v4954 = vadd.f32 %v4952, %v4953
        %v4955 = vrot.slane %v4954, 1
        %v4956 = vadd.f32 %v4954, %v4955
        %v4957 = vsel %vm4949, %v4802, 0.0
        %v4958 = vrot.slane %v4957, 4
        %v4959 = vadd.f32 %v4957, %v4958
        %v4960 = vrot.slane %v4959, 2
        %v4961 = vadd.f32 %v4959, %v4960
        %v4962 = vrot.slane %v4961, 1
        %v4963 = vadd.f32 %v4961, %v4962
        %v4964 = vsel %vm4949, %v4825, 0.0
        %v4965 = vrot.slane %v4964, 4
        %v4966 = vadd.f32 %v4964, %v4965
        %v4967 = vrot.slane %v4966, 2
        %v4968 = vadd.f32 %v4966, %v4967
        %v4969 = vrot.slane %v4968, 1
        %v4970 = vadd.f32 %v4968, %v4969
        %v4971 = vsel %vm4949, %v4848, 0.0
        %v4972 = vrot.slane %v4971, 4
        %v4973 = vadd.f32 %v4971, %v4972
        %v4974 = vrot.slane %v4973, 2
        %v4975 = vadd.f32 %v4973, %v4974
        %v4976 = vrot.slane %v4975, 1
        %v4977 = vadd.f32 %v4975, %v4976
        %v4978 = vsel %vm4949, %v4871, 0.0
        %v4979 = vrot.slane %v4978, 4
        %v4980 = vadd.f32 %v4978, %v4979
        %v4981 = vrot.slane %v4980, 2
        %v4982 = vadd.f32 %v4980, %v4981
        %v4983 = vrot.slane %v4982, 1
        %v4984 = vadd.f32 %v4982, %v4983
        %v4985 = vsel %vm4949, %v4894, 0.0
        %v4986 = vrot.slane %v4985, 4
        %v4987 = vadd.f32 %v4985, %v4986
        %v4988 = vrot.slane %v4987, 2
        %v4989 = vadd.f32 %v4987, %v4988
        %v4990 = vrot.slane %v4989, 1
        %v4991 = vadd.f32 %v4989, %v4990
        %v4992 = vsel %vm4949, %v4917, 0.0
        %v4993 = vrot.slane %v4992, 4
        %v4994 = vadd.f32 %v4992, %v4993
        %v4995 = vrot.slane %v4994, 2
        %v4996 = vadd.f32 %v4994, %v4995
        %v4997 = vrot.slane %v4996, 1
        %v4998 = vadd.f32 %v4996, %v4997
        %v4999 = vsel %vm4949, %v4940, 0.0
        %v5000 = vrot.slane %v4999, 4
        %v5001 = vadd.f32 %v4999, %v5000
        %v5002 = vrot.slane %v5001, 2
        %v5003 = vadd.f32 %v5001, %v5002
        %v5004 = vrot.slane %v5003, 1
        %v5005 = vadd.f32 %v5003, %v5004
        %vm5014 = vcmask 1041409
        %v5015 = vsel %vm5014, %v4963, %v4956
        %vm5016 = vcmask 1042434
        %v5017 = vsel %vm5016, %v4970, %v5015
        %vm5018 = vcmask 1043459
        %v5019 = vsel %vm5018, %v4977, %v5017
        %vm5020 = vcmask 1044484
        %v5021 = vsel %vm5020, %v4984, %v5019
        %vm5022 = vcmask 1045509
        %v5023 = vsel %vm5022, %v4991, %v5021
        %vm5024 = vcmask 1046534
        %v5025 = vsel %vm5024, %v4998, %v5023
        %vm5026 = vcmask 1047559
        %v5027 = vsel %vm5026, %v5005, %v5025
        %v5029 = vadd.f32 %v1282, %v5027
        %v5030 = vld [vmem:[%s1233] sm:$0x1]
        %v5031 = vld [vmem:[%s1236] sm:$0x1]
        %v5032 = vsel %vm1491, %v5029, 0.0
        %5033 = vadd.xlane.f32.xlu0 %v5032
        %v5034 = vpop.xlane.xlu0 %5033
        %v5035 = vmul.f32 %v5034, %v1495
        %v5036 = vsub.f32 %v5029, %v5035
        %v5037 = vmul.f32 %v5036, %v5036
        %v5038 = vsel %vm1491, %v5037, 0.0
        %5039 = vadd.xlane.f32.xlu0 %v5038
        %v5040 = vpop.xlane.xlu0 %5039
        %v5041 = vmul.f32 %v5040, %v1495
        %v5042 = vadd.f32 %v5041, 1e-05
        %v5043 = vrsqrt.pop %v5042
        %v5044 = vmul.f32 %v5036, %v5043
        %v5046 = vlaneseq
        %v5047 = vshrl.u32 %v5046, 7
        %v5048 = vsub.s32 0, %v5047
        %v5049 = vrot.slane %v5030, %v5048
        %v5051 = vmul.f32 %v5044, %v5049
        %v5053 = vlaneseq
        %v5054 = vshrl.u32 %v5053, 7
        %v5055 = vsub.s32 0, %v5054
        %v5056 = vrot.slane %v5031, %v5055
        %v5058 = vadd.f32 %v5051, %v5056
        %v5059 = vld [vmem:[%s1241] sm:$0xff]
        %v5060 = vld [vmem:[%s1241 + $0x8] sm:$0xff]
        %v5061 = vld [vmem:[%s1241 + $0x10] sm:$0xff]
        %v5062 = vld [vmem:[%s1241 + $0x18] sm:$0xff]
        %v5063 = vld [vmem:[%s1244] sm:$0x1]
        %v5065 = vlaneseq
        %v5066 = vshrl.u32 %v5065, 7
        %v5067 = vsub.s32 0, %v5066
        %v5068 = vrot.slane %v5063, %v5067
        %v5071 = vsel %vm1491, %v5058, 0
        %5073 = vmatprep.subr.mxu0 0.0
        %5074 = vmatpush1.msra.mxu0 %v5059
        %5075 = vmatprep.subr.mxu0 0.0
        %5076 = vmatpush1.msra.mxu0 %v5060
        %5077 = vmatprep.subr.mxu0 0.0
        %5078 = vmatpush1.msra.mxu0 %v5061
        %5079 = vmatprep.subr.mxu0 0.0
        %5080 = vmatpush1.msra.mxu0 %v5062
        %5081 = vmatprep.subr.mxu0 0.0
        %5082 = vmatpush1.msra.mxu0 0.0
        %5083 = vmatprep.subr.mxu0 0.0
        %5084 = vmatpush1.msra.mxu0 0.0
        %5085 = vmatprep.subr.mxu0 0.0
        %5086 = vmatpush1.msra.mxu0 0.0
        %5087 = vmatprep.subr.mxu0 0.0
        %5088 = vmatpush1.msra.mxu0 0.0
        %5089 = vmatprep.subr.mxu0 0.0
        %5090 = vmatpush1.msra.mxu0 0.0
        %5091 = vmatprep.subr.mxu0 0.0
        %5092 = vmatpush1.msra.mxu0 0.0
        %5093 = vmatprep.subr.mxu0 0.0
        %5094 = vmatpush1.msra.mxu0 0.0
        %5095 = vmatprep.subr.mxu0 0.0
        %5096 = vmatpush1.msra.mxu0 0.0
        %5097 = vmatprep.subr.mxu0 0.0
        %5098 = vmatpush1.msra.mxu0 0.0
        %5099 = vmatprep.subr.mxu0 0.0
        %5100 = vmatpush1.msra.mxu0 0.0
        %5101 = vmatprep.subr.mxu0 0.0
        %5102 = vmatpush1.msra.mxu0 0.0
        %5103 = vmatprep.subr.mxu0 0.0
        %5104 = vmatpush1.msra.mxu0 0.0
        %5105 = vmatprep.subr.mxu0 0.0
        %5106 = vmatpush1.msra.mxu0 0.0
        %5107 = vmatprep.subr.mxu0 0.0
        %5108 = vmatpush1.msra.mxu0 0.0
        %5109 = vmatprep.subr.mxu0 0.0
        %5110 = vmatpush1.msra.mxu0 0.0
        %5111 = vmatprep.subr.mxu0 0.0
        %5112 = vmatpush1.msra.mxu0 0.0
        %5113 = vmatprep.subr.mxu0 0.0
        %5114 = vmatpush1.msra.mxu0 0.0
        %5115 = vmatprep.subr.mxu0 0.0
        %5116 = vmatpush1.msra.mxu0 0.0
        %5117 = vmatprep.subr.mxu0 0.0
        %5118 = vmatpush1.msra.mxu0 0.0
        %5119 = vmatprep.subr.mxu0 0.0
        %5120 = vmatpush1.msra.mxu0 0.0
        %5121 = vmatprep.subr.mxu0 0.0
        %5122 = vmatpush1.msra.mxu0 0.0
        %5123 = vmatprep.subr.mxu0 0.0
        %5124 = vmatpush1.msra.mxu0 0.0
        %5125 = vmatprep.subr.mxu0 0.0
        %5126 = vmatpush1.msra.mxu0 0.0
        %5127 = vmatprep.subr.mxu0 0.0
        %5128 = vmatpush1.msra.mxu0 0.0
        %5129 = vmatprep.subr.mxu0 0.0
        %5130 = vmatpush1.msra.mxu0 0.0
        %5131 = vmatprep.subr.mxu0 0.0
        %5132 = vmatpush1.msra.mxu0 0.0
        %5133 = vmatprep.subr.mxu0 0.0
        %5134 = vmatpush1.msra.mxu0 0.0
        %5135 = vmatprep.subr.mxu0 0.0
        %5136 = vmatpush1.msra.mxu0 0.0
        %5137 = vmatprep.mubr.f32.mxu0 0.0
        %5138 = vmatmul.mubr.f32.gmra.mrb[0].mxu0 %v5071
        %v5139 = vpop.f32.mrb[0].mxu0
        %v5140 = vadd.f32 %v5068, %v5139
        %v5141 = vpop.f32.mrb[0].mxu0
        %5142 = vdwg.mxu0
        %v5144 = vcombine.high %v5140, %v5140
        %v5146 = vunpack.c.l.s4 1966171168
        %v5147 = vunpack.c.0.s8 %v5146
        %v5148 = vlaneseq
        %v5149 = vshrl.u32 %v5148, 7
        %v5150 = vsub.s32 %v5147, %v5149
        %v5151 = vrot.slane %v5140, %v5150
        %v5153 = vunpack.c.l.s4 1966171168
        %v5154 = vunpack.c.0.s8 %v5153
        %v5155 = vlaneseq
        %v5156 = vshrl.u32 %v5155, 7
        %v5157 = vsub.s32 %v5154, %v5156
        %v5158 = vrot.slane %v5144, %v5157
        %v5159 = vcombine.high %v5151, %v5151
        %v5160 = vcombine.high %v5158, %v5158
        %v5162 = vunpack.c.l.s4 1966171168
        %v5163 = vunpack.c.0.s8 %v5162
        %v5164 = vlaneseq
        %v5165 = vshrl.u32 %v5164, 7
        %v5166 = vsub.s32 %v5163, %v5165
        %v5167 = vrot.slane %v5151, %v5166
        %v5169 = vunpack.c.l.s4 1966171168
        %v5170 = vunpack.c.0.s8 %v5169
        %v5171 = vlaneseq
        %v5172 = vshrl.u32 %v5171, 7
        %v5173 = vsub.s32 %v5170, %v5172
        %v5174 = vrot.slane %v5158, %v5173
        %v5176 = vunpack.c.l.s4 1966171168
        %v5177 = vunpack.c.0.s8 %v5176
        %v5178 = vlaneseq
        %v5179 = vshrl.u32 %v5178, 7
        %v5180 = vsub.s32 %v5177, %v5179
        %v5181 = vrot.slane %v5159, %v5180
        %v5183 = vunpack.c.l.s4 1966171168
        %v5184 = vunpack.c.0.s8 %v5183
        %v5185 = vlaneseq
        %v5186 = vshrl.u32 %v5185, 7
        %v5187 = vsub.s32 %v5184, %v5186
        %v5188 = vrot.slane %v5160, %v5187
        %v5189 = vcombine.high %v5167, %v5167
        %v5190 = vcombine.high %v5174, %v5174
        %v5191 = vcombine.high %v5181, %v5181
        %v5192 = vcombine.high %v5188, %v5188
        %v5193 = vlaneseq
        %v5194 = vshrl.u32 %v5193, 7
        %v5195 = vsub.s32 0, %v5194
        %v5196 = vrot.slane %v5167, %v5195
        %v5197 = vlaneseq
        %v5198 = vshrl.u32 %v5197, 7
        %v5199 = vsub.s32 0, %v5198
        %v5200 = vrot.slane %v5181, %v5199
        %v5201 = vlaneseq
        %v5202 = vshrl.u32 %v5201, 7
        %v5203 = vsub.s32 0, %v5202
        %v5204 = vrot.slane %v5189, %v5203
        %v5205 = vlaneseq
        %v5206 = vshrl.u32 %v5205, 7
        %v5207 = vsub.s32 0, %v5206
        %v5208 = vrot.slane %v5191, %v5207
        %v5209 = vlaneseq
        %v5210 = vshrl.u32 %v5209, 7
        %v5211 = vsub.s32 0, %v5210
        %v5212 = vrot.slane %v5174, %v5211
        %v5213 = vlaneseq
        %v5214 = vshrl.u32 %v5213, 7
        %v5215 = vsub.s32 0, %v5214
        %v5216 = vrot.slane %v5188, %v5215
        %v5217 = vlaneseq
        %v5218 = vshrl.u32 %v5217, 7
        %v5219 = vsub.s32 0, %v5218
        %v5220 = vrot.slane %v5190, %v5219
        %v5221 = vlaneseq
        %v5222 = vshrl.u32 %v5221, 7
        %v5223 = vsub.s32 0, %v5222
        %v5224 = vrot.slane %v5192, %v5223
        %5233 = vrot.lane.b32.xlu0 %v5140, 96
        %v5234 = vpop.permute.xlu0 %5233
        %v5236 = vmul.f32 %v5196, %v5234
        %v5237 = vmul.f32 %v5200, %v5234
        %v5238 = vmul.f32 %v5204, %v5234
        %v5239 = vmul.f32 %v5208, %v5234
        %v5240 = vmul.f32 %v5212, %v5234
        %v5241 = vmul.f32 %v5216, %v5234
        %v5242 = vmul.f32 %v5220, %v5234
        %v5243 = vmul.f32 %v5224, %v5234
        %v5245 = vsel %vm1491, %v5236, 0
        %v5248 = vsel %vm1491, %v5237, 0
        %v5251 = vsel %vm1491, %v5238, 0
        %v5254 = vsel %vm1491, %v5239, 0
        %v5257 = vsel %vm1491, %v5240, 0
        %v5260 = vsel %vm1491, %v5241, 0
        %v5263 = vsel %vm1491, %v5242, 0
        %v5266 = vsel %vm1491, %v5243, 0
        %5268 = vmatprep.subr.mxu0 0.0
        %5269 = vmatpush1.msra.mxu0 %v1484
        %5270 = vmatprep.subr.mxu0 0.0
        %5271 = vmatpush1.msra.mxu0 %v1485
        %5272 = vmatprep.subr.mxu0 0.0
        %5273 = vmatpush1.msra.mxu0 %v1486
        %5274 = vmatprep.subr.mxu0 0.0
        %5275 = vmatpush1.msra.mxu0 %v1487
        %5276 = vmatprep.subr.mxu0 0.0
        %5277 = vmatpush1.msra.mxu0 0.0
        %5278 = vmatprep.subr.mxu0 0.0
        %5279 = vmatpush1.msra.mxu0 0.0
        %5280 = vmatprep.subr.mxu0 0.0
        %5281 = vmatpush1.msra.mxu0 0.0
        %5282 = vmatprep.subr.mxu0 0.0
        %5283 = vmatpush1.msra.mxu0 0.0
        %5284 = vmatprep.subr.mxu0 0.0
        %5285 = vmatpush1.msra.mxu0 0.0
        %5286 = vmatprep.subr.mxu0 0.0
        %5287 = vmatpush1.msra.mxu0 0.0
        %5288 = vmatprep.subr.mxu0 0.0
        %5289 = vmatpush1.msra.mxu0 0.0
        %5290 = vmatprep.subr.mxu0 0.0
        %5291 = vmatpush1.msra.mxu0 0.0
        %5292 = vmatprep.subr.mxu0 0.0
        %5293 = vmatpush1.msra.mxu0 0.0
        %5294 = vmatprep.subr.mxu0 0.0
        %5295 = vmatpush1.msra.mxu0 0.0
        %5296 = vmatprep.subr.mxu0 0.0
        %5297 = vmatpush1.msra.mxu0 0.0
        %5298 = vmatprep.subr.mxu0 0.0
        %5299 = vmatpush1.msra.mxu0 0.0
        %5300 = vmatprep.subr.mxu0 0.0
        %5301 = vmatpush1.msra.mxu0 0.0
        %5302 = vmatprep.subr.mxu0 0.0
        %5303 = vmatpush1.msra.mxu0 0.0
        %5304 = vmatprep.subr.mxu0 0.0
        %5305 = vmatpush1.msra.mxu0 0.0
        %5306 = vmatprep.subr.mxu0 0.0
        %5307 = vmatpush1.msra.mxu0 0.0
        %5308 = vmatprep.subr.mxu0 0.0
        %5309 = vmatpush1.msra.mxu0 0.0
        %5310 = vmatprep.subr.mxu0 0.0
        %5311 = vmatpush1.msra.mxu0 0.0
        %5312 = vmatprep.subr.mxu0 0.0
        %5313 = vmatpush1.msra.mxu0 0.0
        %5314 = vmatprep.subr.mxu0 0.0
        %5315 = vmatpush1.msra.mxu0 0.0
        %5316 = vmatprep.subr.mxu0 0.0
        %5317 = vmatpush1.msra.mxu0 0.0
        %5318 = vmatprep.subr.mxu0 0.0
        %5319 = vmatpush1.msra.mxu0 0.0
        %5320 = vmatprep.subr.mxu0 0.0
        %5321 = vmatpush1.msra.mxu0 0.0
        %5322 = vmatprep.subr.mxu0 0.0
        %5323 = vmatpush1.msra.mxu0 0.0
        %5324 = vmatprep.subr.mxu0 0.0
        %5325 = vmatpush1.msra.mxu0 0.0
        %5326 = vmatprep.subr.mxu0 0.0
        %5327 = vmatpush1.msra.mxu0 0.0
        %5328 = vmatprep.subr.mxu0 0.0
        %5329 = vmatpush1.msra.mxu0 0.0
        %5330 = vmatprep.subr.mxu0 0.0
        %5331 = vmatpush1.msra.mxu0 0.0
        %5332 = vmatprep.mubr.f32.mxu0 0.0
        %5333 = vmatmul.mubr.f32.gmra.mrb[0].mxu0 %v5245
        %v5334 = vpop.f32.mrb[0].mxu0
        %v5335 = vadd.f32 0.0, %v5334
        %v5336 = vpop.f32.mrb[0].mxu0
        %5337 = vmatprep.mubr.f32.mxu0 0.0
        %5338 = vmatmul.mubr.f32.gmra.mrb[0].mxu0 %v5248
        %v5339 = vpop.f32.mrb[0].mxu0
        %v5340 = vadd.f32 0.0, %v5339
        %v5341 = vpop.f32.mrb[0].mxu0
        %5342 = vmatprep.mubr.f32.mxu0 0.0
        %5343 = vmatmul.mubr.f32.gmra.mrb[0].mxu0 %v5251
        %v5344 = vpop.f32.mrb[0].mxu0
        %v5345 = vadd.f32 0.0, %v5344
        %v5346 = vpop.f32.mrb[0].mxu0
        %5347 = vmatprep.mubr.f32.mxu0 0.0
        %5348 = vmatmul.mubr.f32.gmra.mrb[0].mxu0 %v5254
        %v5349 = vpop.f32.mrb[0].mxu0
        %v5350 = vadd.f32 0.0, %v5349
        %v5351 = vpop.f32.mrb[0].mxu0
        %5352 = vmatprep.mubr.f32.mxu0 0.0
        %5353 = vmatmul.mubr.f32.gmra.mrb[0].mxu0 %v5257
        %v5354 = vpop.f32.mrb[0].mxu0
        %v5355 = vadd.f32 0.0, %v5354
        %v5356 = vpop.f32.mrb[0].mxu0
        %5357 = vmatprep.mubr.f32.mxu0 0.0
        %5358 = vmatmul.mubr.f32.gmra.mrb[0].mxu0 %v5260
        %v5359 = vpop.f32.mrb[0].mxu0
        %v5360 = vadd.f32 0.0, %v5359
        %v5361 = vpop.f32.mrb[0].mxu0
        %5362 = vmatprep.mubr.f32.mxu0 0.0
        %5363 = vmatmul.mubr.f32.gmra.mrb[0].mxu0 %v5263
        %v5364 = vpop.f32.mrb[0].mxu0
        %v5365 = vadd.f32 0.0, %v5364
        %v5366 = vpop.f32.mrb[0].mxu0
        %5367 = vmatprep.mubr.f32.mxu0 0.0
        %5368 = vmatmul.mubr.f32.gmra.mrb[0].mxu0 %v5266
        %v5369 = vpop.f32.mrb[0].mxu0
        %v5370 = vadd.f32 0.0, %v5369
        %v5371 = vpop.f32.mrb[0].mxu0
        %5372 = vdwg.mxu0
        %v5373 = vmul.f32 %v5335, 0.35355338
        %v5374 = vmul.f32 %v5340, 0.35355338
        %v5375 = vmul.f32 %v5345, 0.35355338
        %v5376 = vmul.f32 %v5350, 0.35355338
        %v5377 = vmul.f32 %v5355, 0.35355338
        %v5378 = vmul.f32 %v5360, 0.35355338
        %v5379 = vmul.f32 %v5365, 0.35355338
        %v5380 = vmul.f32 %v5370, 0.35355338
        %v5381 = vadd.f32 %v5373, %v1483
        %v5382 = vadd.f32 %v5374, %v1483
        %v5383 = vadd.f32 %v5375, %v1483
        %v5384 = vadd.f32 %v5376, %v1483
        %v5385 = vadd.f32 %v5377, %v1483
        %v5386 = vadd.f32 %v5378, %v1483
        %v5387 = vadd.f32 %v5379, %v1483
        %v5388 = vadd.f32 %v5380, %v1483
        %v5389 = vsel %vm4270, %v5381, -inf
        %v5390 = vrot.slane %v5389, 4
        %v5391 = vmax.f32 %v5389, %v5390
        %v5392 = vrot.slane %v5391, 2
        %v5393 = vmax.f32 %v5391, %v5392
        %v5394 = vrot.slane %v5393, 1
        %v5395 = vmax.f32 %v5393, %v5394
        %v5396 = vsel %vm4270, %v5382, -inf
        %v5397 = vrot.slane %v5396, 4
        %v5398 = vmax.f32 %v5396, %v5397
        %v5399 = vrot.slane %v5398, 2
        %v5400 = vmax.f32 %v5398, %v5399
        %v5401 = vrot.slane %v5400, 1
        %v5402 = vmax.f32 %v5400, %v5401
        %v5403 = vsel %vm4270, %v5383, -inf
        %v5404 = vrot.slane %v5403, 4
        %v5405 = vmax.f32 %v5403, %v5404
        %v5406 = vrot.slane %v5405, 2
        %v5407 = vmax.f32 %v5405, %v5406
        %v5408 = vrot.slane %v5407, 1
        %v5409 = vmax.f32 %v5407, %v5408
        %v5410 = vsel %vm4270, %v5384, -inf
        %v5411 = vrot.slane %v5410, 4
        %v5412 = vmax.f32 %v5410, %v5411
        %v5413 = vrot.slane %v5412, 2
        %v5414 = vmax.f32 %v5412, %v5413
        %v5415 = vrot.slane %v5414, 1
        %v5416 = vmax.f32 %v5414, %v5415
        %v5417 = vsel %vm4270, %v5385, -inf
        %v5418 = vrot.slane %v5417, 4
        %v5419 = vmax.f32 %v5417, %v5418
        %v5420 = vrot.slane %v5419, 2
        %v5421 = vmax.f32 %v5419, %v5420
        %v5422 = vrot.slane %v5421, 1
        %v5423 = vmax.f32 %v5421, %v5422
        %v5424 = vsel %vm4270, %v5386, -inf
        %v5425 = vrot.slane %v5424, 4
        %v5426 = vmax.f32 %v5424, %v5425
        %v5427 = vrot.slane %v5426, 2
        %v5428 = vmax.f32 %v5426, %v5427
        %v5429 = vrot.slane %v5428, 1
        %v5430 = vmax.f32 %v5428, %v5429
        %v5431 = vsel %vm4270, %v5387, -inf
        %v5432 = vrot.slane %v5431, 4
        %v5433 = vmax.f32 %v5431, %v5432
        %v5434 = vrot.slane %v5433, 2
        %v5435 = vmax.f32 %v5433, %v5434
        %v5436 = vrot.slane %v5435, 1
        %v5437 = vmax.f32 %v5435, %v5436
        %v5438 = vsel %vm4270, %v5388, -inf
        %v5439 = vrot.slane %v5438, 4
        %v5440 = vmax.f32 %v5438, %v5439
        %v5441 = vrot.slane %v5440, 2
        %v5442 = vmax.f32 %v5440, %v5441
        %v5443 = vrot.slane %v5442, 1
        %v5444 = vmax.f32 %v5442, %v5443
        %v5445 = vsub.f32 %v5381, %v5395
        %v5446 = vsub.f32 %v5382, %v5402
        %v5447 = vsub.f32 %v5383, %v5409
        %v5448 = vsub.f32 %v5384, %v5416
        %v5449 = vsub.f32 %v5385, %v5423
        %v5450 = vsub.f32 %v5386, %v5430
        %v5451 = vsub.f32 %v5387, %v5437
        %v5452 = vsub.f32 %v5388, %v5444
        %v5453 = vmul.f32 %v5445, 1.442695
        %v5454 = vpow.pop %v5453
        %v5455 = vmul.f32 %v5446, 1.442695
        %v5456 = vpow.pop %v5455
        %v5457 = vmul.f32 %v5447, 1.442695
        %v5458 = vpow.pop %v5457
        %v5459 = vmul.f32 %v5448, 1.442695
        %v5460 = vpow.pop %v5459
        %v5461 = vmul.f32 %v5449, 1.442695
        %v5462 = vpow.pop %v5461
        %v5463 = vmul.f32 %v5450, 1.442695
        %v5464 = vpow.pop %v5463
        %v5465 = vmul.f32 %v5451, 1.442695
        %v5466 = vpow.pop %v5465
        %v5467 = vmul.f32 %v5452, 1.442695
        %v5468 = vpow.pop %v5467
        %v5469 = vsel %vm4270, %v5454, 0.0
        %v5470 = vrot.slane %v5469, 4
        %v5471 = vadd.f32 %v5469, %v5470
        %v5472 = vrot.slane %v5471, 2
        %v5473 = vadd.f32 %v5471, %v5472
        %v5474 = vrot.slane %v5473, 1
        %v5475 = vadd.f32 %v5473, %v5474
        %v5476 = vsel %vm4270, %v5456, 0.0
        %v5477 = vrot.slane %v5476, 4
        %v5478 = vadd.f32 %v5476, %v5477
        %v5479 = vrot.slane %v5478, 2
        %v5480 = vadd.f32 %v5478, %v5479
        %v5481 = vrot.slane %v5480, 1
        %v5482 = vadd.f32 %v5480, %v5481
        %v5483 = vsel %vm4270, %v5458, 0.0
        %v5484 = vrot.slane %v5483, 4
        %v5485 = vadd.f32 %v5483, %v5484
        %v5486 = vrot.slane %v5485, 2
        %v5487 = vadd.f32 %v5485, %v5486
        %v5488 = vrot.slane %v5487, 1
        %v5489 = vadd.f32 %v5487, %v5488
        %v5490 = vsel %vm4270, %v5460, 0.0
        %v5491 = vrot.slane %v5490, 4
        %v5492 = vadd.f32 %v5490, %v5491
        %v5493 = vrot.slane %v5492, 2
        %v5494 = vadd.f32 %v5492, %v5493
        %v5495 = vrot.slane %v5494, 1
        %v5496 = vadd.f32 %v5494, %v5495
        %v5497 = vsel %vm4270, %v5462, 0.0
        %v5498 = vrot.slane %v5497, 4
        %v5499 = vadd.f32 %v5497, %v5498
        %v5500 = vrot.slane %v5499, 2
        %v5501 = vadd.f32 %v5499, %v5500
        %v5502 = vrot.slane %v5501, 1
        %v5503 = vadd.f32 %v5501, %v5502
        %v5504 = vsel %vm4270, %v5464, 0.0
        %v5505 = vrot.slane %v5504, 4
        %v5506 = vadd.f32 %v5504, %v5505
        %v5507 = vrot.slane %v5506, 2
        %v5508 = vadd.f32 %v5506, %v5507
        %v5509 = vrot.slane %v5508, 1
        %v5510 = vadd.f32 %v5508, %v5509
        %v5511 = vsel %vm4270, %v5466, 0.0
        %v5512 = vrot.slane %v5511, 4
        %v5513 = vadd.f32 %v5511, %v5512
        %v5514 = vrot.slane %v5513, 2
        %v5515 = vadd.f32 %v5513, %v5514
        %v5516 = vrot.slane %v5515, 1
        %v5517 = vadd.f32 %v5515, %v5516
        %v5518 = vsel %vm4270, %v5468, 0.0
        %v5519 = vrot.slane %v5518, 4
        %v5520 = vadd.f32 %v5518, %v5519
        %v5521 = vrot.slane %v5520, 2
        %v5522 = vadd.f32 %v5520, %v5521
        %v5523 = vrot.slane %v5522, 1
        %v5524 = vadd.f32 %v5522, %v5523
        %v5525 = vrcp.pop %v5475
        %v5526 = vmul.f32 %v5454, %v5525
        %v5527 = vrcp.pop %v5482
        %v5528 = vmul.f32 %v5456, %v5527
        %v5529 = vrcp.pop %v5489
        %v5530 = vmul.f32 %v5458, %v5529
        %v5531 = vrcp.pop %v5496
        %v5532 = vmul.f32 %v5460, %v5531
        %v5533 = vrcp.pop %v5503
        %v5534 = vmul.f32 %v5462, %v5533
        %v5535 = vrcp.pop %v5510
        %v5536 = vmul.f32 %v5464, %v5535
        %v5537 = vrcp.pop %v5517
        %v5538 = vmul.f32 %v5466, %v5537
        %v5539 = vrcp.pop %v5524
        %v5540 = vmul.f32 %v5468, %v5539
        %v5542 = vsel %vm4270, %v5526, 0
        %v5545 = vsel %vm4270, %v5528, 0
        %v5548 = vsel %vm4270, %v5530, 0
        %v5551 = vsel %vm4270, %v5532, 0
        %v5554 = vsel %vm4270, %v5534, 0
        %v5557 = vsel %vm4270, %v5536, 0
        %v5560 = vsel %vm4270, %v5538, 0
        %v5563 = vsel %vm4270, %v5540, 0
        %5565 = vmatprep.subr.mxu0 0.0
        %5566 = vmatpush1.msra.mxu0 %v4279
        %5567 = vmatprep.subr.mxu0 0.0
        %5568 = vmatpush1.msra.mxu0 0.0
        %5569 = vmatprep.subr.mxu0 0.0
        %5570 = vmatpush1.msra.mxu0 0.0
        %5571 = vmatprep.subr.mxu0 0.0
        %5572 = vmatpush1.msra.mxu0 0.0
        %5573 = vmatprep.subr.mxu0 0.0
        %5574 = vmatpush1.msra.mxu0 0.0
        %5575 = vmatprep.subr.mxu0 0.0
        %5576 = vmatpush1.msra.mxu0 0.0
        %5577 = vmatprep.subr.mxu0 0.0
        %5578 = vmatpush1.msra.mxu0 0.0
        %5579 = vmatprep.subr.mxu0 0.0
        %5580 = vmatpush1.msra.mxu0 0.0
        %5581 = vmatprep.subr.mxu0 0.0
        %5582 = vmatpush1.msra.mxu0 0.0
        %5583 = vmatprep.subr.mxu0 0.0
        %5584 = vmatpush1.msra.mxu0 0.0
        %5585 = vmatprep.subr.mxu0 0.0
        %5586 = vmatpush1.msra.mxu0 0.0
        %5587 = vmatprep.subr.mxu0 0.0
        %5588 = vmatpush1.msra.mxu0 0.0
        %5589 = vmatprep.subr.mxu0 0.0
        %5590 = vmatpush1.msra.mxu0 0.0
        %5591 = vmatprep.subr.mxu0 0.0
        %5592 = vmatpush1.msra.mxu0 0.0
        %5593 = vmatprep.subr.mxu0 0.0
        %5594 = vmatpush1.msra.mxu0 0.0
        %5595 = vmatprep.subr.mxu0 0.0
        %5596 = vmatpush1.msra.mxu0 0.0
        %5597 = vmatprep.subr.mxu0 0.0
        %5598 = vmatpush1.msra.mxu0 0.0
        %5599 = vmatprep.subr.mxu0 0.0
        %5600 = vmatpush1.msra.mxu0 0.0
        %5601 = vmatprep.subr.mxu0 0.0
        %5602 = vmatpush1.msra.mxu0 0.0
        %5603 = vmatprep.subr.mxu0 0.0
        %5604 = vmatpush1.msra.mxu0 0.0
        %5605 = vmatprep.subr.mxu0 0.0
        %5606 = vmatpush1.msra.mxu0 0.0
        %5607 = vmatprep.subr.mxu0 0.0
        %5608 = vmatpush1.msra.mxu0 0.0
        %5609 = vmatprep.subr.mxu0 0.0
        %5610 = vmatpush1.msra.mxu0 0.0
        %5611 = vmatprep.subr.mxu0 0.0
        %5612 = vmatpush1.msra.mxu0 0.0
        %5613 = vmatprep.subr.mxu0 0.0
        %5614 = vmatpush1.msra.mxu0 0.0
        %5615 = vmatprep.subr.mxu0 0.0
        %5616 = vmatpush1.msra.mxu0 0.0
        %5617 = vmatprep.subr.mxu0 0.0
        %5618 = vmatpush1.msra.mxu0 0.0
        %5619 = vmatprep.subr.mxu0 0.0
        %5620 = vmatpush1.msra.mxu0 0.0
        %5621 = vmatprep.subr.mxu0 0.0
        %5622 = vmatpush1.msra.mxu0 0.0
        %5623 = vmatprep.subr.mxu0 0.0
        %5624 = vmatpush1.msra.mxu0 0.0
        %5625 = vmatprep.subr.mxu0 0.0
        %5626 = vmatpush1.msra.mxu0 0.0
        %5627 = vmatprep.subr.mxu0 0.0
        %5628 = vmatpush1.msra.mxu0 0.0
        %5629 = vmatprep.mubr.f32.mxu0 0.0
        %5630 = vmatmul.mubr.f32.gmra.mrb[0].mxu0 %v5542
        %v5631 = vpop.f32.mrb[0].mxu0
        %v5632 = vadd.f32 0.0, %v5631
        %v5633 = vpop.f32.mrb[0].mxu0
        %5634 = vmatprep.mubr.f32.mxu0 0.0
        %5635 = vmatmul.mubr.f32.gmra.mrb[0].mxu0 %v5545
        %v5636 = vpop.f32.mrb[0].mxu0
        %v5637 = vadd.f32 0.0, %v5636
        %v5638 = vpop.f32.mrb[0].mxu0
        %5639 = vmatprep.mubr.f32.mxu0 0.0
        %5640 = vmatmul.mubr.f32.gmra.mrb[0].mxu0 %v5548
        %v5641 = vpop.f32.mrb[0].mxu0
        %v5642 = vadd.f32 0.0, %v5641
        %v5643 = vpop.f32.mrb[0].mxu0
        %5644 = vmatprep.mubr.f32.mxu0 0.0
        %5645 = vmatmul.mubr.f32.gmra.mrb[0].mxu0 %v5551
        %v5646 = vpop.f32.mrb[0].mxu0
        %v5647 = vadd.f32 0.0, %v5646
        %v5648 = vpop.f32.mrb[0].mxu0
        %5649 = vmatprep.mubr.f32.mxu0 0.0
        %5650 = vmatmul.mubr.f32.gmra.mrb[0].mxu0 %v5554
        %v5651 = vpop.f32.mrb[0].mxu0
        %v5652 = vadd.f32 0.0, %v5651
        %v5653 = vpop.f32.mrb[0].mxu0
        %5654 = vmatprep.mubr.f32.mxu0 0.0
        %5655 = vmatmul.mubr.f32.gmra.mrb[0].mxu0 %v5557
        %v5656 = vpop.f32.mrb[0].mxu0
        %v5657 = vadd.f32 0.0, %v5656
        %v5658 = vpop.f32.mrb[0].mxu0
        %5659 = vmatprep.mubr.f32.mxu0 0.0
        %5660 = vmatmul.mubr.f32.gmra.mrb[0].mxu0 %v5560
        %v5661 = vpop.f32.mrb[0].mxu0
        %v5662 = vadd.f32 0.0, %v5661
        %v5663 = vpop.f32.mrb[0].mxu0
        %5664 = vmatprep.mubr.f32.mxu0 0.0
        %5665 = vmatmul.mubr.f32.gmra.mrb[0].mxu0 %v5563
        %v5666 = vpop.f32.mrb[0].mxu0
        %v5667 = vadd.f32 0.0, %v5666
        %v5668 = vpop.f32.mrb[0].mxu0
        %5669 = vdwg.mxu0
        %5670 = vrot.lane.b32.xlu0 %v5140, 64
        %v5671 = vpop.permute.xlu0 %5670
        %v5673 = vmul.f32 %v5632, %v5671
        %v5674 = vmul.f32 %v5637, %v5671
        %v5675 = vmul.f32 %v5642, %v5671
        %v5676 = vmul.f32 %v5647, %v5671
        %v5677 = vmul.f32 %v5652, %v5671
        %v5678 = vmul.f32 %v5657, %v5671
        %v5679 = vmul.f32 %v5662, %v5671
        %v5680 = vmul.f32 %v5667, %v5671
        %v5681 = vsel %vm1491, %v5673, 0.0
        %v5682 = vrot.slane %v5681, 4
        %v5683 = vadd.f32 %v5681, %v5682
        %v5684 = vrot.slane %v5683, 2
        %v5685 = vadd.f32 %v5683, %v5684
        %v5686 = vrot.slane %v5685, 1
        %v5687 = vadd.f32 %v5685, %v5686
        %v5688 = vsel %vm1491, %v5674, 0.0
        %v5689 = vrot.slane %v5688, 4
        %v5690 = vadd.f32 %v5688, %v5689
        %v5691 = vrot.slane %v5690, 2
        %v5692 = vadd.f32 %v5690, %v5691
        %v5693 = vrot.slane %v5692, 1
        %v5694 = vadd.f32 %v5692, %v5693
        %v5695 = vsel %vm1491, %v5675, 0.0
        %v5696 = vrot.slane %v5695, 4
        %v5697 = vadd.f32 %v5695, %v5696
        %v5698 = vrot.slane %v5697, 2
        %v5699 = vadd.f32 %v5697, %v5698
        %v5700 = vrot.slane %v5699, 1
        %v5701 = vadd.f32 %v5699, %v5700
        %v5702 = vsel %vm1491, %v5676, 0.0
        %v5703 = vrot.slane %v5702, 4
        %v5704 = vadd.f32 %v5702, %v5703
        %v5705 = vrot.slane %v5704, 2
        %v5706 = vadd.f32 %v5704, %v5705
        %v5707 = vrot.slane %v5706, 1
        %v5708 = vadd.f32 %v5706, %v5707
        %v5709 = vsel %vm1491, %v5677, 0.0
        %v5710 = vrot.slane %v5709, 4
        %v5711 = vadd.f32 %v5709, %v5710
        %v5712 = vrot.slane %v5711, 2
        %v5713 = vadd.f32 %v5711, %v5712
        %v5714 = vrot.slane %v5713, 1
        %v5715 = vadd.f32 %v5713, %v5714
        %v5716 = vsel %vm1491, %v5678, 0.0
        %v5717 = vrot.slane %v5716, 4
        %v5718 = vadd.f32 %v5716, %v5717
        %v5719 = vrot.slane %v5718, 2
        %v5720 = vadd.f32 %v5718, %v5719
        %v5721 = vrot.slane %v5720, 1
        %v5722 = vadd.f32 %v5720, %v5721
        %v5723 = vsel %vm1491, %v5679, 0.0
        %v5724 = vrot.slane %v5723, 4
        %v5725 = vadd.f32 %v5723, %v5724
        %v5726 = vrot.slane %v5725, 2
        %v5727 = vadd.f32 %v5725, %v5726
        %v5728 = vrot.slane %v5727, 1
        %v5729 = vadd.f32 %v5727, %v5728
        %v5730 = vsel %vm1491, %v5680, 0.0
        %v5731 = vrot.slane %v5730, 4
        %v5732 = vadd.f32 %v5730, %v5731
        %v5733 = vrot.slane %v5732, 2
        %v5734 = vadd.f32 %v5732, %v5733
        %v5735 = vrot.slane %v5734, 1
        %v5736 = vadd.f32 %v5734, %v5735
        %v5737 = vld [vmem:[%s1249] sm:$0xff]
        %v5738 = vld [vmem:[%s1249 + $0x8] sm:$0xff]
        %v5739 = vld [vmem:[%s1249 + $0x10] sm:$0xff]
        %v5740 = vld [vmem:[%s1249 + $0x18] sm:$0xff]
        %v5741 = vld [vmem:[%s1252] sm:$0x1]
        %v5743 = vlaneseq
        %v5744 = vshrl.u32 %v5743, 7
        %v5745 = vsub.s32 0, %v5744
        %v5746 = vrot.slane %v5741, %v5745
        %v5756 = vsel %vm5014, %v5694, %v5687
        %v5757 = vsel %vm5016, %v5701, %v5756
        %v5758 = vsel %vm5018, %v5708, %v5757
        %v5759 = vsel %vm5020, %v5715, %v5758
        %v5760 = vsel %vm5022, %v5722, %v5759
        %v5761 = vsel %vm5024, %v5729, %v5760
        %v5762 = vsel %vm5026, %v5736, %v5761
        %v5763 = vsel %vm1491, %v5762, 0
        %5765 = vmatprep.subr.mxu0 0.0
        %5766 = vmatpush1.msra.mxu0 %v5737
        %5767 = vmatprep.subr.mxu0 0.0
        %5768 = vmatpush1.msra.mxu0 %v5738
        %5769 = vmatprep.subr.mxu0 0.0
        %5770 = vmatpush1.msra.mxu0 %v5739
        %5771 = vmatprep.subr.mxu0 0.0
        %5772 = vmatpush1.msra.mxu0 %v5740
        %5773 = vmatprep.subr.mxu0 0.0
        %5774 = vmatpush1.msra.mxu0 0.0
        %5775 = vmatprep.subr.mxu0 0.0
        %5776 = vmatpush1.msra.mxu0 0.0
        %5777 = vmatprep.subr.mxu0 0.0
        %5778 = vmatpush1.msra.mxu0 0.0
        %5779 = vmatprep.subr.mxu0 0.0
        %5780 = vmatpush1.msra.mxu0 0.0
        %5781 = vmatprep.subr.mxu0 0.0
        %5782 = vmatpush1.msra.mxu0 0.0
        %5783 = vmatprep.subr.mxu0 0.0
        %5784 = vmatpush1.msra.mxu0 0.0
        %5785 = vmatprep.subr.mxu0 0.0
        %5786 = vmatpush1.msra.mxu0 0.0
        %5787 = vmatprep.subr.mxu0 0.0
        %5788 = vmatpush1.msra.mxu0 0.0
        %5789 = vmatprep.subr.mxu0 0.0
        %5790 = vmatpush1.msra.mxu0 0.0
        %5791 = vmatprep.subr.mxu0 0.0
        %5792 = vmatpush1.msra.mxu0 0.0
        %5793 = vmatprep.subr.mxu0 0.0
        %5794 = vmatpush1.msra.mxu0 0.0
        %5795 = vmatprep.subr.mxu0 0.0
        %5796 = vmatpush1.msra.mxu0 0.0
        %5797 = vmatprep.subr.mxu0 0.0
        %5798 = vmatpush1.msra.mxu0 0.0
        %5799 = vmatprep.subr.mxu0 0.0
        %5800 = vmatpush1.msra.mxu0 0.0
        %5801 = vmatprep.subr.mxu0 0.0
        %5802 = vmatpush1.msra.mxu0 0.0
        %5803 = vmatprep.subr.mxu0 0.0
        %5804 = vmatpush1.msra.mxu0 0.0
        %5805 = vmatprep.subr.mxu0 0.0
        %5806 = vmatpush1.msra.mxu0 0.0
        %5807 = vmatprep.subr.mxu0 0.0
        %5808 = vmatpush1.msra.mxu0 0.0
        %5809 = vmatprep.subr.mxu0 0.0
        %5810 = vmatpush1.msra.mxu0 0.0
        %5811 = vmatprep.subr.mxu0 0.0
        %5812 = vmatpush1.msra.mxu0 0.0
        %5813 = vmatprep.subr.mxu0 0.0
        %5814 = vmatpush1.msra.mxu0 0.0
        %5815 = vmatprep.subr.mxu0 0.0
        %5816 = vmatpush1.msra.mxu0 0.0
        %5817 = vmatprep.subr.mxu0 0.0
        %5818 = vmatpush1.msra.mxu0 0.0
        %5819 = vmatprep.subr.mxu0 0.0
        %5820 = vmatpush1.msra.mxu0 0.0
        %5821 = vmatprep.subr.mxu0 0.0
        %5822 = vmatpush1.msra.mxu0 0.0
        %5823 = vmatprep.subr.mxu0 0.0
        %5824 = vmatpush1.msra.mxu0 0.0
        %5825 = vmatprep.subr.mxu0 0.0
        %5826 = vmatpush1.msra.mxu0 0.0
        %5827 = vmatprep.subr.mxu0 0.0
        %5828 = vmatpush1.msra.mxu0 0.0
        %5829 = vmatprep.mubr.f32.mxu0 0.0
        %5830 = vmatmul.mubr.f32.gmra.mrb[0].mxu0 %v5763
        %v5831 = vpop.f32.mrb[0].mxu0
        %v5832 = vadd.f32 %v5746, %v5831
        %v5833 = vpop.f32.mrb[0].mxu0
        %5834 = vdwg.mxu0
        %v5835 = vadd.f32 %v5029, %v5832
        %v5836 = vld [vmem:[%s1255] sm:$0x1]
        %v5837 = vld [vmem:[%s1258] sm:$0x1]
        %v5838 = vsel %vm1491, %v5835, 0.0
        %5839 = vadd.xlane.f32.xlu0 %v5838
        %v5840 = vpop.xlane.xlu0 %5839
        %v5841 = vmul.f32 %v5840, %v1495
        %v5842 = vsub.f32 %v5835, %v5841
        %v5843 = vmul.f32 %v5842, %v5842
        %v5844 = vsel %vm1491, %v5843, 0.0
        %5845 = vadd.xlane.f32.xlu0 %v5844
        %v5846 = vpop.xlane.xlu0 %5845
        %v5847 = vmul.f32 %v5846, %v1495
        %v5848 = vadd.f32 %v5847, 1e-05
        %v5849 = vrsqrt.pop %v5848
        %v5850 = vmul.f32 %v5842, %v5849
        %v5852 = vlaneseq
        %v5853 = vshrl.u32 %v5852, 7
        %v5854 = vsub.s32 0, %v5853
        %v5855 = vrot.slane %v5836, %v5854
        %v5857 = vmul.f32 %v5850, %v5855
        %v5859 = vlaneseq
        %v5860 = vshrl.u32 %v5859, 7
        %v5861 = vsub.s32 0, %v5860
        %v5862 = vrot.slane %v5837, %v5861
        %v5864 = vadd.f32 %v5857, %v5862
        %v5865 = vld [vmem:[%s1030] sm:$0xff]
        %v5866 = vld [vmem:[%s1030 + $0x8] sm:$0xff]
        %v5867 = vld [vmem:[%s1030 + $0x10] sm:$0xff]
        %v5868 = vld [vmem:[%s1030 + $0x18] sm:$0xff]
        %v5869 = vld [vmem:[%s1261] sm:$0x1]
        %v5871 = vlaneseq
        %v5872 = vshrl.u32 %v5871, 7
        %v5873 = vsub.s32 0, %v5872
        %v5874 = vrot.slane %v5869, %v5873
        %v5877 = vsel %vm1491, %v5864, 0
        %5879 = vmatprep.subr.mxu0 0.0
        %5880 = vmatpush1.msra.mxu0 %v5865
        %5881 = vmatprep.subr.mxu0 0.0
        %5882 = vmatpush1.msra.mxu0 %v5866
        %5883 = vmatprep.subr.mxu0 0.0
        %5884 = vmatpush1.msra.mxu0 %v5867
        %5885 = vmatprep.subr.mxu0 0.0
        %5886 = vmatpush1.msra.mxu0 %v5868
        %5887 = vmatprep.subr.mxu0 0.0
        %5888 = vmatpush1.msra.mxu0 0.0
        %5889 = vmatprep.subr.mxu0 0.0
        %5890 = vmatpush1.msra.mxu0 0.0
        %5891 = vmatprep.subr.mxu0 0.0
        %5892 = vmatpush1.msra.mxu0 0.0
        %5893 = vmatprep.subr.mxu0 0.0
        %5894 = vmatpush1.msra.mxu0 0.0
        %5895 = vmatprep.subr.mxu0 0.0
        %5896 = vmatpush1.msra.mxu0 0.0
        %5897 = vmatprep.subr.mxu0 0.0
        %5898 = vmatpush1.msra.mxu0 0.0
        %5899 = vmatprep.subr.mxu0 0.0
        %5900 = vmatpush1.msra.mxu0 0.0
        %5901 = vmatprep.subr.mxu0 0.0
        %5902 = vmatpush1.msra.mxu0 0.0
        %5903 = vmatprep.subr.mxu0 0.0
        %5904 = vmatpush1.msra.mxu0 0.0
        %5905 = vmatprep.subr.mxu0 0.0
        %5906 = vmatpush1.msra.mxu0 0.0
        %5907 = vmatprep.subr.mxu0 0.0
        %5908 = vmatpush1.msra.mxu0 0.0
        %5909 = vmatprep.subr.mxu0 0.0
        %5910 = vmatpush1.msra.mxu0 0.0
        %5911 = vmatprep.subr.mxu0 0.0
        %5912 = vmatpush1.msra.mxu0 0.0
        %5913 = vmatprep.subr.mxu0 0.0
        %5914 = vmatpush1.msra.mxu0 0.0
        %5915 = vmatprep.subr.mxu0 0.0
        %5916 = vmatpush1.msra.mxu0 0.0
        %5917 = vmatprep.subr.mxu0 0.0
        %5918 = vmatpush1.msra.mxu0 0.0
        %5919 = vmatprep.subr.mxu0 0.0
        %5920 = vmatpush1.msra.mxu0 0.0
        %5921 = vmatprep.subr.mxu0 0.0
        %5922 = vmatpush1.msra.mxu0 0.0
        %5923 = vmatprep.subr.mxu0 0.0
        %5924 = vmatpush1.msra.mxu0 0.0
        %5925 = vmatprep.subr.mxu0 0.0
        %5926 = vmatpush1.msra.mxu0 0.0
        %5927 = vmatprep.subr.mxu0 0.0
        %5928 = vmatpush1.msra.mxu0 0.0
        %5929 = vmatprep.subr.mxu0 0.0
        %5930 = vmatpush1.msra.mxu0 0.0
        %5931 = vmatprep.subr.mxu0 0.0
        %5932 = vmatpush1.msra.mxu0 0.0
        %5933 = vmatprep.subr.mxu0 0.0
        %5934 = vmatpush1.msra.mxu0 0.0
        %5935 = vmatprep.subr.mxu0 0.0
        %5936 = vmatpush1.msra.mxu0 0.0
        %5937 = vmatprep.subr.mxu0 0.0
        %5938 = vmatpush1.msra.mxu0 0.0
        %5939 = vmatprep.subr.mxu0 0.0
        %5940 = vmatpush1.msra.mxu0 0.0
        %5941 = vmatprep.subr.mxu0 0.0
        %5942 = vmatpush1.msra.mxu0 0.0
        %5943 = vmatprep.mubr.f32.mxu0 0.0
        %5944 = vmatmul.mubr.f32.gmra.mrb[0].mxu0 %v5877
        %v5945 = vpop.f32.mrb[0].mxu0
        %v5946 = vadd.f32 %v5874, %v5945
        %v5947 = vpop.f32.mrb[0].mxu0
        %5948 = vdwg.mxu0
        %v5949 = vmax.f32 %v5946, 0.0
        %v5950 = vld [vmem:[%s1266] sm:$0xff]
        %v5951 = vld [vmem:[%s1266 + $0x8] sm:$0xff]
        %v5952 = vld [vmem:[%s1266 + $0x10] sm:$0xff]
        %v5953 = vld [vmem:[%s1266 + $0x18] sm:$0xff]
        %v5954 = vld [vmem:[%s1266 + $0x20] sm:$0xff]
        %v5955 = vld [vmem:[%s1266 + $0x28] sm:$0xff]
        %v5956 = vld [vmem:[%s1266 + $0x30] sm:$0xff]
        %v5957 = vld [vmem:[%s1266 + $0x38] sm:$0xff]
        %vm5958 = vcmask 523264
        %v5960 = vsel %vm5958, %v5949, 0
        %5962 = vmatprep.subr.mxu0 0.0
        %5963 = vmatpush1.msra.mxu0 %v5950
        %5964 = vmatprep.subr.mxu0 0.0
        %5965 = vmatpush1.msra.mxu0 %v5951
        %5966 = vmatprep.subr.mxu0 0.0
        %5967 = vmatpush1.msra.mxu0 %v5952
        %5968 = vmatprep.subr.mxu0 0.0
        %5969 = vmatpush1.msra.mxu0 %v5953
        %5970 = vmatprep.subr.mxu0 0.0
        %5971 = vmatpush1.msra.mxu0 %v5954
        %5972 = vmatprep.subr.mxu0 0.0
        %5973 = vmatpush1.msra.mxu0 %v5955
        %5974 = vmatprep.subr.mxu0 0.0
        %5975 = vmatpush1.msra.mxu0 %v5956
        %5976 = vmatprep.subr.mxu0 0.0
        %5977 = vmatpush1.msra.mxu0 %v5957
        %5978 = vmatprep.subr.mxu0 0.0
        %5979 = vmatpush1.msra.mxu0 0.0
        %5980 = vmatprep.subr.mxu0 0.0
        %5981 = vmatpush1.msra.mxu0 0.0
        %5982 = vmatprep.subr.mxu0 0.0
        %5983 = vmatpush1.msra.mxu0 0.0
        %5984 = vmatprep.subr.mxu0 0.0
        %5985 = vmatpush1.msra.mxu0 0.0
        %5986 = vmatprep.subr.mxu0 0.0
        %5987 = vmatpush1.msra.mxu0 0.0
        %5988 = vmatprep.subr.mxu0 0.0
        %5989 = vmatpush1.msra.mxu0 0.0
        %5990 = vmatprep.subr.mxu0 0.0
        %5991 = vmatpush1.msra.mxu0 0.0
        %5992 = vmatprep.subr.mxu0 0.0
        %5993 = vmatpush1.msra.mxu0 0.0
        %5994 = vmatprep.subr.mxu0 0.0
        %5995 = vmatpush1.msra.mxu0 0.0
        %5996 = vmatprep.subr.mxu0 0.0
        %5997 = vmatpush1.msra.mxu0 0.0
        %5998 = vmatprep.subr.mxu0 0.0
        %5999 = vmatpush1.msra.mxu0 0.0
        %6000 = vmatprep.subr.mxu0 0.0
        %6001 = vmatpush1.msra.mxu0 0.0
        %6002 = vmatprep.subr.mxu0 0.0
        %6003 = vmatpush1.msra.mxu0 0.0
        %6004 = vmatprep.subr.mxu0 0.0
        %6005 = vmatpush1.msra.mxu0 0.0
        %6006 = vmatprep.subr.mxu0 0.0
        %6007 = vmatpush1.msra.mxu0 0.0
        %6008 = vmatprep.subr.mxu0 0.0
        %6009 = vmatpush1.msra.mxu0 0.0
        %6010 = vmatprep.subr.mxu0 0.0
        %6011 = vmatpush1.msra.mxu0 0.0
        %6012 = vmatprep.subr.mxu0 0.0
        %6013 = vmatpush1.msra.mxu0 0.0
        %6014 = vmatprep.subr.mxu0 0.0
        %6015 = vmatpush1.msra.mxu0 0.0
        %6016 = vmatprep.subr.mxu0 0.0
        %6017 = vmatpush1.msra.mxu0 0.0
        %6018 = vmatprep.subr.mxu0 0.0
        %6019 = vmatpush1.msra.mxu0 0.0
        %6020 = vmatprep.subr.mxu0 0.0
        %6021 = vmatpush1.msra.mxu0 0.0
        %6022 = vmatprep.subr.mxu0 0.0
        %6023 = vmatpush1.msra.mxu0 0.0
        %6024 = vmatprep.subr.mxu0 0.0
        %6025 = vmatpush1.msra.mxu0 0.0
        %6026 = vmatprep.mubr.f32.mxu0 0.0
        %6027 = vmatmul.mubr.f32.gmra.mrb[0].mxu0 %v5960
        %v6028 = vpop.f32.mrb[0].mxu0
        %v6029 = vadd.f32 0.0, %v6028
        %v6030 = vpop.f32.mrb[0].mxu0
        %6031 = vdwg.mxu0
        %v6032 = vadd.f32 %v5835, %v6029
        %v6033 = vld [vmem:[%s1269] sm:$0x1]
        %v6035 = vlaneseq
        %v6036 = vshrl.u32 %v6035, 7
        %v6037 = vsub.s32 0, %v6036
        %v6038 = vrot.slane %v6033, %v6037
        %v6040 = vadd.f32 %v6032, %v6038
        %6041 = vst.msk [vmem:[#allocation2] sm:$0xff] %vm1491, %v6040
        %6042 = vst.msk [vmem:[%s1180] sm:$0xff] %vm1491, %v6040
        %v6043 = vsel %vm4270, %v5526, 0.0
        %6044 = vadd.xlane.f32.xlu0 %v6043
        %v6045 = vpop.xlane.xlu0 %6044
        %v6046 = vsel %vm4270, %v5528, 0.0
        %6047 = vadd.xlane.f32.xlu0 %v6046
        %v6048 = vpop.xlane.xlu0 %6047
        %v6049 = vsel %vm4270, %v5530, 0.0
        %6050 = vadd.xlane.f32.xlu0 %v6049
        %v6051 = vpop.xlane.xlu0 %6050
        %v6052 = vsel %vm4270, %v5532, 0.0
        %6053 = vadd.xlane.f32.xlu0 %v6052
        %v6054 = vpop.xlane.xlu0 %6053
        %v6055 = vsel %vm4270, %v5534, 0.0
        %6056 = vadd.xlane.f32.xlu0 %v6055
        %v6057 = vpop.xlane.xlu0 %6056
        %v6058 = vsel %vm4270, %v5536, 0.0
        %6059 = vadd.xlane.f32.xlu0 %v6058
        %v6060 = vpop.xlane.xlu0 %6059
        %v6061 = vsel %vm4270, %v5538, 0.0
        %6062 = vadd.xlane.f32.xlu0 %v6061
        %v6063 = vpop.xlane.xlu0 %6062
        %v6064 = vsel %vm4270, %v5540, 0.0
        %6065 = vadd.xlane.f32.xlu0 %v6064
        %v6066 = vpop.xlane.xlu0 %6065
        %v6067 = vrcp.pop 4.0
        %v6068 = vmul.f32 %v6045, %v6067
        %v6069 = vmul.f32 %v6048, %v6067
        %v6070 = vmul.f32 %v6051, %v6067
        %v6071 = vmul.f32 %v6054, %v6067
        %v6072 = vmul.f32 %v6057, %v6067
        %v6073 = vmul.f32 %v6060, %v6067
        %v6074 = vmul.f32 %v6063, %v6067
        %v6075 = vmul.f32 %v6066, %v6067
        %v6084 = vlaneseq
        %v6085 = vand.u32 %v6084, 127
        %v6086 = vlaneseq
        %v6087 = vshrl.u32 %v6086, 7
        %v6088 = vsub.s32 %v6085, %v6087
        %v6089 = vrot.slane %v6068, %v6088
        %v6090 = vlaneseq
        %v6091 = vshrl.u32 %v6090, 7
        %v6092 = vsub.s32 %v6085, %v6091
        %v6093 = vrot.slane %v6069, %v6092
        %v6094 = vlaneseq
        %v6095 = vshrl.u32 %v6094, 7
        %v6096 = vsub.s32 %v6085, %v6095
        %v6097 = vrot.slane %v6070, %v6096
        %v6098 = vlaneseq
        %v6099 = vshrl.u32 %v6098, 7
        %v6100 = vsub.s32 %v6085, %v6099
        %v6101 = vrot.slane %v6071, %v6100
        %v6102 = vlaneseq
        %v6103 = vshrl.u32 %v6102, 7
        %v6104 = vsub.s32 %v6085, %v6103
        %v6105 = vrot.slane %v6072, %v6104
        %v6106 = vlaneseq
        %v6107 = vshrl.u32 %v6106, 7
        %v6108 = vsub.s32 %v6085, %v6107
        %v6109 = vrot.slane %v6073, %v6108
        %v6110 = vlaneseq
        %v6111 = vshrl.u32 %v6110, 7
        %v6112 = vsub.s32 %v6085, %v6111
        %v6113 = vrot.slane %v6074, %v6112
        %v6114 = vlaneseq
        %v6115 = vshrl.u32 %v6114, 7
        %v6116 = vsub.s32 %v6085, %v6115
        %v6117 = vrot.slane %v6075, %v6116
        %v6118 = vsel %vm5014, %v6093, %v6089
        %v6119 = vsel %vm5016, %v6097, %v6118
        %v6120 = vsel %vm5018, %v6101, %v6119
        %v6121 = vsel %vm5020, %v6105, %v6120
        %v6122 = vsel %vm5022, %v6109, %v6121
        %v6123 = vsel %vm5024, %v6113, %v6122
        %v6124 = vsel %vm5026, %v6117, %v6123
        %vm6126 = vcmask 64512
        %6127 = vst.msk [vmem:[%s1187] sm:$0xff] %vm6126, %v6124
        %v6129 = vunpack.c.l.s4 1966171168
        %v6130 = vunpack.c.0.s8 %v6129
        %v6131 = vlaneseq
        %v6132 = vshrl.u32 %v6131, 7
        %v6133 = vsub.s32 %v6130, %v6132
        %v6134 = vrot.slane %v4056, %v6133
        %v6135 = vcombine.low %v4133, %v6134
        %v6137 = vunpack.c.l.s4 1966171168
        %v6138 = vunpack.c.0.s8 %v6137
        %v6139 = vlaneseq
        %v6140 = vshrl.u32 %v6139, 7
        %v6141 = vsub.s32 %v6138, %v6140
        %v6142 = vrot.slane %v6135, %v6141
        %v6143 = vcombine.low %v4058, %v4060
        %v6145 = vunpack.c.l.s4 1966171168
        %v6146 = vunpack.c.0.s8 %v6145
        %v6147 = vlaneseq
        %v6148 = vshrl.u32 %v6147, 7
        %v6149 = vsub.s32 %v6146, %v6148
        %v6150 = vrot.slane %v6143, %v6149
        %v6152 = vunpack.c.l.s4 1966171168
        %v6153 = vunpack.c.0.s8 %v6152
        %v6154 = vlaneseq
        %v6155 = vshrl.u32 %v6154, 7
        %v6156 = vsub.s32 %v6153, %v6155
        %v6157 = vrot.slane %v4062, %v6156
        %v6158 = vcombine.low %v6150, %v6157
        %v6160 = vunpack.c.l.s4 1966171168
        %v6161 = vunpack.c.0.s8 %v6160
        %v6162 = vlaneseq
        %v6163 = vshrl.u32 %v6162, 7
        %v6164 = vsub.s32 %v6161, %v6163
        %v6165 = vrot.slane %v6158, %v6164
        %v6167 = vunpack.c.l.s4 1966171168
        %v6168 = vunpack.c.0.s8 %v6167
        %v6169 = vlaneseq
        %v6170 = vshrl.u32 %v6169, 7
        %v6171 = vsub.s32 %v6168, %v6170
        %v6172 = vrot.slane %v4068, %v6171
        %v6173 = vcombine.low %v4154, %v6172
        %v6175 = vunpack.c.l.s4 1966171168
        %v6176 = vunpack.c.0.s8 %v6175
        %v6177 = vlaneseq
        %v6178 = vshrl.u32 %v6177, 7
        %v6179 = vsub.s32 %v6176, %v6178
        %v6180 = vrot.slane %v6173, %v6179
        %v6181 = vcombine.low %v4070, %v4072
        %v6183 = vunpack.c.l.s4 1966171168
        %v6184 = vunpack.c.0.s8 %v6183
        %v6185 = vlaneseq
        %v6186 = vshrl.u32 %v6185, 7
        %v6187 = vsub.s32 %v6184, %v6186
        %v6188 = vrot.slane %v6181, %v6187
        %v6190 = vunpack.c.l.s4 1966171168
        %v6191 = vunpack.c.0.s8 %v6190
        %v6192 = vlaneseq
        %v6193 = vshrl.u32 %v6192, 7
        %v6194 = vsub.s32 %v6191, %v6193
        %v6195 = vrot.slane %v4074, %v6194
        %v6196 = vcombine.low %v6188, %v6195
        %v6198 = vunpack.c.l.s4 1966171168
        %v6199 = vunpack.c.0.s8 %v6198
        %v6200 = vlaneseq
        %v6201 = vshrl.u32 %v6200, 7
        %v6202 = vsub.s32 %v6199, %v6201
        %v6203 = vrot.slane %v6196, %v6202
        %v6205 = vunpack.c.l.s4 1966171168
        %v6206 = vunpack.c.0.s8 %v6205
        %v6207 = vlaneseq
        %v6208 = vshrl.u32 %v6207, 7
        %v6209 = vsub.s32 %v6206, %v6208
        %v6210 = vrot.slane %v4080, %v6209
        %v6211 = vcombine.low %v4196, %v6210
        %v6213 = vunpack.c.l.s4 1966171168
        %v6214 = vunpack.c.0.s8 %v6213
        %v6215 = vlaneseq
        %v6216 = vshrl.u32 %v6215, 7
        %v6217 = vsub.s32 %v6214, %v6216
        %v6218 = vrot.slane %v6211, %v6217
        %v6219 = vcombine.low %v4082, %v4084
        %v6221 = vunpack.c.l.s4 1966171168
        %v6222 = vunpack.c.0.s8 %v6221
        %v6223 = vlaneseq
        %v6224 = vshrl.u32 %v6223, 7
        %v6225 = vsub.s32 %v6222, %v6224
        %v6226 = vrot.slane %v6219, %v6225
        %v6228 = vunpack.c.l.s4 1966171168
        %v6229 = vunpack.c.0.s8 %v6228
        %v6230 = vlaneseq
        %v6231 = vshrl.u32 %v6230, 7
        %v6232 = vsub.s32 %v6229, %v6231
        %v6233 = vrot.slane %v4086, %v6232
        %v6234 = vcombine.low %v6226, %v6233
        %v6236 = vunpack.c.l.s4 1966171168
        %v6237 = vunpack.c.0.s8 %v6236
        %v6238 = vlaneseq
        %v6239 = vshrl.u32 %v6238, 7
        %v6240 = vsub.s32 %v6237, %v6239
        %v6241 = vrot.slane %v6234, %v6240
        %v6243 = vunpack.c.l.s4 1966171168
        %v6244 = vunpack.c.0.s8 %v6243
        %v6245 = vlaneseq
        %v6246 = vshrl.u32 %v6245, 7
        %v6247 = vsub.s32 %v6244, %v6246
        %v6248 = vrot.slane %v4092, %v6247
        %v6249 = vcombine.low %v4238, %v6248
        %v6251 = vunpack.c.l.s4 1966171168
        %v6252 = vunpack.c.0.s8 %v6251
        %v6253 = vlaneseq
        %v6254 = vshrl.u32 %v6253, 7
        %v6255 = vsub.s32 %v6252, %v6254
        %v6256 = vrot.slane %v6249, %v6255
        %v6257 = vcombine.low %v4094, %v4096
        %v6259 = vunpack.c.l.s4 1966171168
        %v6260 = vunpack.c.0.s8 %v6259
        %v6261 = vlaneseq
        %v6262 = vshrl.u32 %v6261, 7
        %v6263 = vsub.s32 %v6260, %v6262
        %v6264 = vrot.slane %v6257, %v6263
        %v6266 = vunpack.c.l.s4 1966171168
        %v6267 = vunpack.c.0.s8 %v6266
        %v6268 = vlaneseq
        %v6269 = vshrl.u32 %v6268, 7
        %v6270 = vsub.s32 %v6267, %v6269
        %v6271 = vrot.slane %v4098, %v6270
        %v6272 = vcombine.low %v6264, %v6271
        %v6274 = vunpack.c.l.s4 1966171168
        %v6275 = vunpack.c.0.s8 %v6274
        %v6276 = vlaneseq
        %v6277 = vshrl.u32 %v6276, 7
        %v6278 = vsub.s32 %v6275, %v6277
        %v6279 = vrot.slane %v6272, %v6278
        %6288 = vst.msk [vmem:[%s1274] sm:$0x7] %vm3218, %v6142
        %6289 = vst.msk [vmem:[%s1274 + $0x4] sm:$0x7] %vm3218, %v6165
        %6290 = vst.msk [vmem:[%s1274 + $0x8] sm:$0x7] %vm3218, %v6180
        %6291 = vst.msk [vmem:[%s1274 + $0xc] sm:$0x7] %vm3218, %v6203
        %6292 = vst.msk [vmem:[%s1274 + $0x10] sm:$0x7] %vm3218, %v6218
        %6293 = vst.msk [vmem:[%s1274 + $0x14] sm:$0x7] %vm3218, %v6241
        %6294 = vst.msk [vmem:[%s1274 + $0x18] sm:$0x7] %vm3218, %v6256
        %6295 = vst.msk [vmem:[%s1274 + $0x1c] sm:$0x7] %vm3218, %v6279
        %s6296 = sand.u32 %s709, 1
        %s6297 = scalar_lea.sflag [#allocation5], %s6296
        %s6298 = sand.u32 %s709, 1
        %s6299 = smul.addr %s6298, 8
        %s6300 = scalar_lea.vmem [#allocation10], %s6299
        %s6301 = sand.u32 %s735, 1
        %s6302 = scalar_lea.sflag [#allocation12], %s6301
        %s6303 = sand.u32 %s735, 1
        %s6304 = smul.addr %s6303, 8
        %s6305 = scalar_lea.vmem [#allocation11], %s6304
        %p6306 = scmp.lt.s32.totalorder %s53, 1
        %s6307 = scalar_select %p6306, %s53, 1
        %s6308 = smul.addr %s6307, 8
        %s6309 = smul.addr %s6308, 4
        %s6310 = scalar_lea.vmem %s27, %s6309
        // Predicated region
        $region141: #{tpu_custom_call.1} parent=119 // pred_check
          %p6311 = pneg %p719
        $region142: #{tpu_custom_call.1} parent=119 // pred_check_branch
          %6313 = sbr.rel (%p6311) target = $region144
        $region143: #{tpu_custom_call.1} parent=119 // pred_region
          %s6315 = ssub.s32 128, 128
          %6316 = vsyncadd %s6297, %s6315
          %s6317 = smul.addr %s53, 128
          %s6318 = scalar_lea.hbm %s25, %s6317
          %s6320 = sshll.u32 %s6300, 4
          %s6321 = int_to_ptr.vmem [resolvable:$true] %s6320
          %6323 = dma.vmem_to_hbm [thread:$0]  %s6321, 128, %s6318, %s6297
        $region144: #{tpu_custom_call.1} parent=119 // pred_fallthru
          _
        // Predicated region
        $region145: #{tpu_custom_call.1} parent=119 // pred_check
          %p6324 = pneg %p745
        $region146: #{tpu_custom_call.1} parent=119 // pred_check_branch
          %6326 = sbr.rel (%p6324) target = $region148
        $region147: #{tpu_custom_call.1} parent=119 // pred_region
          %s6328 = ssub.s32 128, 128
          %6329 = vsyncadd %s6302, %s6328
          %s6330 = smul.addr %s53, 128
          %s6331 = scalar_lea.hbm %s26, %s6330
          %s6333 = sshll.u32 %s6305, 4
          %s6334 = int_to_ptr.vmem [resolvable:$true] %s6333
          %6336 = dma.vmem_to_hbm [thread:$0]  %s6334, 128, %s6331, %s6302
        $region148: #{tpu_custom_call.1} parent=119 // pred_fallthru
          _
        // Predicated region
        $region149: #{tpu_custom_call.1} parent=119 // pred_check
          %p6337 = pneg %p771
        $region150: #{tpu_custom_call.1} parent=119 // pred_check_branch
          %6339 = sbr.rel (%p6337) target = $region152
        $region151: #{tpu_custom_call.1} parent=119 // pred_region
          _
        $region152: #{tpu_custom_call.1} parent=119 // pred_fallthru
          _
      $region120: #{tpu_custom_call.1} parent=5 // pred_fallthru
        _
      %p6340 = scmp.le.s32.totalorder 2, %s44
      // Predicated region
      $region153: #{tpu_custom_call.1} parent=5 // pred_check
        %p6341 = pneg %p6340
      $region154: #{tpu_custom_call.1} parent=5 // pred_check_branch
        %6343 = sbr.rel (%p6341) target = $region156
      $region155: #{tpu_custom_call.1} parent=5 // pred_region
        %s6344 = ssub.s32 %s44, 2
        // Predicated region
        $region157: #{tpu_custom_call.1} parent=155 // pred_check
          %p6345 = pneg %p725
        $region158: #{tpu_custom_call.1} parent=155 // pred_check_branch
          %6347 = sbr.rel (%p6345) target = $region160
        $region159: #{tpu_custom_call.1} parent=155 // pred_region
          %s6348 = sand.u32 %s710, 1
          %s6349 = scalar_lea.sflag [#allocation5], %s6348
          %s6350 = sand.u32 %s710, 1
          %s6351 = smul.addr %s6350, 8
          %s6352 = scalar_lea.vmem [#allocation10], %s6351
          %6353 = dma.done %s6349, 128
        $region160: #{tpu_custom_call.1} parent=155 // pred_fallthru
          _
        // Predicated region
        $region161: #{tpu_custom_call.1} parent=155 // pred_check
          %p6354 = pneg %p751
        $region162: #{tpu_custom_call.1} parent=155 // pred_check_branch
          %6356 = sbr.rel (%p6354) target = $region164
        $region163: #{tpu_custom_call.1} parent=155 // pred_region
          %s6357 = sand.u32 %s736, 1
          %s6358 = scalar_lea.sflag [#allocation12], %s6357
          %s6359 = sand.u32 %s736, 1
          %s6360 = smul.addr %s6359, 8
          %s6361 = scalar_lea.vmem [#allocation11], %s6360
          %6362 = dma.done %s6358, 128
        $region164: #{tpu_custom_call.1} parent=155 // pred_fallthru
          _
        // Predicated region
        $region165: #{tpu_custom_call.1} parent=155 // pred_check
          %p6363 = pneg %p777
        $region166: #{tpu_custom_call.1} parent=155 // pred_check_branch
          %6365 = sbr.rel (%p6363) target = $region168
        $region167: #{tpu_custom_call.1} parent=155 // pred_region
          %p6366 = scmp.lt.s32.totalorder %s55, 1
          %s6367 = scalar_select %p6366, %s55, 1
          %s6368 = smul.addr %s6367, 8
          %s6369 = smul.addr %s6368, 4
          %s6370 = scalar_lea.vmem %s27, %s6369
        $region168: #{tpu_custom_call.1} parent=155 // pred_fallthru
          _
      $region156: #{tpu_custom_call.1} parent=5 // pred_fallthru
        _
    $region6: #{tpu_custom_call.1} parent=1 // loop_footer
      %s48 = sadd.s32 1, %s44
    $region7: #{tpu_custom_call.1} parent=1 // loop_footer_branch
      %43 = sbr.rel target = $region3
    $region8: #{tpu_custom_call.1} parent=1 // loop_exit
      _
    %6371 = vsyncpa [#allocation4], 1
    %s6372 = scalar_lea.sflag [#allocation4], 1
    %6373 = vsyncpa %s6372, 1
    %6374 = vsyncpa [#allocation7], 1
    %6375 = vsyncpa [#allocation5], 1
    %s6376 = scalar_lea.sflag [#allocation5], 1
    %6377 = vsyncpa %s6376, 1
    %6378 = vsyncpa [#allocation12], 1
    %s6379 = scalar_lea.sflag [#allocation12], 1
    %6380 = vsyncpa %s6379, 1

</llo_original>
